<compile_context>
chip_gen: v5e
topology: v5e:2x2
jax: 0.10.0
libtpu: 0.0.40
codegen_flags: <defaults>
</compile_context>

<pallas_src>
import jax
import jax.numpy as jnp
from jax import lax
from jax.experimental import pallas as pl
from jax.experimental.pallas import tpu as pltpu

# ----------------------------- problem sizes -------------------------------
B = 2
H = 8
W = 16                     # LeFF uses w = 2 * h
L = H * W                  # 128 tokens per batch element
DIM = 32                   # dim
HIDDEN = 128               # hidden_dim


# --------------------------------- kernel -----------------------------------
def _gelu_exact(x):
    """GELU(x) = 0.5*x*(1+erf(x/sqrt(2))); erf via A&S 7.1.26 (|err| < 1.5e-7)."""
    z = x * 0.7071067811865476
    az = jnp.abs(z)
    t = 1.0 / (1.0 + 0.3275911 * az)
    poly = t * (0.254829592 + t * (-0.284496736 + t * (1.421413741
               + t * (-1.453152027 + t * 1.061405429))))
    erf_abs = 1.0 - poly * jnp.exp(-az * az)
    erf = jnp.where(z < 0.0, -erf_abs, erf_abs)
    return 0.5 * x * (1.0 + erf)


def _leff_kernel(x_ref, w1_ref, b1_ref, dwk_ref, dwb_ref, w2_ref, b2_ref, o_ref):
    m = x_ref.shape[0]                          # B*L flattened token rows

    # ---- linear1 (bf16 operands, f32 accumulate on the MXU) + GELU ----
    x = x_ref[...].astype(jnp.bfloat16)                                # (M, DIM)
    h = jnp.dot(x, w1_ref[...], preferred_element_type=jnp.float32) + b1_ref[...]
    h = _gelu_exact(h)                                                 # (M, HIDDEN) f32

    # ---- row-position masks (flat row r = b*L + h_row*W + w) ----
    ridx = lax.broadcasted_iota(jnp.int32, (m, HIDDEN), 0)
    w_idx = ridx & (W - 1)        # column inside image row
    l_idx = ridx & (L - 1)        # token index inside one batch element

    def src(v, delta):
        # out[r] = v[(r + delta) mod M]; wrapped rows are always masked/unselected
        # by the callers below, so the wrap never leaks across image or batch edges.
        return pltpu.roll(v, (-delta) % m, axis=0)

    # ---- circular-W neighbours via XLU rolls + boundary fix ----
    hl = jnp.where(w_idx == 0, src(h, W - 1), src(h, -1))          # col (w-1) mod W
    hr = jnp.where(w_idx == W - 1, src(h, -(W - 1)), src(h, 1))    # col (w+1) mod W

    # ---- 3x3 depthwise conv (per-channel weights, H zero-padded by +-1 row) ----
    def wsum(dh):   # within-row weighted sum of (left, center, right) for kernel row dh
        return (hl * dwk_ref[3 * dh + 0:3 * dh + 1, :]
                + h * dwk_ref[3 * dh + 1:3 * dh + 2, :]
                + hr * dwk_ref[3 * dh + 2:3 * dh + 3, :])

    acc = wsum(1) + dwb_ref[...]                                   # same-row taps + bias
    acc = acc + jnp.where(l_idx >= W, src(wsum(0), -W), 0.0)       # taps from row h-1
    acc = acc + jnp.where(l_idx < L - W, src(wsum(2), W), 0.0)     # taps from row h+1

    h2 = _gelu_exact(acc)                                          # (M, HIDDEN)

    # ---- linear2 (bf16 x bf16 -> f32) ----
    y = jnp.dot(h2.astype(jnp.bfloat16), w2_ref[...],
                preferred_element_type=jnp.float32) + b2_ref[...]
    o_ref[...] = y.astype(o_ref.dtype)                             # (M, DIM)


# ------------------------------ fused wrapper -------------------------------
def leff_forward(x, params):
    """x: (B, L, dim) -> (B, L, dim); whole LeFF as a single grid-less Pallas kernel."""
    bsz, seq, dim = x.shape
    m = bsz * seq
    x2 = x.reshape(m, dim)                                 # fold batch into rows
    w1 = params["w1"].astype(jnp.bfloat16)                 # bf16 weights -> half the DMA
    w2 = params["w2"].astype(jnp.bfloat16)
    dwk = params["dw_k"].reshape(9, HIDDEN)                # (3,3,C) -> (9,C), row = 3*dh+dw

    flops = (2 * m * DIM * HIDDEN          # linear1
             + 18 * m * HIDDEN             # depthwise taps + bias
             + 2 * m * HIDDEN * DIM        # linear2
             + 2 * 30 * m * HIDDEN)        # GELU polynomials (approx)
    transcendentals = 2 * m * HIDDEN       # one exp per GELU element
    bytes_accessed = (4 * 2 * m * DIM                       # x in + y out (f32)
                      + 2 * (DIM * HIDDEN + HIDDEN * DIM)   # bf16 w1, w2
                      + 4 * (HIDDEN + 9 * HIDDEN + HIDDEN + DIM))  # b1, dwk, dwb, b2

    vmem = pl.BlockSpec(memory_space=pltpu.MemorySpace.VMEM)
    y2 = pl.pallas_call(
        _leff_kernel,
        out_shape=jax.ShapeDtypeStruct((m, DIM), x.dtype),
        in_specs=[vmem] * 7,
        out_specs=vmem,
        cost_estimate=pl.CostEstimate(flops=flops,
                                      transcendentals=transcendentals,
                                      bytes_accessed=bytes_accessed),
    )(x2, w1, params["b1"], dwk, params["dw_b"], w2, params["b2"])
    return y2.reshape(bsz, seq, dim)


# --------------------------- pure-JAX reference -----------------------------
def leff_reference(x, params):
    """Mirrors the PyTorch LeFF module op-by-op (channels-last layout)."""
    hp = jnp.dot(x, params["w1"],
                 precision=lax.Precision.HIGHEST) + params["b1"]
    hp = jax.nn.gelu(hp, approximate=False)
    hp = hp.reshape(x.shape[0], H, W, HIDDEN)
    hp = jnp.concatenate([hp[:, :, -1:, :], hp, hp[:, :, :1, :]], axis=2)  # circ W
    hp = jnp.pad(hp, ((0, 0), (1, 1), (0, 0), (0, 0)))                     # zero H
    out = jnp.zeros((x.shape[0], H, W, HIDDEN), jnp.float32)
    for dh in range(3):
        for dw in range(3):
            out = out + hp[:, dh:dh + H, dw:dw + W, :] * params["dw_k"][dh, dw]
    out = jax.nn.gelu(out + params["dw_b"], approximate=False)
    out = out.reshape(x.shape[0], L, HIDDEN)
    return jnp.dot(out, params["w2"],
                   precision=lax.Precision.HIGHEST) + params["b2"]


# -------------------------------- parameters --------------------------------
def init_params(key):
    """PyTorch-default uniform init, deterministic."""
    ks = jax.random.split(key, 4)

    def linear(k, fan_in, fan_out):
        bound = 1.0 / (fan_in ** 0.5)
        kw, kb = jax.random.split(k)
        w = jax.random.uniform(kw, (fan_in, fan_out), jnp.float32, -bound, bound)
        b = jax.random.uniform(kb, (1, fan_out), jnp.float32, -bound, bound)
        return w, b

    w1, b1 = linear(ks[0], DIM, HIDDEN)
    w2, b2 = linear(ks[1], HIDDEN, DIM)
    bound = 1.0 / 3.0                       # depthwise conv fan_in = 1 * 3 * 3
    dw_k = jax.random.uniform(ks[2], (3, 3, HIDDEN), jnp.float32, -bound, bound)
    dw_b = jax.random.uniform(ks[3], (1, HIDDEN), jnp.float32, -bound, bound)
    return dict(w1=w1, b1=b1, w2=w2, b2=b2, dw_k=dw_k, dw_b=dw_b)


if __name__ == "__main__":
    key = jax.random.PRNGKey(0)
    kx, kp = jax.random.split(key)
    x = jax.random.normal(kx, (B, L, DIM), jnp.float32)   # (B, H*W, dim)
    params = init_params(kp)

    fwd = jax.jit(leff_forward)
    out = fwd(x, params)
    jax.block_until_ready(out)

    assert out.shape == (B, L, DIM) and out.dtype == jnp.float32
    assert bool(jnp.all(jnp.isfinite(out)))

    ref = leff_reference(x, params)
    max_err = float(jnp.max(jnp.abs(out - ref)))
    # bf16 MXU operands (f32 accumulate) vs an f32 HIGHEST-precision reference:
    # expected max-abs deviation is ~1e-3; any structural bug is >5e-2.
    assert max_err < 1e-2, f"mismatch vs pure-JAX reference: max abs err {max_err}"

    print("KERNEL_OK")
</pallas_src>

<mosaic_0001>
module attributes {stable_mosaic.version = 11 : i64} {
  func.func @_leff_kernel(%arg0: memref<256x32xf32, #tpu.memory_space<vmem>>, %arg1: memref<32x128xbf16, #tpu.memory_space<vmem>>, %arg2: memref<1x128xf32, #tpu.memory_space<vmem>>, %arg3: memref<9x128xf32, #tpu.memory_space<vmem>>, %arg4: memref<1x128xf32, #tpu.memory_space<vmem>>, %arg5: memref<128x32xbf16, #tpu.memory_space<vmem>>, %arg6: memref<1x32xf32, #tpu.memory_space<vmem>>, %arg7: memref<256x32xf32, #tpu.memory_space<vmem>>) attributes {dimension_semantics = [], scalar_prefetch = 0 : i64, scratch_operands = 0 : i64, tpu.core_type = #tpu.core_type<tc>} {
    %c0 = arith.constant 0 : index
    %c0_0 = arith.constant 0 : index
    %0 = vector.load %arg0[%c0, %c0_0] : memref<256x32xf32, #tpu.memory_space<vmem>>, vector<256x32xf32>
    %1 = arith.truncf %0 : vector<256x32xf32> to vector<256x32xbf16>
    %c0_1 = arith.constant 0 : index
    %c0_2 = arith.constant 0 : index
    %2 = vector.load %arg1[%c0_1, %c0_2] : memref<32x128xbf16, #tpu.memory_space<vmem>>, vector<32x128xbf16>
    %cst = arith.constant dense<0.000000e+00> : vector<256x128xf32>
    %3 = tpu.matmul %1, %2, %cst {dimension_numbers = #tpu.dot_dimension_numbers<[1], [0], [0], [1], [0, 0, 1, 1], [], []>} : vector<256x32xbf16>, vector<32x128xbf16>, vector<256x128xf32> -> vector<256x128xf32>
    %c0_3 = arith.constant 0 : index
    %c0_4 = arith.constant 0 : index
    %4 = vector.load %arg2[%c0_3, %c0_4] : memref<1x128xf32, #tpu.memory_space<vmem>>, vector<1x128xf32>
    %5 = vector.broadcast %4 : vector<1x128xf32> to vector<256x128xf32>
    %6 = arith.addf %3, %5 : vector<256x128xf32>
    %cst_5 = arith.constant 0.707106769 : f32
    %7 = vector.broadcast %cst_5 : f32 to vector<256x128xf32>
    %8 = arith.mulf %6, %7 : vector<256x128xf32>
    %9 = math.absf %8 : vector<256x128xf32>
    %cst_6 = arith.constant 0.327591091 : f32
    %10 = vector.broadcast %cst_6 : f32 to vector<256x128xf32>
    %11 = arith.mulf %10, %9 : vector<256x128xf32>
    %cst_7 = arith.constant 1.000000e+00 : f32
    %12 = vector.broadcast %cst_7 : f32 to vector<256x128xf32>
    %13 = arith.addf %12, %11 : vector<256x128xf32>
    %cst_8 = arith.constant 1.000000e+00 : f32
    %14 = vector.broadcast %cst_8 : f32 to vector<256x128xf32>
    %15 = arith.divf %14, %13 : vector<256x128xf32>
    %cst_9 = arith.constant 1.06140542 : f32
    %16 = vector.broadcast %cst_9 : f32 to vector<256x128xf32>
    %17 = arith.mulf %15, %16 : vector<256x128xf32>
    %cst_10 = arith.constant -1.45315206 : f32
    %18 = vector.broadcast %cst_10 : f32 to vector<256x128xf32>
    %19 = arith.addf %18, %17 : vector<256x128xf32>
    %20 = arith.mulf %15, %19 : vector<256x128xf32>
    %cst_11 = arith.constant 1.42141378 : f32
    %21 = vector.broadcast %cst_11 : f32 to vector<256x128xf32>
    %22 = arith.addf %21, %20 : vector<256x128xf32>
    %23 = arith.mulf %15, %22 : vector<256x128xf32>
    %cst_12 = arith.constant -0.284496725 : f32
    %24 = vector.broadcast %cst_12 : f32 to vector<256x128xf32>
    %25 = arith.addf %24, %23 : vector<256x128xf32>
    %26 = arith.mulf %15, %25 : vector<256x128xf32>
    %cst_13 = arith.constant 0.254829586 : f32
    %27 = vector.broadcast %cst_13 : f32 to vector<256x128xf32>
    %28 = arith.addf %27, %26 : vector<256x128xf32>
    %29 = arith.mulf %15, %28 : vector<256x128xf32>
    %cst_14 = arith.constant 0.000000e+00 : f32
    %30 = vector.broadcast %cst_14 : f32 to vector<256x128xf32>
    %31 = arith.subf %30, %9 : vector<256x128xf32>
    %32 = arith.mulf %31, %9 : vector<256x128xf32>
    %33 = math.exp %32 : vector<256x128xf32>
    %34 = arith.mulf %29, %33 : vector<256x128xf32>
    %cst_15 = arith.constant 1.000000e+00 : f32
    %35 = vector.broadcast %cst_15 : f32 to vector<256x128xf32>
    %36 = arith.subf %35, %34 : vector<256x128xf32>
    %cst_16 = arith.constant 0.000000e+00 : f32
    %37 = vector.broadcast %cst_16 : f32 to vector<256x128xf32>
    %38 = arith.cmpf olt, %8, %37 : vector<256x128xf32>
    %cst_17 = arith.constant 0.000000e+00 : f32
    %39 = vector.broadcast %cst_17 : f32 to vector<256x128xf32>
    %40 = arith.subf %39, %36 : vector<256x128xf32>
    %41 = arith.select %38, %40, %36 : vector<256x128xi1>, vector<256x128xf32>
    %cst_18 = arith.constant 5.000000e-01 : f32
    %42 = vector.broadcast %cst_18 : f32 to vector<256x128xf32>
    %43 = arith.mulf %42, %6 : vector<256x128xf32>
    %cst_19 = arith.constant 1.000000e+00 : f32
    %44 = vector.broadcast %cst_19 : f32 to vector<256x128xf32>
    %45 = arith.addf %44, %41 : vector<256x128xf32>
    %46 = arith.mulf %43, %45 : vector<256x128xf32>
    %47 = tpu.iota {dimensions = array<i32: 0>} : vector<256x128xi32>
    %c15_i32 = arith.constant 15 : i32
    %48 = vector.broadcast %c15_i32 : i32 to vector<256x128xi32>
    %49 = arith.andi %47, %48 : vector<256x128xi32>
    %c127_i32 = arith.constant 127 : i32
    %50 = vector.broadcast %c127_i32 : i32 to vector<256x128xi32>
    %51 = arith.andi %47, %50 : vector<256x128xi32>
    %c0_i32 = arith.constant 0 : i32
    %52 = vector.broadcast %c0_i32 : i32 to vector<256x128xi32>
    %53 = arith.cmpi eq, %49, %52 : vector<256x128xi32>
    %c241_i32 = arith.constant 241 : i32
    %54 = tpu.dynamic_rotate %46 by %c241_i32 dim 0 : vector<256x128xf32>, i32 -> vector<256x128xf32>
    %c1_i32 = arith.constant 1 : i32
    %55 = tpu.dynamic_rotate %46 by %c1_i32 dim 0 : vector<256x128xf32>, i32 -> vector<256x128xf32>
    %56 = arith.select %53, %54, %55 : vector<256x128xi1>, vector<256x128xf32>
    %c15_i32_20 = arith.constant 15 : i32
    %57 = vector.broadcast %c15_i32_20 : i32 to vector<256x128xi32>
    %58 = arith.cmpi eq, %49, %57 : vector<256x128xi32>
    %c15_i32_21 = arith.constant 15 : i32
    %59 = tpu.dynamic_rotate %46 by %c15_i32_21 dim 0 : vector<256x128xf32>, i32 -> vector<256x128xf32>
    %c255_i32 = arith.constant 255 : i32
    %60 = tpu.dynamic_rotate %46 by %c255_i32 dim 0 : vector<256x128xf32>, i32 -> vector<256x128xf32>
    %61 = arith.select %58, %59, %60 : vector<256x128xi1>, vector<256x128xf32>
    %c3 = arith.constant 3 : index
    %c0_22 = arith.constant 0 : index
    %62 = vector.load %arg3[%c3, %c0_22] : memref<9x128xf32, #tpu.memory_space<vmem>>, vector<1x128xf32>
    %63 = vector.broadcast %62 : vector<1x128xf32> to vector<256x128xf32>
    %64 = arith.mulf %56, %63 : vector<256x128xf32>
    %c4 = arith.constant 4 : index
    %c0_23 = arith.constant 0 : index
    %65 = vector.load %arg3[%c4, %c0_23] : memref<9x128xf32, #tpu.memory_space<vmem>>, vector<1x128xf32>
    %66 = vector.broadcast %65 : vector<1x128xf32> to vector<256x128xf32>
    %67 = arith.mulf %46, %66 : vector<256x128xf32>
    %68 = arith.addf %64, %67 : vector<256x128xf32>
    %c5 = arith.constant 5 : index
    %c0_24 = arith.constant 0 : index
    %69 = vector.load %arg3[%c5, %c0_24] : memref<9x128xf32, #tpu.memory_space<vmem>>, vector<1x128xf32>
    %70 = vector.broadcast %69 : vector<1x128xf32> to vector<256x128xf32>
    %71 = arith.mulf %61, %70 : vector<256x128xf32>
    %72 = arith.addf %68, %71 : vector<256x128xf32>
    %c0_25 = arith.constant 0 : index
    %c0_26 = arith.constant 0 : index
    %73 = vector.load %arg4[%c0_25, %c0_26] : memref<1x128xf32, #tpu.memory_space<vmem>>, vector<1x128xf32>
    %74 = vector.broadcast %73 : vector<1x128xf32> to vector<256x128xf32>
    %75 = arith.addf %72, %74 : vector<256x128xf32>
    %c16_i32 = arith.constant 16 : i32
    %76 = vector.broadcast %c16_i32 : i32 to vector<256x128xi32>
    %77 = arith.cmpi sge, %51, %76 : vector<256x128xi32>
    %c0_27 = arith.constant 0 : index
    %c0_28 = arith.constant 0 : index
    %78 = vector.load %arg3[%c0_27, %c0_28] : memref<9x128xf32, #tpu.memory_space<vmem>>, vector<1x128xf32>
    %79 = vector.broadcast %78 : vector<1x128xf32> to vector<256x128xf32>
    %80 = arith.mulf %56, %79 : vector<256x128xf32>
    %c1 = arith.constant 1 : index
    %c0_29 = arith.constant 0 : index
    %81 = vector.load %arg3[%c1, %c0_29] : memref<9x128xf32, #tpu.memory_space<vmem>>, vector<1x128xf32>
    %82 = vector.broadcast %81 : vector<1x128xf32> to vector<256x128xf32>
    %83 = arith.mulf %46, %82 : vector<256x128xf32>
    %84 = arith.addf %80, %83 : vector<256x128xf32>
    %c2 = arith.constant 2 : index
    %c0_30 = arith.constant 0 : index
    %85 = vector.load %arg3[%c2, %c0_30] : memref<9x128xf32, #tpu.memory_space<vmem>>, vector<1x128xf32>
    %86 = vector.broadcast %85 : vector<1x128xf32> to vector<256x128xf32>
    %87 = arith.mulf %61, %86 : vector<256x128xf32>
    %88 = arith.addf %84, %87 : vector<256x128xf32>
    %c16_i32_31 = arith.constant 16 : i32
    %89 = tpu.dynamic_rotate %88 by %c16_i32_31 dim 0 : vector<256x128xf32>, i32 -> vector<256x128xf32>
    %cst_32 = arith.constant 0.000000e+00 : f32
    %90 = vector.broadcast %cst_32 : f32 to vector<256x128xf32>
    %91 = arith.select %77, %89, %90 : vector<256x128xi1>, vector<256x128xf32>
    %92 = arith.addf %75, %91 : vector<256x128xf32>
    %c112_i32 = arith.constant 112 : i32
    %93 = vector.broadcast %c112_i32 : i32 to vector<256x128xi32>
    %94 = arith.cmpi slt, %51, %93 : vector<256x128xi32>
    %c6 = arith.constant 6 : index
    %c0_33 = arith.constant 0 : index
    %95 = vector.load %arg3[%c6, %c0_33] : memref<9x128xf32, #tpu.memory_space<vmem>>, vector<1x128xf32>
    %96 = vector.broadcast %95 : vector<1x128xf32> to vector<256x128xf32>
    %97 = arith.mulf %56, %96 : vector<256x128xf32>
    %c7 = arith.constant 7 : index
    %c0_34 = arith.constant 0 : index
    %98 = vector.load %arg3[%c7, %c0_34] : memref<9x128xf32, #tpu.memory_space<vmem>>, vector<1x128xf32>
    %99 = vector.broadcast %98 : vector<1x128xf32> to vector<256x128xf32>
    %100 = arith.mulf %46, %99 : vector<256x128xf32>
    %101 = arith.addf %97, %100 : vector<256x128xf32>
    %c8 = arith.constant 8 : index
    %c0_35 = arith.constant 0 : index
    %102 = vector.load %arg3[%c8, %c0_35] : memref<9x128xf32, #tpu.memory_space<vmem>>, vector<1x128xf32>
    %103 = vector.broadcast %102 : vector<1x128xf32> to vector<256x128xf32>
    %104 = arith.mulf %61, %103 : vector<256x128xf32>
    %105 = arith.addf %101, %104 : vector<256x128xf32>
    %c240_i32 = arith.constant 240 : i32
    %106 = tpu.dynamic_rotate %105 by %c240_i32 dim 0 : vector<256x128xf32>, i32 -> vector<256x128xf32>
    %cst_36 = arith.constant 0.000000e+00 : f32
    %107 = vector.broadcast %cst_36 : f32 to vector<256x128xf32>
    %108 = arith.select %94, %106, %107 : vector<256x128xi1>, vector<256x128xf32>
    %109 = arith.addf %92, %108 : vector<256x128xf32>
    %cst_37 = arith.constant 0.707106769 : f32
    %110 = vector.broadcast %cst_37 : f32 to vector<256x128xf32>
    %111 = arith.mulf %109, %110 : vector<256x128xf32>
    %112 = math.absf %111 : vector<256x128xf32>
    %cst_38 = arith.constant 0.327591091 : f32
    %113 = vector.broadcast %cst_38 : f32 to vector<256x128xf32>
    %114 = arith.mulf %113, %112 : vector<256x128xf32>
    %cst_39 = arith.constant 1.000000e+00 : f32
    %115 = vector.broadcast %cst_39 : f32 to vector<256x128xf32>
    %116 = arith.addf %115, %114 : vector<256x128xf32>
    %cst_40 = arith.constant 1.000000e+00 : f32
    %117 = vector.broadcast %cst_40 : f32 to vector<256x128xf32>
    %118 = arith.divf %117, %116 : vector<256x128xf32>
    %cst_41 = arith.constant 1.06140542 : f32
    %119 = vector.broadcast %cst_41 : f32 to vector<256x128xf32>
    %120 = arith.mulf %118, %119 : vector<256x128xf32>
    %cst_42 = arith.constant -1.45315206 : f32
    %121 = vector.broadcast %cst_42 : f32 to vector<256x128xf32>
    %122 = arith.addf %121, %120 : vector<256x128xf32>
    %123 = arith.mulf %118, %122 : vector<256x128xf32>
    %cst_43 = arith.constant 1.42141378 : f32
    %124 = vector.broadcast %cst_43 : f32 to vector<256x128xf32>
    %125 = arith.addf %124, %123 : vector<256x128xf32>
    %126 = arith.mulf %118, %125 : vector<256x128xf32>
    %cst_44 = arith.constant -0.284496725 : f32
    %127 = vector.broadcast %cst_44 : f32 to vector<256x128xf32>
    %128 = arith.addf %127, %126 : vector<256x128xf32>
    %129 = arith.mulf %118, %128 : vector<256x128xf32>
    %cst_45 = arith.constant 0.254829586 : f32
    %130 = vector.broadcast %cst_45 : f32 to vector<256x128xf32>
    %131 = arith.addf %130, %129 : vector<256x128xf32>
    %132 = arith.mulf %118, %131 : vector<256x128xf32>
    %cst_46 = arith.constant 0.000000e+00 : f32
    %133 = vector.broadcast %cst_46 : f32 to vector<256x128xf32>
    %134 = arith.subf %133, %112 : vector<256x128xf32>
    %135 = arith.mulf %134, %112 : vector<256x128xf32>
    %136 = math.exp %135 : vector<256x128xf32>
    %137 = arith.mulf %132, %136 : vector<256x128xf32>
    %cst_47 = arith.constant 1.000000e+00 : f32
    %138 = vector.broadcast %cst_47 : f32 to vector<256x128xf32>
    %139 = arith.subf %138, %137 : vector<256x128xf32>
    %cst_48 = arith.constant 0.000000e+00 : f32
    %140 = vector.broadcast %cst_48 : f32 to vector<256x128xf32>
    %141 = arith.cmpf olt, %111, %140 : vector<256x128xf32>
    %cst_49 = arith.constant 0.000000e+00 : f32
    %142 = vector.broadcast %cst_49 : f32 to vector<256x128xf32>
    %143 = arith.subf %142, %139 : vector<256x128xf32>
    %144 = arith.select %141, %143, %139 : vector<256x128xi1>, vector<256x128xf32>
    %cst_50 = arith.constant 5.000000e-01 : f32
    %145 = vector.broadcast %cst_50 : f32 to vector<256x128xf32>
    %146 = arith.mulf %145, %109 : vector<256x128xf32>
    %cst_51 = arith.constant 1.000000e+00 : f32
    %147 = vector.broadcast %cst_51 : f32 to vector<256x128xf32>
    %148 = arith.addf %147, %144 : vector<256x128xf32>
    %149 = arith.mulf %146, %148 : vector<256x128xf32>
    %150 = arith.truncf %149 : vector<256x128xf32> to vector<256x128xbf16>
    %c0_52 = arith.constant 0 : index
    %c0_53 = arith.constant 0 : index
    %151 = vector.load %arg5[%c0_52, %c0_53] : memref<128x32xbf16, #tpu.memory_space<vmem>>, vector<128x32xbf16>
    %cst_54 = arith.constant dense<0.000000e+00> : vector<256x32xf32>
    %152 = tpu.matmul %150, %151, %cst_54 {dimension_numbers = #tpu.dot_dimension_numbers<[1], [0], [0], [1], [0, 0, 1, 1], [], []>} : vector<256x128xbf16>, vector<128x32xbf16>, vector<256x32xf32> -> vector<256x32xf32>
    %c0_55 = arith.constant 0 : index
    %c0_56 = arith.constant 0 : index
    %153 = vector.load %arg6[%c0_55, %c0_56] : memref<1x32xf32, #tpu.memory_space<vmem>>, vector<1x32xf32>
    %154 = vector.broadcast %153 : vector<1x32xf32> to vector<256x32xf32>
    %155 = arith.addf %152, %154 : vector<256x32xf32>
    %c0_57 = arith.constant 0 : index
    %c0_58 = arith.constant 0 : index
    %156 = vector.load %arg7[%c0_57, %c0_58] : memref<256x32xf32, #tpu.memory_space<vmem>>, vector<256x32xf32>
    tpu.vector_store %arg7[%c0_57, %c0_58], %155 {strides = array<i32>} : memref<256x32xf32, #tpu.memory_space<vmem>>, vector<256x32xf32>,
    return
  }
}

</mosaic_0001>

<llo_original>
// kernel: leff_forward.1
$region0: #{leff_forward.1}
  #allocation0 [shape = 'u32[]', space=smem, size = 0x4, offset = 0x4, fixed_abs, tag = 'smem constant byte address 0x4 - core index']
  #allocation1 [shape = 'u32[72,128]{1,0:T(1,128)}', space=vmem, size = 0x9000, scoped, tag = 'internal scratch']
  %s0 = inlined_call_operand.vmem [shape: f32[256,32], index: 0, kind: input, shape index: {}]
  %s1 = inlined_call_operand.vmem [shape: bf16[32,128], index: 1, kind: input, shape index: {}]
  %s2 = inlined_call_operand.vmem [shape: f32[1,128], index: 2, kind: input, shape index: {}]
  %s3 = inlined_call_operand.vmem [shape: f32[9,128], index: 3, kind: input, shape index: {}]
  %s4 = inlined_call_operand.vmem [shape: f32[1,128], index: 4, kind: input, shape index: {}]
  %s5 = inlined_call_operand.vmem [shape: bf16[128,32], index: 5, kind: input, shape index: {}]
  %s6 = inlined_call_operand.vmem [shape: f32[1,32], index: 6, kind: input, shape index: {}]
  %s7 = inlined_call_operand.vmem [shape: f32[256,32], index: 7, kind: output, shape index: {}]
  %s8 = sld [smem:[#allocation0]]
  $region38: #{leff_forward.1} parent=0
    _
  %s10 = ssub.s32 1, %s8
  %s11 = scalar_select 0, %s10, %s8
  // Predicated region
  $region2: #{leff_forward.1} parent=0 // pred_check
    _
  $region3: #{leff_forward.1} parent=0 // pred_check_branch
    %13 = sbr.rel (0) target = $region5
  $region4: #{leff_forward.1} parent=0 // pred_region
    _
  $region5: #{leff_forward.1} parent=0 // pred_fallthru
    _
  // Predicated region
  $region6: #{leff_forward.1} parent=0 // pred_check
    _
  $region7: #{leff_forward.1} parent=0 // pred_check_branch
    %15 = sbr.rel (0) target = $region9
  $region8: #{leff_forward.1} parent=0 // pred_region
    _
  $region9: #{leff_forward.1} parent=0 // pred_fallthru
    _
  // Predicated region
  $region10: #{leff_forward.1} parent=0 // pred_check
    _
  $region11: #{leff_forward.1} parent=0 // pred_check_branch
    %17 = sbr.rel (0) target = $region13
  $region12: #{leff_forward.1} parent=0 // pred_region
    _
  $region13: #{leff_forward.1} parent=0 // pred_fallthru
    _
  // Predicated region
  $region14: #{leff_forward.1} parent=0 // pred_check
    _
  $region15: #{leff_forward.1} parent=0 // pred_check_branch
    %19 = sbr.rel (0) target = $region17
  $region16: #{leff_forward.1} parent=0 // pred_region
    _
  $region17: #{leff_forward.1} parent=0 // pred_fallthru
    _
  // Predicated region
  $region18: #{leff_forward.1} parent=0 // pred_check
    _
  $region19: #{leff_forward.1} parent=0 // pred_check_branch
    %21 = sbr.rel (0) target = $region21
  $region20: #{leff_forward.1} parent=0 // pred_region
    _
  $region21: #{leff_forward.1} parent=0 // pred_fallthru
    _
  // Predicated region
  $region22: #{leff_forward.1} parent=0 // pred_check
    _
  $region23: #{leff_forward.1} parent=0 // pred_check_branch
    %23 = sbr.rel (0) target = $region25
  $region24: #{leff_forward.1} parent=0 // pred_region
    _
  $region25: #{leff_forward.1} parent=0 // pred_fallthru
    _
  // Predicated region
  $region26: #{leff_forward.1} parent=0 // pred_check
    _
  $region27: #{leff_forward.1} parent=0 // pred_check_branch
    %25 = sbr.rel (0) target = $region29
  $region28: #{leff_forward.1} parent=0 // pred_region
    _
  $region29: #{leff_forward.1} parent=0 // pred_fallthru
    _
  %v27 = vld [vmem:[%s0] sm:$0xff]
  %v28 = vld [vmem:[%s0 + $0x8] sm:$0xff]
  %v29 = vld [vmem:[%s0 + $0x10] sm:$0xff]
  %v30 = vld [vmem:[%s0 + $0x18] sm:$0xff]
  %v31 = vld [vmem:[%s0 + $0x20] sm:$0xff]
  %v32 = vld [vmem:[%s0 + $0x28] sm:$0xff]
  %v33 = vld [vmem:[%s0 + $0x30] sm:$0xff]
  %v34 = vld [vmem:[%s0 + $0x38] sm:$0xff]
  %v35 = vld [vmem:[%s0 + $0x40] sm:$0xff]
  %v36 = vld [vmem:[%s0 + $0x48] sm:$0xff]
  %v37 = vld [vmem:[%s0 + $0x50] sm:$0xff]
  %v38 = vld [vmem:[%s0 + $0x58] sm:$0xff]
  %v39 = vld [vmem:[%s0 + $0x60] sm:$0xff]
  %v40 = vld [vmem:[%s0 + $0x68] sm:$0xff]
  %v41 = vld [vmem:[%s0 + $0x70] sm:$0xff]
  %v42 = vld [vmem:[%s0 + $0x78] sm:$0xff]
  %v43 = vld [vmem:[%s0 + $0x80] sm:$0xff]
  %v44 = vld [vmem:[%s0 + $0x88] sm:$0xff]
  %v45 = vld [vmem:[%s0 + $0x90] sm:$0xff]
  %v46 = vld [vmem:[%s0 + $0x98] sm:$0xff]
  %v47 = vld [vmem:[%s0 + $0xa0] sm:$0xff]
  %v48 = vld [vmem:[%s0 + $0xa8] sm:$0xff]
  %v49 = vld [vmem:[%s0 + $0xb0] sm:$0xff]
  %v50 = vld [vmem:[%s0 + $0xb8] sm:$0xff]
  %v51 = vld [vmem:[%s0 + $0xc0] sm:$0xff]
  %v52 = vld [vmem:[%s0 + $0xc8] sm:$0xff]
  %v53 = vld [vmem:[%s0 + $0xd0] sm:$0xff]
  %v54 = vld [vmem:[%s0 + $0xd8] sm:$0xff]
  %v55 = vld [vmem:[%s0 + $0xe0] sm:$0xff]
  %v56 = vld [vmem:[%s0 + $0xe8] sm:$0xff]
  %v57 = vld [vmem:[%s0 + $0xf0] sm:$0xff]
  %v58 = vld [vmem:[%s0 + $0xf8] sm:$0xff]
  %v59 = vpack.c.bf16 %v28, %v27
  %v60 = vpack.c.bf16 %v30, %v29
  %v61 = vpack.c.bf16 %v32, %v31
  %v62 = vpack.c.bf16 %v34, %v33
  %v63 = vpack.c.bf16 %v36, %v35
  %v64 = vpack.c.bf16 %v38, %v37
  %v65 = vpack.c.bf16 %v40, %v39
  %v66 = vpack.c.bf16 %v42, %v41
  %v67 = vpack.c.bf16 %v44, %v43
  %v68 = vpack.c.bf16 %v46, %v45
  %v69 = vpack.c.bf16 %v48, %v47
  %v70 = vpack.c.bf16 %v50, %v49
  %v71 = vpack.c.bf16 %v52, %v51
  %v72 = vpack.c.bf16 %v54, %v53
  %v73 = vpack.c.bf16 %v56, %v55
  %v74 = vpack.c.bf16 %v58, %v57
  %v75 = vld [vmem:[%s1] sm:$0xf]
  %v76 = vld [vmem:[%s1 + $0x4] sm:$0xf]
  %v77 = vld [vmem:[%s1 + $0x8] sm:$0xf]
  %v78 = vld [vmem:[%s1 + $0xc] sm:$0xf]
  %v79 = vld [vmem:[%s2] sm:$0x1]
  %v81 = vperm.slane %v79, 0
  %v87 = vunpack.c.l.b16 %v75
  %v88 = vunpack.c.l.b16 %v76
  %v89 = vunpack.c.l.b16 %v77
  %v90 = vunpack.c.l.b16 %v78
  %v91 = vpack.c.b16 %v88, %v87
  %v92 = vpack.c.b16 %v90, %v89
  %vm95 = vcmask 261120
  %v97 = vsel %vm95, %v59, 0
  %v100 = vsel %vm95, %v60, 0
  %v103 = vsel %vm95, %v61, 0
  %v106 = vsel %vm95, %v62, 0
  %v109 = vsel %vm95, %v63, 0
  %v112 = vsel %vm95, %v64, 0
  %v115 = vsel %vm95, %v65, 0
  %v118 = vsel %vm95, %v66, 0
  %v121 = vsel %vm95, %v67, 0
  %v124 = vsel %vm95, %v68, 0
  %v127 = vsel %vm95, %v69, 0
  %v130 = vsel %vm95, %v70, 0
  %v133 = vsel %vm95, %v71, 0
  %v136 = vsel %vm95, %v72, 0
  %v139 = vsel %vm95, %v73, 0
  %v142 = vsel %vm95, %v74, 0
  %144 = vmatpush.bf16.msra.mxu0 0
  %145 = vmatpush.bf16.msra.mxu0 0
  %146 = vmatpush.bf16.msra.mxu0 0
  %147 = vmatpush.bf16.msra.mxu0 0
  %148 = vmatpush.bf16.msra.mxu0 0
  %149 = vmatpush.bf16.msra.mxu0 0
  %150 = vmatpush.bf16.msra.mxu0 %v92
  %151 = vmatpush.bf16.msra.mxu0 %v91
  %152 = vmatmul.bf16.gmra.mxu0 %v97
  %v153 = vpop.f32.mrf.mxu0
  %v154 = vadd.f32 %v81, %v153
  %v155 = vpop.f32.mrf.mxu0
  %v156 = vadd.f32 %v81, %v155
  %157 = vmatmul.bf16.gmra.mxu0 %v100
  %v158 = vpop.f32.mrf.mxu0
  %v159 = vadd.f32 %v81, %v158
  %v160 = vpop.f32.mrf.mxu0
  %v161 = vadd.f32 %v81, %v160
  %162 = vmatmul.bf16.gmra.mxu0 %v103
  %v163 = vpop.f32.mrf.mxu0
  %v164 = vadd.f32 %v81, %v163
  %v165 = vpop.f32.mrf.mxu0
  %v166 = vadd.f32 %v81, %v165
  %167 = vmatmul.bf16.gmra.mxu0 %v106
  %v168 = vpop.f32.mrf.mxu0
  %v169 = vadd.f32 %v81, %v168
  %v170 = vpop.f32.mrf.mxu0
  %v171 = vadd.f32 %v81, %v170
  %172 = vmatmul.bf16.gmra.mxu0 %v109
  %v173 = vpop.f32.mrf.mxu0
  %v174 = vadd.f32 %v81, %v173
  %v175 = vpop.f32.mrf.mxu0
  %v176 = vadd.f32 %v81, %v175
  %177 = vmatmul.bf16.gmra.mxu0 %v112
  %v178 = vpop.f32.mrf.mxu0
  %v179 = vadd.f32 %v81, %v178
  %v180 = vpop.f32.mrf.mxu0
  %v181 = vadd.f32 %v81, %v180
  %182 = vmatmul.bf16.gmra.mxu0 %v115
  %v183 = vpop.f32.mrf.mxu0
  %v184 = vadd.f32 %v81, %v183
  %v185 = vpop.f32.mrf.mxu0
  %v186 = vadd.f32 %v81, %v185
  %187 = vmatmul.bf16.gmra.mxu0 %v118
  %v188 = vpop.f32.mrf.mxu0
  %v189 = vadd.f32 %v81, %v188
  %v190 = vpop.f32.mrf.mxu0
  %v191 = vadd.f32 %v81, %v190
  %192 = vmatmul.bf16.gmra.mxu0 %v121
  %v193 = vpop.f32.mrf.mxu0
  %v194 = vadd.f32 %v81, %v193
  %v195 = vpop.f32.mrf.mxu0
  %v196 = vadd.f32 %v81, %v195
  %197 = vmatmul.bf16.gmra.mxu0 %v124
  %v198 = vpop.f32.mrf.mxu0
  %v199 = vadd.f32 %v81, %v198
  %v200 = vpop.f32.mrf.mxu0
  %v201 = vadd.f32 %v81, %v200
  %202 = vmatmul.bf16.gmra.mxu0 %v127
  %v203 = vpop.f32.mrf.mxu0
  %v204 = vadd.f32 %v81, %v203
  %v205 = vpop.f32.mrf.mxu0
  %v206 = vadd.f32 %v81, %v205
  %207 = vmatmul.bf16.gmra.mxu0 %v130
  %v208 = vpop.f32.mrf.mxu0
  %v209 = vadd.f32 %v81, %v208
  %v210 = vpop.f32.mrf.mxu0
  %v211 = vadd.f32 %v81, %v210
  %212 = vmatmul.bf16.gmra.mxu0 %v133
  %v213 = vpop.f32.mrf.mxu0
  %v214 = vadd.f32 %v81, %v213
  %v215 = vpop.f32.mrf.mxu0
  %v216 = vadd.f32 %v81, %v215
  %217 = vmatmul.bf16.gmra.mxu0 %v136
  %v218 = vpop.f32.mrf.mxu0
  %v219 = vadd.f32 %v81, %v218
  %v220 = vpop.f32.mrf.mxu0
  %v221 = vadd.f32 %v81, %v220
  %222 = vmatmul.bf16.gmra.mxu0 %v139
  %v223 = vpop.f32.mrf.mxu0
  %v224 = vadd.f32 %v81, %v223
  %v225 = vpop.f32.mrf.mxu0
  %v226 = vadd.f32 %v81, %v225
  %227 = vmatmul.bf16.gmra.mxu0 %v142
  %v228 = vpop.f32.mrf.mxu0
  %v229 = vadd.f32 %v81, %v228
  %v230 = vpop.f32.mrf.mxu0
  %v231 = vadd.f32 %v81, %v230
  %232 = vdwg.mxu0
  %v233 = vmul.f32 %v154, 0.70710677
  %v234 = vmul.f32 %v156, 0.70710677
  %v235 = vmul.f32 %v159, 0.70710677
  %v236 = vmul.f32 %v161, 0.70710677
  %v237 = vmul.f32 %v164, 0.70710677
  %v238 = vmul.f32 %v166, 0.70710677
  %v239 = vmul.f32 %v169, 0.70710677
  %v240 = vmul.f32 %v171, 0.70710677
  %v241 = vmul.f32 %v174, 0.70710677
  %v242 = vmul.f32 %v176, 0.70710677
  %v243 = vmul.f32 %v179, 0.70710677
  %v244 = vmul.f32 %v181, 0.70710677
  %v245 = vmul.f32 %v184, 0.70710677
  %v246 = vmul.f32 %v186, 0.70710677
  %v247 = vmul.f32 %v189, 0.70710677
  %v248 = vmul.f32 %v191, 0.70710677
  %v249 = vmul.f32 %v194, 0.70710677
  %v250 = vmul.f32 %v196, 0.70710677
  %v251 = vmul.f32 %v199, 0.70710677
  %v252 = vmul.f32 %v201, 0.70710677
  %v253 = vmul.f32 %v204, 0.70710677
  %v254 = vmul.f32 %v206, 0.70710677
  %v255 = vmul.f32 %v209, 0.70710677
  %v256 = vmul.f32 %v211, 0.70710677
  %v257 = vmul.f32 %v214, 0.70710677
  %v258 = vmul.f32 %v216, 0.70710677
  %v259 = vmul.f32 %v219, 0.70710677
  %v260 = vmul.f32 %v221, 0.70710677
  %v261 = vmul.f32 %v224, 0.70710677
  %v262 = vmul.f32 %v226, 0.70710677
  %v263 = vmul.f32 %v229, 0.70710677
  %v264 = vmul.f32 %v231, 0.70710677
  %v265 = vand.u32 2147483647, %v233
  %v266 = vand.u32 2147483647, %v234
  %v267 = vand.u32 2147483647, %v235
  %v268 = vand.u32 2147483647, %v236
  %v269 = vand.u32 2147483647, %v237
  %v270 = vand.u32 2147483647, %v238
  %v271 = vand.u32 2147483647, %v239
  %v272 = vand.u32 2147483647, %v240
  %v273 = vand.u32 2147483647, %v241
  %v274 = vand.u32 2147483647, %v242
  %v275 = vand.u32 2147483647, %v243
  %v276 = vand.u32 2147483647, %v244
  %v277 = vand.u32 2147483647, %v245
  %v278 = vand.u32 2147483647, %v246
  %v279 = vand.u32 2147483647, %v247
  %v280 = vand.u32 2147483647, %v248
  %v281 = vand.u32 2147483647, %v249
  %v282 = vand.u32 2147483647, %v250
  %v283 = vand.u32 2147483647, %v251
  %v284 = vand.u32 2147483647, %v252
  %v285 = vand.u32 2147483647, %v253
  %v286 = vand.u32 2147483647, %v254
  %v287 = vand.u32 2147483647, %v255
  %v288 = vand.u32 2147483647, %v256
  %v289 = vand.u32 2147483647, %v257
  %v290 = vand.u32 2147483647, %v258
  %v291 = vand.u32 2147483647, %v259
  %v292 = vand.u32 2147483647, %v260
  %v293 = vand.u32 2147483647, %v261
  %v294 = vand.u32 2147483647, %v262
  %v295 = vand.u32 2147483647, %v263
  %v296 = vand.u32 2147483647, %v264
  %v297 = vmul.f32 %v265, 0.3275911
  %v298 = vmul.f32 %v266, 0.3275911
  %v299 = vmul.f32 %v267, 0.3275911
  %v300 = vmul.f32 %v268, 0.3275911
  %v301 = vmul.f32 %v269, 0.3275911
  %v302 = vmul.f32 %v270, 0.3275911
  %v303 = vmul.f32 %v271, 0.3275911
  %v304 = vmul.f32 %v272, 0.3275911
  %v305 = vmul.f32 %v273, 0.3275911
  %v306 = vmul.f32 %v274, 0.3275911
  %v307 = vmul.f32 %v275, 0.3275911
  %v308 = vmul.f32 %v276, 0.3275911
  %v309 = vmul.f32 %v277, 0.3275911
  %v310 = vmul.f32 %v278, 0.3275911
  %v311 = vmul.f32 %v279, 0.3275911
  %v312 = vmul.f32 %v280, 0.3275911
  %v313 = vmul.f32 %v281, 0.3275911
  %v314 = vmul.f32 %v282, 0.3275911
  %v315 = vmul.f32 %v283, 0.3275911
  %v316 = vmul.f32 %v284, 0.3275911
  %v317 = vmul.f32 %v285, 0.3275911
  %v318 = vmul.f32 %v286, 0.3275911
  %v319 = vmul.f32 %v287, 0.3275911
  %v320 = vmul.f32 %v288, 0.3275911
  %v321 = vmul.f32 %v289, 0.3275911
  %v322 = vmul.f32 %v290, 0.3275911
  %v323 = vmul.f32 %v291, 0.3275911
  %v324 = vmul.f32 %v292, 0.3275911
  %v325 = vmul.f32 %v293, 0.3275911
  %v326 = vmul.f32 %v294, 0.3275911
  %v327 = vmul.f32 %v295, 0.3275911
  %v328 = vmul.f32 %v296, 0.3275911
  %v329 = vadd.f32 %v297, 1.0
  %v330 = vadd.f32 %v298, 1.0
  %v331 = vadd.f32 %v299, 1.0
  %v332 = vadd.f32 %v300, 1.0
  %v333 = vadd.f32 %v301, 1.0
  %v334 = vadd.f32 %v302, 1.0
  %v335 = vadd.f32 %v303, 1.0
  %v336 = vadd.f32 %v304, 1.0
  %v337 = vadd.f32 %v305, 1.0
  %v338 = vadd.f32 %v306, 1.0
  %v339 = vadd.f32 %v307, 1.0
  %v340 = vadd.f32 %v308, 1.0
  %v341 = vadd.f32 %v309, 1.0
  %v342 = vadd.f32 %v310, 1.0
  %v343 = vadd.f32 %v311, 1.0
  %v344 = vadd.f32 %v312, 1.0
  %v345 = vadd.f32 %v313, 1.0
  %v346 = vadd.f32 %v314, 1.0
  %v347 = vadd.f32 %v315, 1.0
  %v348 = vadd.f32 %v316, 1.0
  %v349 = vadd.f32 %v317, 1.0
  %v350 = vadd.f32 %v318, 1.0
  %v351 = vadd.f32 %v319, 1.0
  %v352 = vadd.f32 %v320, 1.0
  %v353 = vadd.f32 %v321, 1.0
  %v354 = vadd.f32 %v322, 1.0
  %v355 = vadd.f32 %v323, 1.0
  %v356 = vadd.f32 %v324, 1.0
  %v357 = vadd.f32 %v325, 1.0
  %v358 = vadd.f32 %v326, 1.0
  %v359 = vadd.f32 %v327, 1.0
  %v360 = vadd.f32 %v328, 1.0
  %v361 = vrcp.pop %v329
  %v362 = vmul.f32 %v329, %v361
  %v363 = vsub.f32 1.0, %v362
  %v364 = vmul.f32 %v361, %v363
  %v365 = vadd.f32 %v361, %v364
  %vm366 = vweird.f32 %v329
  %vm367 = vweird.f32 %v361
  %vm368 = vmor %vm366, %vm367
  %v369 = vsel %vm368, %v361, %v365
  %v370 = vand.u32 2147483647, %v329
  %vm371 = vcmp.eq.f32.partialorder %v370, 8.507059e+37
  %v372 = vand.u32 %v329, 2147483648
  %v373 = vor.u32 1.1754944e-38, %v372
  %v374 = vsel %vm371, %v373, %v369
  %v375 = vmul.f32 1.0, %v374
  %v376 = vrcp.pop %v330
  %v377 = vmul.f32 %v330, %v376
  %v378 = vsub.f32 1.0, %v377
  %v379 = vmul.f32 %v376, %v378
  %v380 = vadd.f32 %v376, %v379
  %vm381 = vweird.f32 %v330
  %vm382 = vweird.f32 %v376
  %vm383 = vmor %vm381, %vm382
  %v384 = vsel %vm383, %v376, %v380
  %v385 = vand.u32 2147483647, %v330
  %vm386 = vcmp.eq.f32.partialorder %v385, 8.507059e+37
  %v387 = vand.u32 %v330, 2147483648
  %v388 = vor.u32 1.1754944e-38, %v387
  %v389 = vsel %vm386, %v388, %v384
  %v390 = vmul.f32 1.0, %v389
  %v391 = vrcp.pop %v331
  %v392 = vmul.f32 %v331, %v391
  %v393 = vsub.f32 1.0, %v392
  %v394 = vmul.f32 %v391, %v393
  %v395 = vadd.f32 %v391, %v394
  %vm396 = vweird.f32 %v331
  %vm397 = vweird.f32 %v391
  %vm398 = vmor %vm396, %vm397
  %v399 = vsel %vm398, %v391, %v395
  %v400 = vand.u32 2147483647, %v331
  %vm401 = vcmp.eq.f32.partialorder %v400, 8.507059e+37
  %v402 = vand.u32 %v331, 2147483648
  %v403 = vor.u32 1.1754944e-38, %v402
  %v404 = vsel %vm401, %v403, %v399
  %v405 = vmul.f32 1.0, %v404
  %v406 = vrcp.pop %v332
  %v407 = vmul.f32 %v332, %v406
  %v408 = vsub.f32 1.0, %v407
  %v409 = vmul.f32 %v406, %v408
  %v410 = vadd.f32 %v406, %v409
  %vm411 = vweird.f32 %v332
  %vm412 = vweird.f32 %v406
  %vm413 = vmor %vm411, %vm412
  %v414 = vsel %vm413, %v406, %v410
  %v415 = vand.u32 2147483647, %v332
  %vm416 = vcmp.eq.f32.partialorder %v415, 8.507059e+37
  %v417 = vand.u32 %v332, 2147483648
  %v418 = vor.u32 1.1754944e-38, %v417
  %v419 = vsel %vm416, %v418, %v414
  %v420 = vmul.f32 1.0, %v419
  %v421 = vrcp.pop %v333
  %v422 = vmul.f32 %v333, %v421
  %v423 = vsub.f32 1.0, %v422
  %v424 = vmul.f32 %v421, %v423
  %v425 = vadd.f32 %v421, %v424
  %vm426 = vweird.f32 %v333
  %vm427 = vweird.f32 %v421
  %vm428 = vmor %vm426, %vm427
  %v429 = vsel %vm428, %v421, %v425
  %v430 = vand.u32 2147483647, %v333
  %vm431 = vcmp.eq.f32.partialorder %v430, 8.507059e+37
  %v432 = vand.u32 %v333, 2147483648
  %v433 = vor.u32 1.1754944e-38, %v432
  %v434 = vsel %vm431, %v433, %v429
  %v435 = vmul.f32 1.0, %v434
  %v436 = vrcp.pop %v334
  %v437 = vmul.f32 %v334, %v436
  %v438 = vsub.f32 1.0, %v437
  %v439 = vmul.f32 %v436, %v438
  %v440 = vadd.f32 %v436, %v439
  %vm441 = vweird.f32 %v334
  %vm442 = vweird.f32 %v436
  %vm443 = vmor %vm441, %vm442
  %v444 = vsel %vm443, %v436, %v440
  %v445 = vand.u32 2147483647, %v334
  %vm446 = vcmp.eq.f32.partialorder %v445, 8.507059e+37
  %v447 = vand.u32 %v334, 2147483648
  %v448 = vor.u32 1.1754944e-38, %v447
  %v449 = vsel %vm446, %v448, %v444
  %v450 = vmul.f32 1.0, %v449
  %v451 = vrcp.pop %v335
  %v452 = vmul.f32 %v335, %v451
  %v453 = vsub.f32 1.0, %v452
  %v454 = vmul.f32 %v451, %v453
  %v455 = vadd.f32 %v451, %v454
  %vm456 = vweird.f32 %v335
  %vm457 = vweird.f32 %v451
  %vm458 = vmor %vm456, %vm457
  %v459 = vsel %vm458, %v451, %v455
  %v460 = vand.u32 2147483647, %v335
  %vm461 = vcmp.eq.f32.partialorder %v460, 8.507059e+37
  %v462 = vand.u32 %v335, 2147483648
  %v463 = vor.u32 1.1754944e-38, %v462
  %v464 = vsel %vm461, %v463, %v459
  %v465 = vmul.f32 1.0, %v464
  %v466 = vrcp.pop %v336
  %v467 = vmul.f32 %v336, %v466
  %v468 = vsub.f32 1.0, %v467
  %v469 = vmul.f32 %v466, %v468
  %v470 = vadd.f32 %v466, %v469
  %vm471 = vweird.f32 %v336
  %vm472 = vweird.f32 %v466
  %vm473 = vmor %vm471, %vm472
  %v474 = vsel %vm473, %v466, %v470
  %v475 = vand.u32 2147483647, %v336
  %vm476 = vcmp.eq.f32.partialorder %v475, 8.507059e+37
  %v477 = vand.u32 %v336, 2147483648
  %v478 = vor.u32 1.1754944e-38, %v477
  %v479 = vsel %vm476, %v478, %v474
  %v480 = vmul.f32 1.0, %v479
  %v481 = vrcp.pop %v337
  %v482 = vmul.f32 %v337, %v481
  %v483 = vsub.f32 1.0, %v482
  %v484 = vmul.f32 %v481, %v483
  %v485 = vadd.f32 %v481, %v484
  %vm486 = vweird.f32 %v337
  %vm487 = vweird.f32 %v481
  %vm488 = vmor %vm486, %vm487
  %v489 = vsel %vm488, %v481, %v485
  %v490 = vand.u32 2147483647, %v337
  %vm491 = vcmp.eq.f32.partialorder %v490, 8.507059e+37
  %v492 = vand.u32 %v337, 2147483648
  %v493 = vor.u32 1.1754944e-38, %v492
  %v494 = vsel %vm491, %v493, %v489
  %v495 = vmul.f32 1.0, %v494
  %v496 = vrcp.pop %v338
  %v497 = vmul.f32 %v338, %v496
  %v498 = vsub.f32 1.0, %v497
  %v499 = vmul.f32 %v496, %v498
  %v500 = vadd.f32 %v496, %v499
  %vm501 = vweird.f32 %v338
  %vm502 = vweird.f32 %v496
  %vm503 = vmor %vm501, %vm502
  %v504 = vsel %vm503, %v496, %v500
  %v505 = vand.u32 2147483647, %v338
  %vm506 = vcmp.eq.f32.partialorder %v505, 8.507059e+37
  %v507 = vand.u32 %v338, 2147483648
  %v508 = vor.u32 1.1754944e-38, %v507
  %v509 = vsel %vm506, %v508, %v504
  %v510 = vmul.f32 1.0, %v509
  %v511 = vrcp.pop %v339
  %v512 = vmul.f32 %v339, %v511
  %v513 = vsub.f32 1.0, %v512
  %v514 = vmul.f32 %v511, %v513
  %v515 = vadd.f32 %v511, %v514
  %vm516 = vweird.f32 %v339
  %vm517 = vweird.f32 %v511
  %vm518 = vmor %vm516, %vm517
  %v519 = vsel %vm518, %v511, %v515
  %v520 = vand.u32 2147483647, %v339
  %vm521 = vcmp.eq.f32.partialorder %v520, 8.507059e+37
  %v522 = vand.u32 %v339, 2147483648
  %v523 = vor.u32 1.1754944e-38, %v522
  %v524 = vsel %vm521, %v523, %v519
  %v525 = vmul.f32 1.0, %v524
  %v526 = vrcp.pop %v340
  %v527 = vmul.f32 %v340, %v526
  %v528 = vsub.f32 1.0, %v527
  %v529 = vmul.f32 %v526, %v528
  %v530 = vadd.f32 %v526, %v529
  %vm531 = vweird.f32 %v340
  %vm532 = vweird.f32 %v526
  %vm533 = vmor %vm531, %vm532
  %v534 = vsel %vm533, %v526, %v530
  %v535 = vand.u32 2147483647, %v340
  %vm536 = vcmp.eq.f32.partialorder %v535, 8.507059e+37
  %v537 = vand.u32 %v340, 2147483648
  %v538 = vor.u32 1.1754944e-38, %v537
  %v539 = vsel %vm536, %v538, %v534
  %v540 = vmul.f32 1.0, %v539
  %v541 = vrcp.pop %v341
  %v542 = vmul.f32 %v341, %v541
  %v543 = vsub.f32 1.0, %v542
  %v544 = vmul.f32 %v541, %v543
  %v545 = vadd.f32 %v541, %v544
  %vm546 = vweird.f32 %v341
  %vm547 = vweird.f32 %v541
  %vm548 = vmor %vm546, %vm547
  %v549 = vsel %vm548, %v541, %v545
  %v550 = vand.u32 2147483647, %v341
  %vm551 = vcmp.eq.f32.partialorder %v550, 8.507059e+37
  %v552 = vand.u32 %v341, 2147483648
  %v553 = vor.u32 1.1754944e-38, %v552
  %v554 = vsel %vm551, %v553, %v549
  %v555 = vmul.f32 1.0, %v554
  %v556 = vrcp.pop %v342
  %v557 = vmul.f32 %v342, %v556
  %v558 = vsub.f32 1.0, %v557
  %v559 = vmul.f32 %v556, %v558
  %v560 = vadd.f32 %v556, %v559
  %vm561 = vweird.f32 %v342
  %vm562 = vweird.f32 %v556
  %vm563 = vmor %vm561, %vm562
  %v564 = vsel %vm563, %v556, %v560
  %v565 = vand.u32 2147483647, %v342
  %vm566 = vcmp.eq.f32.partialorder %v565, 8.507059e+37
  %v567 = vand.u32 %v342, 2147483648
  %v568 = vor.u32 1.1754944e-38, %v567
  %v569 = vsel %vm566, %v568, %v564
  %v570 = vmul.f32 1.0, %v569
  %v571 = vrcp.pop %v343
  %v572 = vmul.f32 %v343, %v571
  %v573 = vsub.f32 1.0, %v572
  %v574 = vmul.f32 %v571, %v573
  %v575 = vadd.f32 %v571, %v574
  %vm576 = vweird.f32 %v343
  %vm577 = vweird.f32 %v571
  %vm578 = vmor %vm576, %vm577
  %v579 = vsel %vm578, %v571, %v575
  %v580 = vand.u32 2147483647, %v343
  %vm581 = vcmp.eq.f32.partialorder %v580, 8.507059e+37
  %v582 = vand.u32 %v343, 2147483648
  %v583 = vor.u32 1.1754944e-38, %v582
  %v584 = vsel %vm581, %v583, %v579
  %v585 = vmul.f32 1.0, %v584
  %v586 = vrcp.pop %v344
  %v587 = vmul.f32 %v344, %v586
  %v588 = vsub.f32 1.0, %v587
  %v589 = vmul.f32 %v586, %v588
  %v590 = vadd.f32 %v586, %v589
  %vm591 = vweird.f32 %v344
  %vm592 = vweird.f32 %v586
  %vm593 = vmor %vm591, %vm592
  %v594 = vsel %vm593, %v586, %v590
  %v595 = vand.u32 2147483647, %v344
  %vm596 = vcmp.eq.f32.partialorder %v595, 8.507059e+37
  %v597 = vand.u32 %v344, 2147483648
  %v598 = vor.u32 1.1754944e-38, %v597
  %v599 = vsel %vm596, %v598, %v594
  %v600 = vmul.f32 1.0, %v599
  %v601 = vrcp.pop %v345
  %v602 = vmul.f32 %v345, %v601
  %v603 = vsub.f32 1.0, %v602
  %v604 = vmul.f32 %v601, %v603
  %v605 = vadd.f32 %v601, %v604
  %vm606 = vweird.f32 %v345
  %vm607 = vweird.f32 %v601
  %vm608 = vmor %vm606, %vm607
  %v609 = vsel %vm608, %v601, %v605
  %v610 = vand.u32 2147483647, %v345
  %vm611 = vcmp.eq.f32.partialorder %v610, 8.507059e+37
  %v612 = vand.u32 %v345, 2147483648
  %v613 = vor.u32 1.1754944e-38, %v612
  %v614 = vsel %vm611, %v613, %v609
  %v615 = vmul.f32 1.0, %v614
  %v616 = vrcp.pop %v346
  %v617 = vmul.f32 %v346, %v616
  %v618 = vsub.f32 1.0, %v617
  %v619 = vmul.f32 %v616, %v618
  %v620 = vadd.f32 %v616, %v619
  %vm621 = vweird.f32 %v346
  %vm622 = vweird.f32 %v616
  %vm623 = vmor %vm621, %vm622
  %v624 = vsel %vm623, %v616, %v620
  %v625 = vand.u32 2147483647, %v346
  %vm626 = vcmp.eq.f32.partialorder %v625, 8.507059e+37
  %v627 = vand.u32 %v346, 2147483648
  %v628 = vor.u32 1.1754944e-38, %v627
  %v629 = vsel %vm626, %v628, %v624
  %v630 = vmul.f32 1.0, %v629
  %v631 = vrcp.pop %v347
  %v632 = vmul.f32 %v347, %v631
  %v633 = vsub.f32 1.0, %v632
  %v634 = vmul.f32 %v631, %v633
  %v635 = vadd.f32 %v631, %v634
  %vm636 = vweird.f32 %v347
  %vm637 = vweird.f32 %v631
  %vm638 = vmor %vm636, %vm637
  %v639 = vsel %vm638, %v631, %v635
  %v640 = vand.u32 2147483647, %v347
  %vm641 = vcmp.eq.f32.partialorder %v640, 8.507059e+37
  %v642 = vand.u32 %v347, 2147483648
  %v643 = vor.u32 1.1754944e-38, %v642
  %v644 = vsel %vm641, %v643, %v639
  %v645 = vmul.f32 1.0, %v644
  %v646 = vrcp.pop %v348
  %v647 = vmul.f32 %v348, %v646
  %v648 = vsub.f32 1.0, %v647
  %v649 = vmul.f32 %v646, %v648
  %v650 = vadd.f32 %v646, %v649
  %vm651 = vweird.f32 %v348
  %vm652 = vweird.f32 %v646
  %vm653 = vmor %vm651, %vm652
  %v654 = vsel %vm653, %v646, %v650
  %v655 = vand.u32 2147483647, %v348
  %vm656 = vcmp.eq.f32.partialorder %v655, 8.507059e+37
  %v657 = vand.u32 %v348, 2147483648
  %v658 = vor.u32 1.1754944e-38, %v657
  %v659 = vsel %vm656, %v658, %v654
  %v660 = vmul.f32 1.0, %v659
  %v661 = vrcp.pop %v349
  %v662 = vmul.f32 %v349, %v661
  %v663 = vsub.f32 1.0, %v662
  %v664 = vmul.f32 %v661, %v663
  %v665 = vadd.f32 %v661, %v664
  %vm666 = vweird.f32 %v349
  %vm667 = vweird.f32 %v661
  %vm668 = vmor %vm666, %vm667
  %v669 = vsel %vm668, %v661, %v665
  %v670 = vand.u32 2147483647, %v349
  %vm671 = vcmp.eq.f32.partialorder %v670, 8.507059e+37
  %v672 = vand.u32 %v349, 2147483648
  %v673 = vor.u32 1.1754944e-38, %v672
  %v674 = vsel %vm671, %v673, %v669
  %v675 = vmul.f32 1.0, %v674
  %v676 = vrcp.pop %v350
  %v677 = vmul.f32 %v350, %v676
  %v678 = vsub.f32 1.0, %v677
  %v679 = vmul.f32 %v676, %v678
  %v680 = vadd.f32 %v676, %v679
  %vm681 = vweird.f32 %v350
  %vm682 = vweird.f32 %v676
  %vm683 = vmor %vm681, %vm682
  %v684 = vsel %vm683, %v676, %v680
  %v685 = vand.u32 2147483647, %v350
  %vm686 = vcmp.eq.f32.partialorder %v685, 8.507059e+37
  %v687 = vand.u32 %v350, 2147483648
  %v688 = vor.u32 1.1754944e-38, %v687
  %v689 = vsel %vm686, %v688, %v684
  %v690 = vmul.f32 1.0, %v689
  %v691 = vrcp.pop %v351
  %v692 = vmul.f32 %v351, %v691
  %v693 = vsub.f32 1.0, %v692
  %v694 = vmul.f32 %v691, %v693
  %v695 = vadd.f32 %v691, %v694
  %vm696 = vweird.f32 %v351
  %vm697 = vweird.f32 %v691
  %vm698 = vmor %vm696, %vm697
  %v699 = vsel %vm698, %v691, %v695
  %v700 = vand.u32 2147483647, %v351
  %vm701 = vcmp.eq.f32.partialorder %v700, 8.507059e+37
  %v702 = vand.u32 %v351, 2147483648
  %v703 = vor.u32 1.1754944e-38, %v702
  %v704 = vsel %vm701, %v703, %v699
  %v705 = vmul.f32 1.0, %v704
  %v706 = vrcp.pop %v352
  %v707 = vmul.f32 %v352, %v706
  %v708 = vsub.f32 1.0, %v707
  %v709 = vmul.f32 %v706, %v708
  %v710 = vadd.f32 %v706, %v709
  %vm711 = vweird.f32 %v352
  %vm712 = vweird.f32 %v706
  %vm713 = vmor %vm711, %vm712
  %v714 = vsel %vm713, %v706, %v710
  %v715 = vand.u32 2147483647, %v352
  %vm716 = vcmp.eq.f32.partialorder %v715, 8.507059e+37
  %v717 = vand.u32 %v352, 2147483648
  %v718 = vor.u32 1.1754944e-38, %v717
  %v719 = vsel %vm716, %v718, %v714
  %v720 = vmul.f32 1.0, %v719
  %v721 = vrcp.pop %v353
  %v722 = vmul.f32 %v353, %v721
  %v723 = vsub.f32 1.0, %v722
  %v724 = vmul.f32 %v721, %v723
  %v725 = vadd.f32 %v721, %v724
  %vm726 = vweird.f32 %v353
  %vm727 = vweird.f32 %v721
  %vm728 = vmor %vm726, %vm727
  %v729 = vsel %vm728, %v721, %v725
  %v730 = vand.u32 2147483647, %v353
  %vm731 = vcmp.eq.f32.partialorder %v730, 8.507059e+37
  %v732 = vand.u32 %v353, 2147483648
  %v733 = vor.u32 1.1754944e-38, %v732
  %v734 = vsel %vm731, %v733, %v729
  %v735 = vmul.f32 1.0, %v734
  %v736 = vrcp.pop %v354
  %v737 = vmul.f32 %v354, %v736
  %v738 = vsub.f32 1.0, %v737
  %v739 = vmul.f32 %v736, %v738
  %v740 = vadd.f32 %v736, %v739
  %vm741 = vweird.f32 %v354
  %vm742 = vweird.f32 %v736
  %vm743 = vmor %vm741, %vm742
  %v744 = vsel %vm743, %v736, %v740
  %v745 = vand.u32 2147483647, %v354
  %vm746 = vcmp.eq.f32.partialorder %v745, 8.507059e+37
  %v747 = vand.u32 %v354, 2147483648
  %v748 = vor.u32 1.1754944e-38, %v747
  %v749 = vsel %vm746, %v748, %v744
  %v750 = vmul.f32 1.0, %v749
  %v751 = vrcp.pop %v355
  %v752 = vmul.f32 %v355, %v751
  %v753 = vsub.f32 1.0, %v752
  %v754 = vmul.f32 %v751, %v753
  %v755 = vadd.f32 %v751, %v754
  %vm756 = vweird.f32 %v355
  %vm757 = vweird.f32 %v751
  %vm758 = vmor %vm756, %vm757
  %v759 = vsel %vm758, %v751, %v755
  %v760 = vand.u32 2147483647, %v355
  %vm761 = vcmp.eq.f32.partialorder %v760, 8.507059e+37
  %v762 = vand.u32 %v355, 2147483648
  %v763 = vor.u32 1.1754944e-38, %v762
  %v764 = vsel %vm761, %v763, %v759
  %v765 = vmul.f32 1.0, %v764
  %v766 = vrcp.pop %v356
  %v767 = vmul.f32 %v356, %v766
  %v768 = vsub.f32 1.0, %v767
  %v769 = vmul.f32 %v766, %v768
  %v770 = vadd.f32 %v766, %v769
  %vm771 = vweird.f32 %v356
  %vm772 = vweird.f32 %v766
  %vm773 = vmor %vm771, %vm772
  %v774 = vsel %vm773, %v766, %v770
  %v775 = vand.u32 2147483647, %v356
  %vm776 = vcmp.eq.f32.partialorder %v775, 8.507059e+37
  %v777 = vand.u32 %v356, 2147483648
  %v778 = vor.u32 1.1754944e-38, %v777
  %v779 = vsel %vm776, %v778, %v774
  %v780 = vmul.f32 1.0, %v779
  %v781 = vrcp.pop %v357
  %v782 = vmul.f32 %v357, %v781
  %v783 = vsub.f32 1.0, %v782
  %v784 = vmul.f32 %v781, %v783
  %v785 = vadd.f32 %v781, %v784
  %vm786 = vweird.f32 %v357
  %vm787 = vweird.f32 %v781
  %vm788 = vmor %vm786, %vm787
  %v789 = vsel %vm788, %v781, %v785
  %v790 = vand.u32 2147483647, %v357
  %vm791 = vcmp.eq.f32.partialorder %v790, 8.507059e+37
  %v792 = vand.u32 %v357, 2147483648
  %v793 = vor.u32 1.1754944e-38, %v792
  %v794 = vsel %vm791, %v793, %v789
  %v795 = vmul.f32 1.0, %v794
  %v796 = vrcp.pop %v358
  %v797 = vmul.f32 %v358, %v796
  %v798 = vsub.f32 1.0, %v797
  %v799 = vmul.f32 %v796, %v798
  %v800 = vadd.f32 %v796, %v799
  %vm801 = vweird.f32 %v358
  %vm802 = vweird.f32 %v796
  %vm803 = vmor %vm801, %vm802
  %v804 = vsel %vm803, %v796, %v800
  %v805 = vand.u32 2147483647, %v358
  %vm806 = vcmp.eq.f32.partialorder %v805, 8.507059e+37
  %v807 = vand.u32 %v358, 2147483648
  %v808 = vor.u32 1.1754944e-38, %v807
  %v809 = vsel %vm806, %v808, %v804
  %v810 = vmul.f32 1.0, %v809
  %v811 = vrcp.pop %v359
  %v812 = vmul.f32 %v359, %v811
  %v813 = vsub.f32 1.0, %v812
  %v814 = vmul.f32 %v811, %v813
  %v815 = vadd.f32 %v811, %v814
  %vm816 = vweird.f32 %v359
  %vm817 = vweird.f32 %v811
  %vm818 = vmor %vm816, %vm817
  %v819 = vsel %vm818, %v811, %v815
  %v820 = vand.u32 2147483647, %v359
  %vm821 = vcmp.eq.f32.partialorder %v820, 8.507059e+37
  %v822 = vand.u32 %v359, 2147483648
  %v823 = vor.u32 1.1754944e-38, %v822
  %v824 = vsel %vm821, %v823, %v819
  %v825 = vmul.f32 1.0, %v824
  %v826 = vrcp.pop %v360
  %v827 = vmul.f32 %v360, %v826
  %v828 = vsub.f32 1.0, %v827
  %v829 = vmul.f32 %v826, %v828
  %v830 = vadd.f32 %v826, %v829
  %vm831 = vweird.f32 %v360
  %vm832 = vweird.f32 %v826
  %vm833 = vmor %vm831, %vm832
  %v834 = vsel %vm833, %v826, %v830
  %v835 = vand.u32 2147483647, %v360
  %vm836 = vcmp.eq.f32.partialorder %v835, 8.507059e+37
  %v837 = vand.u32 %v360, 2147483648
  %v838 = vor.u32 1.1754944e-38, %v837
  %v839 = vsel %vm836, %v838, %v834
  %v840 = vmul.f32 1.0, %v839
  %v841 = vmul.f32 %v375, 1.0614054
  %v842 = vmul.f32 %v390, 1.0614054
  %v843 = vmul.f32 %v405, 1.0614054
  %v844 = vmul.f32 %v420, 1.0614054
  %v845 = vmul.f32 %v435, 1.0614054
  %v846 = vmul.f32 %v450, 1.0614054
  %v847 = vmul.f32 %v465, 1.0614054
  %v848 = vmul.f32 %v480, 1.0614054
  %v849 = vmul.f32 %v495, 1.0614054
  %v850 = vmul.f32 %v510, 1.0614054
  %v851 = vmul.f32 %v525, 1.0614054
  %v852 = vmul.f32 %v540, 1.0614054
  %v853 = vmul.f32 %v555, 1.0614054
  %v854 = vmul.f32 %v570, 1.0614054
  %v855 = vmul.f32 %v585, 1.0614054
  %v856 = vmul.f32 %v600, 1.0614054
  %v857 = vmul.f32 %v615, 1.0614054
  %v858 = vmul.f32 %v630, 1.0614054
  %v859 = vmul.f32 %v645, 1.0614054
  %v860 = vmul.f32 %v660, 1.0614054
  %v861 = vmul.f32 %v675, 1.0614054
  %v862 = vmul.f32 %v690, 1.0614054
  %v863 = vmul.f32 %v705, 1.0614054
  %v864 = vmul.f32 %v720, 1.0614054
  %v865 = vmul.f32 %v735, 1.0614054
  %v866 = vmul.f32 %v750, 1.0614054
  %v867 = vmul.f32 %v765, 1.0614054
  %v868 = vmul.f32 %v780, 1.0614054
  %v869 = vmul.f32 %v795, 1.0614054
  %v870 = vmul.f32 %v810, 1.0614054
  %v871 = vmul.f32 %v825, 1.0614054
  %v872 = vmul.f32 %v840, 1.0614054
  %v873 = vadd.f32 %v841, -1.4531521
  %v874 = vadd.f32 %v842, -1.4531521
  %v875 = vadd.f32 %v843, -1.4531521
  %v876 = vadd.f32 %v844, -1.4531521
  %v877 = vadd.f32 %v845, -1.4531521
  %v878 = vadd.f32 %v846, -1.4531521
  %v879 = vadd.f32 %v847, -1.4531521
  %v880 = vadd.f32 %v848, -1.4531521
  %v881 = vadd.f32 %v849, -1.4531521
  %v882 = vadd.f32 %v850, -1.4531521
  %v883 = vadd.f32 %v851, -1.4531521
  %v884 = vadd.f32 %v852, -1.4531521
  %v885 = vadd.f32 %v853, -1.4531521
  %v886 = vadd.f32 %v854, -1.4531521
  %v887 = vadd.f32 %v855, -1.4531521
  %v888 = vadd.f32 %v856, -1.4531521
  %v889 = vadd.f32 %v857, -1.4531521
  %v890 = vadd.f32 %v858, -1.4531521
  %v891 = vadd.f32 %v859, -1.4531521
  %v892 = vadd.f32 %v860, -1.4531521
  %v893 = vadd.f32 %v861, -1.4531521
  %v894 = vadd.f32 %v862, -1.4531521
  %v895 = vadd.f32 %v863, -1.4531521
  %v896 = vadd.f32 %v864, -1.4531521
  %v897 = vadd.f32 %v865, -1.4531521
  %v898 = vadd.f32 %v866, -1.4531521
  %v899 = vadd.f32 %v867, -1.4531521
  %v900 = vadd.f32 %v868, -1.4531521
  %v901 = vadd.f32 %v869, -1.4531521
  %v902 = vadd.f32 %v870, -1.4531521
  %v903 = vadd.f32 %v871, -1.4531521
  %v904 = vadd.f32 %v872, -1.4531521
  %v905 = vmul.f32 %v375, %v873
  %v906 = vmul.f32 %v390, %v874
  %v907 = vmul.f32 %v405, %v875
  %v908 = vmul.f32 %v420, %v876
  %v909 = vmul.f32 %v435, %v877
  %v910 = vmul.f32 %v450, %v878
  %v911 = vmul.f32 %v465, %v879
  %v912 = vmul.f32 %v480, %v880
  %v913 = vmul.f32 %v495, %v881
  %v914 = vmul.f32 %v510, %v882
  %v915 = vmul.f32 %v525, %v883
  %v916 = vmul.f32 %v540, %v884
  %v917 = vmul.f32 %v555, %v885
  %v918 = vmul.f32 %v570, %v886
  %v919 = vmul.f32 %v585, %v887
  %v920 = vmul.f32 %v600, %v888
  %v921 = vmul.f32 %v615, %v889
  %v922 = vmul.f32 %v630, %v890
  %v923 = vmul.f32 %v645, %v891
  %v924 = vmul.f32 %v660, %v892
  %v925 = vmul.f32 %v675, %v893
  %v926 = vmul.f32 %v690, %v894
  %v927 = vmul.f32 %v705, %v895
  %v928 = vmul.f32 %v720, %v896
  %v929 = vmul.f32 %v735, %v897
  %v930 = vmul.f32 %v750, %v898
  %v931 = vmul.f32 %v765, %v899
  %v932 = vmul.f32 %v780, %v900
  %v933 = vmul.f32 %v795, %v901
  %v934 = vmul.f32 %v810, %v902
  %v935 = vmul.f32 %v825, %v903
  %v936 = vmul.f32 %v840, %v904
  %v937 = vadd.f32 %v905, 1.4214138
  %v938 = vadd.f32 %v906, 1.4214138
  %v939 = vadd.f32 %v907, 1.4214138
  %v940 = vadd.f32 %v908, 1.4214138
  %v941 = vadd.f32 %v909, 1.4214138
  %v942 = vadd.f32 %v910, 1.4214138
  %v943 = vadd.f32 %v911, 1.4214138
  %v944 = vadd.f32 %v912, 1.4214138
  %v945 = vadd.f32 %v913, 1.4214138
  %v946 = vadd.f32 %v914, 1.4214138
  %v947 = vadd.f32 %v915, 1.4214138
  %v948 = vadd.f32 %v916, 1.4214138
  %v949 = vadd.f32 %v917, 1.4214138
  %v950 = vadd.f32 %v918, 1.4214138
  %v951 = vadd.f32 %v919, 1.4214138
  %v952 = vadd.f32 %v920, 1.4214138
  %v953 = vadd.f32 %v921, 1.4214138
  %v954 = vadd.f32 %v922, 1.4214138
  %v955 = vadd.f32 %v923, 1.4214138
  %v956 = vadd.f32 %v924, 1.4214138
  %v957 = vadd.f32 %v925, 1.4214138
  %v958 = vadd.f32 %v926, 1.4214138
  %v959 = vadd.f32 %v927, 1.4214138
  %v960 = vadd.f32 %v928, 1.4214138
  %v961 = vadd.f32 %v929, 1.4214138
  %v962 = vadd.f32 %v930, 1.4214138
  %v963 = vadd.f32 %v931, 1.4214138
  %v964 = vadd.f32 %v932, 1.4214138
  %v965 = vadd.f32 %v933, 1.4214138
  %v966 = vadd.f32 %v934, 1.4214138
  %v967 = vadd.f32 %v935, 1.4214138
  %v968 = vadd.f32 %v936, 1.4214138
  %v969 = vmul.f32 %v375, %v937
  %v970 = vmul.f32 %v390, %v938
  %v971 = vmul.f32 %v405, %v939
  %v972 = vmul.f32 %v420, %v940
  %v973 = vmul.f32 %v435, %v941
  %v974 = vmul.f32 %v450, %v942
  %v975 = vmul.f32 %v465, %v943
  %v976 = vmul.f32 %v480, %v944
  %v977 = vmul.f32 %v495, %v945
  %v978 = vmul.f32 %v510, %v946
  %v979 = vmul.f32 %v525, %v947
  %v980 = vmul.f32 %v540, %v948
  %v981 = vmul.f32 %v555, %v949
  %v982 = vmul.f32 %v570, %v950
  %v983 = vmul.f32 %v585, %v951
  %v984 = vmul.f32 %v600, %v952
  %v985 = vmul.f32 %v615, %v953
  %v986 = vmul.f32 %v630, %v954
  %v987 = vmul.f32 %v645, %v955
  %v988 = vmul.f32 %v660, %v956
  %v989 = vmul.f32 %v675, %v957
  %v990 = vmul.f32 %v690, %v958
  %v991 = vmul.f32 %v705, %v959
  %v992 = vmul.f32 %v720, %v960
  %v993 = vmul.f32 %v735, %v961
  %v994 = vmul.f32 %v750, %v962
  %v995 = vmul.f32 %v765, %v963
  %v996 = vmul.f32 %v780, %v964
  %v997 = vmul.f32 %v795, %v965
  %v998 = vmul.f32 %v810, %v966
  %v999 = vmul.f32 %v825, %v967
  %v1000 = vmul.f32 %v840, %v968
  %v1001 = vadd.f32 %v969, -0.28449672
  %v1002 = vadd.f32 %v970, -0.28449672
  %v1003 = vadd.f32 %v971, -0.28449672
  %v1004 = vadd.f32 %v972, -0.28449672
  %v1005 = vadd.f32 %v973, -0.28449672
  %v1006 = vadd.f32 %v974, -0.28449672
  %v1007 = vadd.f32 %v975, -0.28449672
  %v1008 = vadd.f32 %v976, -0.28449672
  %v1009 = vadd.f32 %v977, -0.28449672
  %v1010 = vadd.f32 %v978, -0.28449672
  %v1011 = vadd.f32 %v979, -0.28449672
  %v1012 = vadd.f32 %v980, -0.28449672
  %v1013 = vadd.f32 %v981, -0.28449672
  %v1014 = vadd.f32 %v982, -0.28449672
  %v1015 = vadd.f32 %v983, -0.28449672
  %v1016 = vadd.f32 %v984, -0.28449672
  %v1017 = vadd.f32 %v985, -0.28449672
  %v1018 = vadd.f32 %v986, -0.28449672
  %v1019 = vadd.f32 %v987, -0.28449672
  %v1020 = vadd.f32 %v988, -0.28449672
  %v1021 = vadd.f32 %v989, -0.28449672
  %v1022 = vadd.f32 %v990, -0.28449672
  %v1023 = vadd.f32 %v991, -0.28449672
  %v1024 = vadd.f32 %v992, -0.28449672
  %v1025 = vadd.f32 %v993, -0.28449672
  %v1026 = vadd.f32 %v994, -0.28449672
  %v1027 = vadd.f32 %v995, -0.28449672
  %v1028 = vadd.f32 %v996, -0.28449672
  %v1029 = vadd.f32 %v997, -0.28449672
  %v1030 = vadd.f32 %v998, -0.28449672
  %v1031 = vadd.f32 %v999, -0.28449672
  %v1032 = vadd.f32 %v1000, -0.28449672
  %v1033 = vmul.f32 %v375, %v1001
  %v1034 = vmul.f32 %v390, %v1002
  %v1035 = vmul.f32 %v405, %v1003
  %v1036 = vmul.f32 %v420, %v1004
  %v1037 = vmul.f32 %v435, %v1005
  %v1038 = vmul.f32 %v450, %v1006
  %v1039 = vmul.f32 %v465, %v1007
  %v1040 = vmul.f32 %v480, %v1008
  %v1041 = vmul.f32 %v495, %v1009
  %v1042 = vmul.f32 %v510, %v1010
  %v1043 = vmul.f32 %v525, %v1011
  %v1044 = vmul.f32 %v540, %v1012
  %v1045 = vmul.f32 %v555, %v1013
  %v1046 = vmul.f32 %v570, %v1014
  %v1047 = vmul.f32 %v585, %v1015
  %v1048 = vmul.f32 %v600, %v1016
  %v1049 = vmul.f32 %v615, %v1017
  %v1050 = vmul.f32 %v630, %v1018
  %v1051 = vmul.f32 %v645, %v1019
  %v1052 = vmul.f32 %v660, %v1020
  %v1053 = vmul.f32 %v675, %v1021
  %v1054 = vmul.f32 %v690, %v1022
  %v1055 = vmul.f32 %v705, %v1023
  %v1056 = vmul.f32 %v720, %v1024
  %v1057 = vmul.f32 %v735, %v1025
  %v1058 = vmul.f32 %v750, %v1026
  %v1059 = vmul.f32 %v765, %v1027
  %v1060 = vmul.f32 %v780, %v1028
  %v1061 = vmul.f32 %v795, %v1029
  %v1062 = vmul.f32 %v810, %v1030
  %v1063 = vmul.f32 %v825, %v1031
  %v1064 = vmul.f32 %v840, %v1032
  %v1065 = vadd.f32 %v1033, 0.2548296
  %v1066 = vadd.f32 %v1034, 0.2548296
  %v1067 = vadd.f32 %v1035, 0.2548296
  %v1068 = vadd.f32 %v1036, 0.2548296
  %v1069 = vadd.f32 %v1037, 0.2548296
  %v1070 = vadd.f32 %v1038, 0.2548296
  %v1071 = vadd.f32 %v1039, 0.2548296
  %v1072 = vadd.f32 %v1040, 0.2548296
  %v1073 = vadd.f32 %v1041, 0.2548296
  %v1074 = vadd.f32 %v1042, 0.2548296
  %v1075 = vadd.f32 %v1043, 0.2548296
  %v1076 = vadd.f32 %v1044, 0.2548296
  %v1077 = vadd.f32 %v1045, 0.2548296
  %v1078 = vadd.f32 %v1046, 0.2548296
  %v1079 = vadd.f32 %v1047, 0.2548296
  %v1080 = vadd.f32 %v1048, 0.2548296
  %v1081 = vadd.f32 %v1049, 0.2548296
  %v1082 = vadd.f32 %v1050, 0.2548296
  %v1083 = vadd.f32 %v1051, 0.2548296
  %v1084 = vadd.f32 %v1052, 0.2548296
  %v1085 = vadd.f32 %v1053, 0.2548296
  %v1086 = vadd.f32 %v1054, 0.2548296
  %v1087 = vadd.f32 %v1055, 0.2548296
  %v1088 = vadd.f32 %v1056, 0.2548296
  %v1089 = vadd.f32 %v1057, 0.2548296
  %v1090 = vadd.f32 %v1058, 0.2548296
  %v1091 = vadd.f32 %v1059, 0.2548296
  %v1092 = vadd.f32 %v1060, 0.2548296
  %v1093 = vadd.f32 %v1061, 0.2548296
  %v1094 = vadd.f32 %v1062, 0.2548296
  %v1095 = vadd.f32 %v1063, 0.2548296
  %v1096 = vadd.f32 %v1064, 0.2548296
  %v1097 = vmul.f32 %v375, %v1065
  %v1098 = vmul.f32 %v390, %v1066
  %v1099 = vmul.f32 %v405, %v1067
  %v1100 = vmul.f32 %v420, %v1068
  %v1101 = vmul.f32 %v435, %v1069
  %v1102 = vmul.f32 %v450, %v1070
  %v1103 = vmul.f32 %v465, %v1071
  %v1104 = vmul.f32 %v480, %v1072
  %v1105 = vmul.f32 %v495, %v1073
  %v1106 = vmul.f32 %v510, %v1074
  %v1107 = vmul.f32 %v525, %v1075
  %v1108 = vmul.f32 %v540, %v1076
  %v1109 = vmul.f32 %v555, %v1077
  %v1110 = vmul.f32 %v570, %v1078
  %v1111 = vmul.f32 %v585, %v1079
  %v1112 = vmul.f32 %v600, %v1080
  %v1113 = vmul.f32 %v615, %v1081
  %v1114 = vmul.f32 %v630, %v1082
  %v1115 = vmul.f32 %v645, %v1083
  %v1116 = vmul.f32 %v660, %v1084
  %v1117 = vmul.f32 %v675, %v1085
  %v1118 = vmul.f32 %v690, %v1086
  %v1119 = vmul.f32 %v705, %v1087
  %v1120 = vmul.f32 %v720, %v1088
  %v1121 = vmul.f32 %v735, %v1089
  %v1122 = vmul.f32 %v750, %v1090
  %v1123 = vmul.f32 %v765, %v1091
  %v1124 = vmul.f32 %v780, %v1092
  %v1125 = vmul.f32 %v795, %v1093
  %v1126 = vmul.f32 %v810, %v1094
  %v1127 = vmul.f32 %v825, %v1095
  %v1128 = vmul.f32 %v840, %v1096
  %v1129 = vsub.f32 0.0, %v265
  %v1130 = vsub.f32 0.0, %v266
  %v1131 = vsub.f32 0.0, %v267
  %v1132 = vsub.f32 0.0, %v268
  %v1133 = vsub.f32 0.0, %v269
  %v1134 = vsub.f32 0.0, %v270
  %v1135 = vsub.f32 0.0, %v271
  %v1136 = vsub.f32 0.0, %v272
  %v1137 = vsub.f32 0.0, %v273
  %v1138 = vsub.f32 0.0, %v274
  %v1139 = vsub.f32 0.0, %v275
  %v1140 = vsub.f32 0.0, %v276
  %v1141 = vsub.f32 0.0, %v277
  %v1142 = vsub.f32 0.0, %v278
  %v1143 = vsub.f32 0.0, %v279
  %v1144 = vsub.f32 0.0, %v280
  %v1145 = vsub.f32 0.0, %v281
  %v1146 = vsub.f32 0.0, %v282
  %v1147 = vsub.f32 0.0, %v283
  %v1148 = vsub.f32 0.0, %v284
  %v1149 = vsub.f32 0.0, %v285
  %v1150 = vsub.f32 0.0, %v286
  %v1151 = vsub.f32 0.0, %v287
  %v1152 = vsub.f32 0.0, %v288
  %v1153 = vsub.f32 0.0, %v289
  %v1154 = vsub.f32 0.0, %v290
  %v1155 = vsub.f32 0.0, %v291
  %v1156 = vsub.f32 0.0, %v292
  %v1157 = vsub.f32 0.0, %v293
  %v1158 = vsub.f32 0.0, %v294
  %v1159 = vsub.f32 0.0, %v295
  %v1160 = vsub.f32 0.0, %v296
  %v1161 = vmul.f32 %v1129, %v265
  %v1162 = vmul.f32 %v1130, %v266
  %v1163 = vmul.f32 %v1131, %v267
  %v1164 = vmul.f32 %v1132, %v268
  %v1165 = vmul.f32 %v1133, %v269
  %v1166 = vmul.f32 %v1134, %v270
  %v1167 = vmul.f32 %v1135, %v271
  %v1168 = vmul.f32 %v1136, %v272
  %v1169 = vmul.f32 %v1137, %v273
  %v1170 = vmul.f32 %v1138, %v274
  %v1171 = vmul.f32 %v1139, %v275
  %v1172 = vmul.f32 %v1140, %v276
  %v1173 = vmul.f32 %v1141, %v277
  %v1174 = vmul.f32 %v1142, %v278
  %v1175 = vmul.f32 %v1143, %v279
  %v1176 = vmul.f32 %v1144, %v280
  %v1177 = vmul.f32 %v1145, %v281
  %v1178 = vmul.f32 %v1146, %v282
  %v1179 = vmul.f32 %v1147, %v283
  %v1180 = vmul.f32 %v1148, %v284
  %v1181 = vmul.f32 %v1149, %v285
  %v1182 = vmul.f32 %v1150, %v286
  %v1183 = vmul.f32 %v1151, %v287
  %v1184 = vmul.f32 %v1152, %v288
  %v1185 = vmul.f32 %v1153, %v289
  %v1186 = vmul.f32 %v1154, %v290
  %v1187 = vmul.f32 %v1155, %v291
  %v1188 = vmul.f32 %v1156, %v292
  %v1189 = vmul.f32 %v1157, %v293
  %v1190 = vmul.f32 %v1158, %v294
  %v1191 = vmul.f32 %v1159, %v295
  %v1192 = vmul.f32 %v1160, %v296
  %v1193 = vmul.f32 %v1161, 1.442695
  %v1194 = vpow.pop %v1193
  %v1195 = vmul.f32 %v1162, 1.442695
  %v1196 = vpow.pop %v1195
  %v1197 = vmul.f32 %v1163, 1.442695
  %v1198 = vpow.pop %v1197
  %v1199 = vmul.f32 %v1164, 1.442695
  %v1200 = vpow.pop %v1199
  %v1201 = vmul.f32 %v1165, 1.442695
  %v1202 = vpow.pop %v1201
  %v1203 = vmul.f32 %v1166, 1.442695
  %v1204 = vpow.pop %v1203
  %v1205 = vmul.f32 %v1167, 1.442695
  %v1206 = vpow.pop %v1205
  %v1207 = vmul.f32 %v1168, 1.442695
  %v1208 = vpow.pop %v1207
  %v1209 = vmul.f32 %v1169, 1.442695
  %v1210 = vpow.pop %v1209
  %v1211 = vmul.f32 %v1170, 1.442695
  %v1212 = vpow.pop %v1211
  %v1213 = vmul.f32 %v1171, 1.442695
  %v1214 = vpow.pop %v1213
  %v1215 = vmul.f32 %v1172, 1.442695
  %v1216 = vpow.pop %v1215
  %v1217 = vmul.f32 %v1173, 1.442695
  %v1218 = vpow.pop %v1217
  %v1219 = vmul.f32 %v1174, 1.442695
  %v1220 = vpow.pop %v1219
  %v1221 = vmul.f32 %v1175, 1.442695
  %v1222 = vpow.pop %v1221
  %v1223 = vmul.f32 %v1176, 1.442695
  %v1224 = vpow.pop %v1223
  %v1225 = vmul.f32 %v1177, 1.442695
  %v1226 = vpow.pop %v1225
  %v1227 = vmul.f32 %v1178, 1.442695
  %v1228 = vpow.pop %v1227
  %v1229 = vmul.f32 %v1179, 1.442695
  %v1230 = vpow.pop %v1229
  %v1231 = vmul.f32 %v1180, 1.442695
  %v1232 = vpow.pop %v1231
  %v1233 = vmul.f32 %v1181, 1.442695
  %v1234 = vpow.pop %v1233
  %v1235 = vmul.f32 %v1182, 1.442695
  %v1236 = vpow.pop %v1235
  %v1237 = vmul.f32 %v1183, 1.442695
  %v1238 = vpow.pop %v1237
  %v1239 = vmul.f32 %v1184, 1.442695
  %v1240 = vpow.pop %v1239
  %v1241 = vmul.f32 %v1185, 1.442695
  %v1242 = vpow.pop %v1241
  %v1243 = vmul.f32 %v1186, 1.442695
  %v1244 = vpow.pop %v1243
  %v1245 = vmul.f32 %v1187, 1.442695
  %v1246 = vpow.pop %v1245
  %v1247 = vmul.f32 %v1188, 1.442695
  %v1248 = vpow.pop %v1247
  %v1249 = vmul.f32 %v1189, 1.442695
  %v1250 = vpow.pop %v1249
  %v1251 = vmul.f32 %v1190, 1.442695
  %v1252 = vpow.pop %v1251
  %v1253 = vmul.f32 %v1191, 1.442695
  %v1254 = vpow.pop %v1253
  %v1255 = vmul.f32 %v1192, 1.442695
  %v1256 = vpow.pop %v1255
  %v1257 = vmul.f32 %v1097, %v1194
  %v1258 = vmul.f32 %v1098, %v1196
  %v1259 = vmul.f32 %v1099, %v1198
  %v1260 = vmul.f32 %v1100, %v1200
  %v1261 = vmul.f32 %v1101, %v1202
  %v1262 = vmul.f32 %v1102, %v1204
  %v1263 = vmul.f32 %v1103, %v1206
  %v1264 = vmul.f32 %v1104, %v1208
  %v1265 = vmul.f32 %v1105, %v1210
  %v1266 = vmul.f32 %v1106, %v1212
  %v1267 = vmul.f32 %v1107, %v1214
  %v1268 = vmul.f32 %v1108, %v1216
  %v1269 = vmul.f32 %v1109, %v1218
  %v1270 = vmul.f32 %v1110, %v1220
  %v1271 = vmul.f32 %v1111, %v1222
  %v1272 = vmul.f32 %v1112, %v1224
  %v1273 = vmul.f32 %v1113, %v1226
  %v1274 = vmul.f32 %v1114, %v1228
  %v1275 = vmul.f32 %v1115, %v1230
  %v1276 = vmul.f32 %v1116, %v1232
  %v1277 = vmul.f32 %v1117, %v1234
  %v1278 = vmul.f32 %v1118, %v1236
  %v1279 = vmul.f32 %v1119, %v1238
  %v1280 = vmul.f32 %v1120, %v1240
  %v1281 = vmul.f32 %v1121, %v1242
  %v1282 = vmul.f32 %v1122, %v1244
  %v1283 = vmul.f32 %v1123, %v1246
  %v1284 = vmul.f32 %v1124, %v1248
  %v1285 = vmul.f32 %v1125, %v1250
  %v1286 = vmul.f32 %v1126, %v1252
  %v1287 = vmul.f32 %v1127, %v1254
  %v1288 = vmul.f32 %v1128, %v1256
  %v1289 = vsub.f32 1.0, %v1257
  %v1290 = vsub.f32 1.0, %v1258
  %v1291 = vsub.f32 1.0, %v1259
  %v1292 = vsub.f32 1.0, %v1260
  %v1293 = vsub.f32 1.0, %v1261
  %v1294 = vsub.f32 1.0, %v1262
  %v1295 = vsub.f32 1.0, %v1263
  %v1296 = vsub.f32 1.0, %v1264
  %v1297 = vsub.f32 1.0, %v1265
  %v1298 = vsub.f32 1.0, %v1266
  %v1299 = vsub.f32 1.0, %v1267
  %v1300 = vsub.f32 1.0, %v1268
  %v1301 = vsub.f32 1.0, %v1269
  %v1302 = vsub.f32 1.0, %v1270
  %v1303 = vsub.f32 1.0, %v1271
  %v1304 = vsub.f32 1.0, %v1272
  %v1305 = vsub.f32 1.0, %v1273
  %v1306 = vsub.f32 1.0, %v1274
  %v1307 = vsub.f32 1.0, %v1275
  %v1308 = vsub.f32 1.0, %v1276
  %v1309 = vsub.f32 1.0, %v1277
  %v1310 = vsub.f32 1.0, %v1278
  %v1311 = vsub.f32 1.0, %v1279
  %v1312 = vsub.f32 1.0, %v1280
  %v1313 = vsub.f32 1.0, %v1281
  %v1314 = vsub.f32 1.0, %v1282
  %v1315 = vsub.f32 1.0, %v1283
  %v1316 = vsub.f32 1.0, %v1284
  %v1317 = vsub.f32 1.0, %v1285
  %v1318 = vsub.f32 1.0, %v1286
  %v1319 = vsub.f32 1.0, %v1287
  %v1320 = vsub.f32 1.0, %v1288
  %vm1321 = vcmp.lt.f32.partialorder %v233, 0.0
  %vm1322 = vcmp.lt.f32.partialorder %v234, 0.0
  %vm1323 = vcmp.lt.f32.partialorder %v235, 0.0
  %vm1324 = vcmp.lt.f32.partialorder %v236, 0.0
  %vm1325 = vcmp.lt.f32.partialorder %v237, 0.0
  %vm1326 = vcmp.lt.f32.partialorder %v238, 0.0
  %vm1327 = vcmp.lt.f32.partialorder %v239, 0.0
  %vm1328 = vcmp.lt.f32.partialorder %v240, 0.0
  %vm1329 = vcmp.lt.f32.partialorder %v241, 0.0
  %vm1330 = vcmp.lt.f32.partialorder %v242, 0.0
  %vm1331 = vcmp.lt.f32.partialorder %v243, 0.0
  %vm1332 = vcmp.lt.f32.partialorder %v244, 0.0
  %vm1333 = vcmp.lt.f32.partialorder %v245, 0.0
  %vm1334 = vcmp.lt.f32.partialorder %v246, 0.0
  %vm1335 = vcmp.lt.f32.partialorder %v247, 0.0
  %vm1336 = vcmp.lt.f32.partialorder %v248, 0.0
  %vm1337 = vcmp.lt.f32.partialorder %v249, 0.0
  %vm1338 = vcmp.lt.f32.partialorder %v250, 0.0
  %vm1339 = vcmp.lt.f32.partialorder %v251, 0.0
  %vm1340 = vcmp.lt.f32.partialorder %v252, 0.0
  %vm1341 = vcmp.lt.f32.partialorder %v253, 0.0
  %vm1342 = vcmp.lt.f32.partialorder %v254, 0.0
  %vm1343 = vcmp.lt.f32.partialorder %v255, 0.0
  %vm1344 = vcmp.lt.f32.partialorder %v256, 0.0
  %vm1345 = vcmp.lt.f32.partialorder %v257, 0.0
  %vm1346 = vcmp.lt.f32.partialorder %v258, 0.0
  %vm1347 = vcmp.lt.f32.partialorder %v259, 0.0
  %vm1348 = vcmp.lt.f32.partialorder %v260, 0.0
  %vm1349 = vcmp.lt.f32.partialorder %v261, 0.0
  %vm1350 = vcmp.lt.f32.partialorder %v262, 0.0
  %vm1351 = vcmp.lt.f32.partialorder %v263, 0.0
  %vm1352 = vcmp.lt.f32.partialorder %v264, 0.0
  %v1353 = vsub.f32 0.0, %v1289
  %v1354 = vsub.f32 0.0, %v1290
  %v1355 = vsub.f32 0.0, %v1291
  %v1356 = vsub.f32 0.0, %v1292
  %v1357 = vsub.f32 0.0, %v1293
  %v1358 = vsub.f32 0.0, %v1294
  %v1359 = vsub.f32 0.0, %v1295
  %v1360 = vsub.f32 0.0, %v1296
  %v1361 = vsub.f32 0.0, %v1297
  %v1362 = vsub.f32 0.0, %v1298
  %v1363 = vsub.f32 0.0, %v1299
  %v1364 = vsub.f32 0.0, %v1300
  %v1365 = vsub.f32 0.0, %v1301
  %v1366 = vsub.f32 0.0, %v1302
  %v1367 = vsub.f32 0.0, %v1303
  %v1368 = vsub.f32 0.0, %v1304
  %v1369 = vsub.f32 0.0, %v1305
  %v1370 = vsub.f32 0.0, %v1306
  %v1371 = vsub.f32 0.0, %v1307
  %v1372 = vsub.f32 0.0, %v1308
  %v1373 = vsub.f32 0.0, %v1309
  %v1374 = vsub.f32 0.0, %v1310
  %v1375 = vsub.f32 0.0, %v1311
  %v1376 = vsub.f32 0.0, %v1312
  %v1377 = vsub.f32 0.0, %v1313
  %v1378 = vsub.f32 0.0, %v1314
  %v1379 = vsub.f32 0.0, %v1315
  %v1380 = vsub.f32 0.0, %v1316
  %v1381 = vsub.f32 0.0, %v1317
  %v1382 = vsub.f32 0.0, %v1318
  %v1383 = vsub.f32 0.0, %v1319
  %v1384 = vsub.f32 0.0, %v1320
  %v1385 = vsel %vm1321, %v1353, %v1289
  %v1386 = vsel %vm1322, %v1354, %v1290
  %v1387 = vsel %vm1323, %v1355, %v1291
  %v1388 = vsel %vm1324, %v1356, %v1292
  %v1389 = vsel %vm1325, %v1357, %v1293
  %v1390 = vsel %vm1326, %v1358, %v1294
  %v1391 = vsel %vm1327, %v1359, %v1295
  %v1392 = vsel %vm1328, %v1360, %v1296
  %v1393 = vsel %vm1329, %v1361, %v1297
  %v1394 = vsel %vm1330, %v1362, %v1298
  %v1395 = vsel %vm1331, %v1363, %v1299
  %v1396 = vsel %vm1332, %v1364, %v1300
  %v1397 = vsel %vm1333, %v1365, %v1301
  %v1398 = vsel %vm1334, %v1366, %v1302
  %v1399 = vsel %vm1335, %v1367, %v1303
  %v1400 = vsel %vm1336, %v1368, %v1304
  %v1401 = vsel %vm1337, %v1369, %v1305
  %v1402 = vsel %vm1338, %v1370, %v1306
  %v1403 = vsel %vm1339, %v1371, %v1307
  %v1404 = vsel %vm1340, %v1372, %v1308
  %v1405 = vsel %vm1341, %v1373, %v1309
  %v1406 = vsel %vm1342, %v1374, %v1310
  %v1407 = vsel %vm1343, %v1375, %v1311
  %v1408 = vsel %vm1344, %v1376, %v1312
  %v1409 = vsel %vm1345, %v1377, %v1313
  %v1410 = vsel %vm1346, %v1378, %v1314
  %v1411 = vsel %vm1347, %v1379, %v1315
  %v1412 = vsel %vm1348, %v1380, %v1316
  %v1413 = vsel %vm1349, %v1381, %v1317
  %v1414 = vsel %vm1350, %v1382, %v1318
  %v1415 = vsel %vm1351, %v1383, %v1319
  %v1416 = vsel %vm1352, %v1384, %v1320
  %v1417 = vmul.f32 %v154, 0.5
  %v1418 = vmul.f32 %v156, 0.5
  %v1419 = vmul.f32 %v159, 0.5
  %v1420 = vmul.f32 %v161, 0.5
  %v1421 = vmul.f32 %v164, 0.5
  %v1422 = vmul.f32 %v166, 0.5
  %v1423 = vmul.f32 %v169, 0.5
  %v1424 = vmul.f32 %v171, 0.5
  %v1425 = vmul.f32 %v174, 0.5
  %v1426 = vmul.f32 %v176, 0.5
  %v1427 = vmul.f32 %v179, 0.5
  %v1428 = vmul.f32 %v181, 0.5
  %v1429 = vmul.f32 %v184, 0.5
  %v1430 = vmul.f32 %v186, 0.5
  %v1431 = vmul.f32 %v189, 0.5
  %v1432 = vmul.f32 %v191, 0.5
  %v1433 = vmul.f32 %v194, 0.5
  %v1434 = vmul.f32 %v196, 0.5
  %v1435 = vmul.f32 %v199, 0.5
  %v1436 = vmul.f32 %v201, 0.5
  %v1437 = vmul.f32 %v204, 0.5
  %v1438 = vmul.f32 %v206, 0.5
  %v1439 = vmul.f32 %v209, 0.5
  %v1440 = vmul.f32 %v211, 0.5
  %v1441 = vmul.f32 %v214, 0.5
  %v1442 = vmul.f32 %v216, 0.5
  %v1443 = vmul.f32 %v219, 0.5
  %v1444 = vmul.f32 %v221, 0.5
  %v1445 = vmul.f32 %v224, 0.5
  %v1446 = vmul.f32 %v226, 0.5
  %v1447 = vmul.f32 %v229, 0.5
  %v1448 = vmul.f32 %v231, 0.5
  %v1449 = vadd.f32 %v1385, 1.0
  %v1450 = vadd.f32 %v1386, 1.0
  %v1451 = vadd.f32 %v1387, 1.0
  %v1452 = vadd.f32 %v1388, 1.0
  %v1453 = vadd.f32 %v1389, 1.0
  %v1454 = vadd.f32 %v1390, 1.0
  %v1455 = vadd.f32 %v1391, 1.0
  %v1456 = vadd.f32 %v1392, 1.0
  %v1457 = vadd.f32 %v1393, 1.0
  %v1458 = vadd.f32 %v1394, 1.0
  %v1459 = vadd.f32 %v1395, 1.0
  %v1460 = vadd.f32 %v1396, 1.0
  %v1461 = vadd.f32 %v1397, 1.0
  %v1462 = vadd.f32 %v1398, 1.0
  %v1463 = vadd.f32 %v1399, 1.0
  %v1464 = vadd.f32 %v1400, 1.0
  %v1465 = vadd.f32 %v1401, 1.0
  %v1466 = vadd.f32 %v1402, 1.0
  %v1467 = vadd.f32 %v1403, 1.0
  %v1468 = vadd.f32 %v1404, 1.0
  %v1469 = vadd.f32 %v1405, 1.0
  %v1470 = vadd.f32 %v1406, 1.0
  %v1471 = vadd.f32 %v1407, 1.0
  %v1472 = vadd.f32 %v1408, 1.0
  %v1473 = vadd.f32 %v1409, 1.0
  %v1474 = vadd.f32 %v1410, 1.0
  %v1475 = vadd.f32 %v1411, 1.0
  %v1476 = vadd.f32 %v1412, 1.0
  %v1477 = vadd.f32 %v1413, 1.0
  %v1478 = vadd.f32 %v1414, 1.0
  %v1479 = vadd.f32 %v1415, 1.0
  %v1480 = vadd.f32 %v1416, 1.0
  %v1481 = vmul.f32 %v1417, %v1449
  %v1482 = vmul.f32 %v1418, %v1450
  %v1483 = vmul.f32 %v1419, %v1451
  %v1484 = vmul.f32 %v1420, %v1452
  %v1485 = vmul.f32 %v1421, %v1453
  %v1486 = vmul.f32 %v1422, %v1454
  %v1487 = vmul.f32 %v1423, %v1455
  %v1488 = vmul.f32 %v1424, %v1456
  %v1489 = vmul.f32 %v1425, %v1457
  %v1490 = vmul.f32 %v1426, %v1458
  %v1491 = vmul.f32 %v1427, %v1459
  %v1492 = vmul.f32 %v1428, %v1460
  %v1493 = vmul.f32 %v1429, %v1461
  %v1494 = vmul.f32 %v1430, %v1462
  %v1495 = vmul.f32 %v1431, %v1463
  %v1496 = vmul.f32 %v1432, %v1464
  %v1497 = vmul.f32 %v1433, %v1465
  %v1498 = vmul.f32 %v1434, %v1466
  %v1499 = vmul.f32 %v1435, %v1467
  %v1500 = vmul.f32 %v1436, %v1468
  %v1501 = vmul.f32 %v1437, %v1469
  %v1502 = vmul.f32 %v1438, %v1470
  %v1503 = vmul.f32 %v1439, %v1471
  %v1504 = vmul.f32 %v1440, %v1472
  %v1505 = vmul.f32 %v1441, %v1473
  %v1506 = vmul.f32 %v1442, %v1474
  %v1507 = vmul.f32 %v1443, %v1475
  %v1508 = vmul.f32 %v1444, %v1476
  %v1509 = vmul.f32 %v1445, %v1477
  %v1510 = vmul.f32 %v1446, %v1478
  %v1511 = vmul.f32 %v1447, %v1479
  %v1512 = vmul.f32 %v1448, %v1480
  %v1513 = vlaneseq
  %v1514 = vshrl.u32 %v1513, 7
  %v1515 = vadd.s32 %v1514, 8
  %v1516 = vadd.s32 %v1514, 16
  %v1517 = vadd.s32 %v1514, 24
  %v1518 = vadd.s32 %v1514, 32
  %v1519 = vadd.s32 %v1514, 40
  %v1520 = vadd.s32 %v1514, 48
  %v1521 = vadd.s32 %v1514, 56
  %v1522 = vadd.s32 %v1514, 64
  %v1523 = vadd.s32 %v1514, 72
  %v1524 = vadd.s32 %v1514, 80
  %v1525 = vadd.s32 %v1514, 88
  %v1526 = vadd.s32 %v1514, 96
  %v1527 = vadd.s32 %v1514, 104
  %v1528 = vadd.s32 %v1514, 112
  %v1529 = vadd.s32 %v1514, 120
  %v1530 = vadd.s32 %v1514, 128
  %v1531 = vadd.s32 %v1514, 136
  %v1532 = vadd.s32 %v1514, 144
  %v1533 = vadd.s32 %v1514, 152
  %v1534 = vadd.s32 %v1514, 160
  %v1535 = vadd.s32 %v1514, 168
  %v1536 = vadd.s32 %v1514, 176
  %v1537 = vadd.s32 %v1514, 184
  %v1538 = vadd.s32 %v1514, 192
  %v1539 = vadd.s32 %v1514, 200
  %v1540 = vadd.s32 %v1514, 208
  %v1541 = vadd.s32 %v1514, 216
  %v1542 = vadd.s32 %v1514, 224
  %v1543 = vadd.s32 %v1514, 232
  %v1544 = vadd.s32 %v1514, 240
  %v1545 = vadd.s32 %v1514, 248
  %v1546 = vand.u32 %v1514, 15
  %v1547 = vand.u32 %v1515, 15
  %v1548 = vand.u32 %v1516, 15
  %v1549 = vand.u32 %v1517, 15
  %v1550 = vand.u32 %v1518, 15
  %v1551 = vand.u32 %v1519, 15
  %v1552 = vand.u32 %v1520, 15
  %v1553 = vand.u32 %v1521, 15
  %v1554 = vand.u32 %v1522, 15
  %v1555 = vand.u32 %v1523, 15
  %v1556 = vand.u32 %v1524, 15
  %v1557 = vand.u32 %v1525, 15
  %v1558 = vand.u32 %v1526, 15
  %v1559 = vand.u32 %v1527, 15
  %v1560 = vand.u32 %v1528, 15
  %v1561 = vand.u32 %v1529, 15
  %v1562 = vand.u32 %v1530, 15
  %v1563 = vand.u32 %v1531, 15
  %v1564 = vand.u32 %v1532, 15
  %v1565 = vand.u32 %v1533, 15
  %v1566 = vand.u32 %v1534, 15
  %v1567 = vand.u32 %v1535, 15
  %v1568 = vand.u32 %v1536, 15
  %v1569 = vand.u32 %v1537, 15
  %v1570 = vand.u32 %v1538, 15
  %v1571 = vand.u32 %v1539, 15
  %v1572 = vand.u32 %v1540, 15
  %v1573 = vand.u32 %v1541, 15
  %v1574 = vand.u32 %v1542, 15
  %v1575 = vand.u32 %v1543, 15
  %v1576 = vand.u32 %v1544, 15
  %v1577 = vand.u32 %v1545, 15
  %v1578 = vand.u32 %v1514, 127
  %v1579 = vand.u32 %v1515, 127
  %v1580 = vand.u32 %v1516, 127
  %v1581 = vand.u32 %v1517, 127
  %v1582 = vand.u32 %v1518, 127
  %v1583 = vand.u32 %v1519, 127
  %v1584 = vand.u32 %v1520, 127
  %v1585 = vand.u32 %v1521, 127
  %v1586 = vand.u32 %v1522, 127
  %v1587 = vand.u32 %v1523, 127
  %v1588 = vand.u32 %v1524, 127
  %v1589 = vand.u32 %v1525, 127
  %v1590 = vand.u32 %v1526, 127
  %v1591 = vand.u32 %v1527, 127
  %v1592 = vand.u32 %v1528, 127
  %v1593 = vand.u32 %v1529, 127
  %v1594 = vand.u32 %v1530, 127
  %v1595 = vand.u32 %v1531, 127
  %v1596 = vand.u32 %v1532, 127
  %v1597 = vand.u32 %v1533, 127
  %v1598 = vand.u32 %v1534, 127
  %v1599 = vand.u32 %v1535, 127
  %v1600 = vand.u32 %v1536, 127
  %v1601 = vand.u32 %v1537, 127
  %v1602 = vand.u32 %v1538, 127
  %v1603 = vand.u32 %v1539, 127
  %v1604 = vand.u32 %v1540, 127
  %v1605 = vand.u32 %v1541, 127
  %v1606 = vand.u32 %v1542, 127
  %v1607 = vand.u32 %v1543, 127
  %v1608 = vand.u32 %v1544, 127
  %v1609 = vand.u32 %v1545, 127
  %vm1610 = vcmp.eq.s32.totalorder %v1546, 0
  %vm1611 = vcmp.eq.s32.totalorder %v1547, 0
  %vm1612 = vcmp.eq.s32.totalorder %v1548, 0
  %vm1613 = vcmp.eq.s32.totalorder %v1549, 0
  %vm1614 = vcmp.eq.s32.totalorder %v1550, 0
  %vm1615 = vcmp.eq.s32.totalorder %v1551, 0
  %vm1616 = vcmp.eq.s32.totalorder %v1552, 0
  %vm1617 = vcmp.eq.s32.totalorder %v1553, 0
  %vm1618 = vcmp.eq.s32.totalorder %v1554, 0
  %vm1619 = vcmp.eq.s32.totalorder %v1555, 0
  %vm1620 = vcmp.eq.s32.totalorder %v1556, 0
  %vm1621 = vcmp.eq.s32.totalorder %v1557, 0
  %vm1622 = vcmp.eq.s32.totalorder %v1558, 0
  %vm1623 = vcmp.eq.s32.totalorder %v1559, 0
  %vm1624 = vcmp.eq.s32.totalorder %v1560, 0
  %vm1625 = vcmp.eq.s32.totalorder %v1561, 0
  %vm1626 = vcmp.eq.s32.totalorder %v1562, 0
  %vm1627 = vcmp.eq.s32.totalorder %v1563, 0
  %vm1628 = vcmp.eq.s32.totalorder %v1564, 0
  %vm1629 = vcmp.eq.s32.totalorder %v1565, 0
  %vm1630 = vcmp.eq.s32.totalorder %v1566, 0
  %vm1631 = vcmp.eq.s32.totalorder %v1567, 0
  %vm1632 = vcmp.eq.s32.totalorder %v1568, 0
  %vm1633 = vcmp.eq.s32.totalorder %v1569, 0
  %vm1634 = vcmp.eq.s32.totalorder %v1570, 0
  %vm1635 = vcmp.eq.s32.totalorder %v1571, 0
  %vm1636 = vcmp.eq.s32.totalorder %v1572, 0
  %vm1637 = vcmp.eq.s32.totalorder %v1573, 0
  %vm1638 = vcmp.eq.s32.totalorder %v1574, 0
  %vm1639 = vcmp.eq.s32.totalorder %v1575, 0
  %vm1640 = vcmp.eq.s32.totalorder %v1576, 0
  %vm1641 = vcmp.eq.s32.totalorder %v1577, 0
  %v1642 = vrot.slane %v1481, 7
  %v1643 = vrot.slane %v1482, 7
  %v1644 = vrot.slane %v1483, 7
  %v1645 = vrot.slane %v1484, 7
  %v1646 = vrot.slane %v1485, 7
  %v1647 = vrot.slane %v1486, 7
  %v1648 = vrot.slane %v1487, 7
  %v1649 = vrot.slane %v1488, 7
  %v1650 = vrot.slane %v1489, 7
  %v1651 = vrot.slane %v1490, 7
  %v1652 = vrot.slane %v1491, 7
  %v1653 = vrot.slane %v1492, 7
  %v1654 = vrot.slane %v1493, 7
  %v1655 = vrot.slane %v1494, 7
  %v1656 = vrot.slane %v1495, 7
  %v1657 = vrot.slane %v1496, 7
  %v1658 = vrot.slane %v1497, 7
  %v1659 = vrot.slane %v1498, 7
  %v1660 = vrot.slane %v1499, 7
  %v1661 = vrot.slane %v1500, 7
  %v1662 = vrot.slane %v1501, 7
  %v1663 = vrot.slane %v1502, 7
  %v1664 = vrot.slane %v1503, 7
  %v1665 = vrot.slane %v1504, 7
  %v1666 = vrot.slane %v1505, 7
  %v1667 = vrot.slane %v1506, 7
  %v1668 = vrot.slane %v1507, 7
  %v1669 = vrot.slane %v1508, 7
  %v1670 = vrot.slane %v1509, 7
  %v1671 = vrot.slane %v1510, 7
  %v1672 = vrot.slane %v1511, 7
  %v1673 = vrot.slane %v1512, 7
  %vm1674 = vcmp.lt.s32.totalorder %v1514, 1
  %v1675 = vsel %vm1674, %v1672, %v1673
  %v1676 = vsel %vm1674, %v1671, %v1672
  %v1677 = vsel %vm1674, %v1670, %v1671
  %v1678 = vsel %vm1674, %v1669, %v1670
  %v1679 = vsel %vm1674, %v1668, %v1669
  %v1680 = vsel %vm1674, %v1667, %v1668
  %v1681 = vsel %vm1674, %v1666, %v1667
  %v1682 = vsel %vm1674, %v1665, %v1666
  %v1683 = vsel %vm1674, %v1664, %v1665
  %v1684 = vsel %vm1674, %v1663, %v1664
  %v1685 = vsel %vm1674, %v1662, %v1663
  %v1686 = vsel %vm1674, %v1661, %v1662
  %v1687 = vsel %vm1674, %v1660, %v1661
  %v1688 = vsel %vm1674, %v1659, %v1660
  %v1689 = vsel %vm1674, %v1658, %v1659
  %v1690 = vsel %vm1674, %v1657, %v1658
  %v1691 = vsel %vm1674, %v1656, %v1657
  %v1692 = vsel %vm1674, %v1655, %v1656
  %v1693 = vsel %vm1674, %v1654, %v1655
  %v1694 = vsel %vm1674, %v1653, %v1654
  %v1695 = vsel %vm1674, %v1652, %v1653
  %v1696 = vsel %vm1674, %v1651, %v1652
  %v1697 = vsel %vm1674, %v1650, %v1651
  %v1698 = vsel %vm1674, %v1649, %v1650
  %v1699 = vsel %vm1674, %v1648, %v1649
  %v1700 = vsel %vm1674, %v1647, %v1648
  %v1701 = vsel %vm1674, %v1646, %v1647
  %v1702 = vsel %vm1674, %v1645, %v1646
  %v1703 = vsel %vm1674, %v1644, %v1645
  %v1704 = vsel %vm1674, %v1643, %v1644
  %v1705 = vsel %vm1674, %v1642, %v1643
  %v1706 = vsel %vm1674, %v1673, %v1642
  %v1707 = vsel %vm1610, %v1704, %v1706
  %v1708 = vsel %vm1611, %v1703, %v1705
  %v1709 = vsel %vm1612, %v1702, %v1704
  %v1710 = vsel %vm1613, %v1701, %v1703
  %v1711 = vsel %vm1614, %v1700, %v1702
  %v1712 = vsel %vm1615, %v1699, %v1701
  %v1713 = vsel %vm1616, %v1698, %v1700
  %v1714 = vsel %vm1617, %v1697, %v1699
  %v1715 = vsel %vm1618, %v1696, %v1698
  %v1716 = vsel %vm1619, %v1695, %v1697
  %v1717 = vsel %vm1620, %v1694, %v1696
  %v1718 = vsel %vm1621, %v1693, %v1695
  %v1719 = vsel %vm1622, %v1692, %v1694
  %v1720 = vsel %vm1623, %v1691, %v1693
  %v1721 = vsel %vm1624, %v1690, %v1692
  %v1722 = vsel %vm1625, %v1689, %v1691
  %v1723 = vsel %vm1626, %v1688, %v1690
  %v1724 = vsel %vm1627, %v1687, %v1689
  %v1725 = vsel %vm1628, %v1686, %v1688
  %v1726 = vsel %vm1629, %v1685, %v1687
  %v1727 = vsel %vm1630, %v1684, %v1686
  %v1728 = vsel %vm1631, %v1683, %v1685
  %v1729 = vsel %vm1632, %v1682, %v1684
  %v1730 = vsel %vm1633, %v1681, %v1683
  %v1731 = vsel %vm1634, %v1680, %v1682
  %v1732 = vsel %vm1635, %v1679, %v1681
  %v1733 = vsel %vm1636, %v1678, %v1680
  %v1734 = vsel %vm1637, %v1677, %v1679
  %v1735 = vsel %vm1638, %v1676, %v1678
  %v1736 = vsel %vm1639, %v1675, %v1677
  %v1737 = vsel %vm1640, %v1706, %v1676
  %v1738 = vsel %vm1641, %v1705, %v1675
  %vm1739 = vcmp.eq.s32.totalorder %v1546, 15
  %vm1740 = vcmp.eq.s32.totalorder %v1547, 15
  %vm1741 = vcmp.eq.s32.totalorder %v1548, 15
  %vm1742 = vcmp.eq.s32.totalorder %v1549, 15
  %vm1743 = vcmp.eq.s32.totalorder %v1550, 15
  %vm1744 = vcmp.eq.s32.totalorder %v1551, 15
  %vm1745 = vcmp.eq.s32.totalorder %v1552, 15
  %vm1746 = vcmp.eq.s32.totalorder %v1553, 15
  %vm1747 = vcmp.eq.s32.totalorder %v1554, 15
  %vm1748 = vcmp.eq.s32.totalorder %v1555, 15
  %vm1749 = vcmp.eq.s32.totalorder %v1556, 15
  %vm1750 = vcmp.eq.s32.totalorder %v1557, 15
  %vm1751 = vcmp.eq.s32.totalorder %v1558, 15
  %vm1752 = vcmp.eq.s32.totalorder %v1559, 15
  %vm1753 = vcmp.eq.s32.totalorder %v1560, 15
  %vm1754 = vcmp.eq.s32.totalorder %v1561, 15
  %vm1755 = vcmp.eq.s32.totalorder %v1562, 15
  %vm1756 = vcmp.eq.s32.totalorder %v1563, 15
  %vm1757 = vcmp.eq.s32.totalorder %v1564, 15
  %vm1758 = vcmp.eq.s32.totalorder %v1565, 15
  %vm1759 = vcmp.eq.s32.totalorder %v1566, 15
  %vm1760 = vcmp.eq.s32.totalorder %v1567, 15
  %vm1761 = vcmp.eq.s32.totalorder %v1568, 15
  %vm1762 = vcmp.eq.s32.totalorder %v1569, 15
  %vm1763 = vcmp.eq.s32.totalorder %v1570, 15
  %vm1764 = vcmp.eq.s32.totalorder %v1571, 15
  %vm1765 = vcmp.eq.s32.totalorder %v1572, 15
  %vm1766 = vcmp.eq.s32.totalorder %v1573, 15
  %vm1767 = vcmp.eq.s32.totalorder %v1574, 15
  %vm1768 = vcmp.eq.s32.totalorder %v1575, 15
  %vm1769 = vcmp.eq.s32.totalorder %v1576, 15
  %vm1770 = vcmp.eq.s32.totalorder %v1577, 15
  %v1771 = vrot.slane %v1481, 1
  %v1772 = vrot.slane %v1482, 1
  %v1773 = vrot.slane %v1483, 1
  %v1774 = vrot.slane %v1484, 1
  %v1775 = vrot.slane %v1485, 1
  %v1776 = vrot.slane %v1486, 1
  %v1777 = vrot.slane %v1487, 1
  %v1778 = vrot.slane %v1488, 1
  %v1779 = vrot.slane %v1489, 1
  %v1780 = vrot.slane %v1490, 1
  %v1781 = vrot.slane %v1491, 1
  %v1782 = vrot.slane %v1492, 1
  %v1783 = vrot.slane %v1493, 1
  %v1784 = vrot.slane %v1494, 1
  %v1785 = vrot.slane %v1495, 1
  %v1786 = vrot.slane %v1496, 1
  %v1787 = vrot.slane %v1497, 1
  %v1788 = vrot.slane %v1498, 1
  %v1789 = vrot.slane %v1499, 1
  %v1790 = vrot.slane %v1500, 1
  %v1791 = vrot.slane %v1501, 1
  %v1792 = vrot.slane %v1502, 1
  %v1793 = vrot.slane %v1503, 1
  %v1794 = vrot.slane %v1504, 1
  %v1795 = vrot.slane %v1505, 1
  %v1796 = vrot.slane %v1506, 1
  %v1797 = vrot.slane %v1507, 1
  %v1798 = vrot.slane %v1508, 1
  %v1799 = vrot.slane %v1509, 1
  %v1800 = vrot.slane %v1510, 1
  %v1801 = vrot.slane %v1511, 1
  %v1802 = vrot.slane %v1512, 1
  %vm1803 = vcmp.lt.s32.totalorder %v1514, 7
  %v1804 = vsel %vm1803, %v1801, %v1802
  %v1805 = vsel %vm1803, %v1800, %v1801
  %v1806 = vsel %vm1803, %v1799, %v1800
  %v1807 = vsel %vm1803, %v1798, %v1799
  %v1808 = vsel %vm1803, %v1797, %v1798
  %v1809 = vsel %vm1803, %v1796, %v1797
  %v1810 = vsel %vm1803, %v1795, %v1796
  %v1811 = vsel %vm1803, %v1794, %v1795
  %v1812 = vsel %vm1803, %v1793, %v1794
  %v1813 = vsel %vm1803, %v1792, %v1793
  %v1814 = vsel %vm1803, %v1791, %v1792
  %v1815 = vsel %vm1803, %v1790, %v1791
  %v1816 = vsel %vm1803, %v1789, %v1790
  %v1817 = vsel %vm1803, %v1788, %v1789
  %v1818 = vsel %vm1803, %v1787, %v1788
  %v1819 = vsel %vm1803, %v1786, %v1787
  %v1820 = vsel %vm1803, %v1785, %v1786
  %v1821 = vsel %vm1803, %v1784, %v1785
  %v1822 = vsel %vm1803, %v1783, %v1784
  %v1823 = vsel %vm1803, %v1782, %v1783
  %v1824 = vsel %vm1803, %v1781, %v1782
  %v1825 = vsel %vm1803, %v1780, %v1781
  %v1826 = vsel %vm1803, %v1779, %v1780
  %v1827 = vsel %vm1803, %v1778, %v1779
  %v1828 = vsel %vm1803, %v1777, %v1778
  %v1829 = vsel %vm1803, %v1776, %v1777
  %v1830 = vsel %vm1803, %v1775, %v1776
  %v1831 = vsel %vm1803, %v1774, %v1775
  %v1832 = vsel %vm1803, %v1773, %v1774
  %v1833 = vsel %vm1803, %v1772, %v1773
  %v1834 = vsel %vm1803, %v1771, %v1772
  %v1835 = vsel %vm1803, %v1802, %v1771
  %v1836 = vsel %vm1739, %v1804, %v1834
  %v1837 = vsel %vm1740, %v1835, %v1833
  %v1838 = vsel %vm1741, %v1834, %v1832
  %v1839 = vsel %vm1742, %v1833, %v1831
  %v1840 = vsel %vm1743, %v1832, %v1830
  %v1841 = vsel %vm1744, %v1831, %v1829
  %v1842 = vsel %vm1745, %v1830, %v1828
  %v1843 = vsel %vm1746, %v1829, %v1827
  %v1844 = vsel %vm1747, %v1828, %v1826
  %v1845 = vsel %vm1748, %v1827, %v1825
  %v1846 = vsel %vm1749, %v1826, %v1824
  %v1847 = vsel %vm1750, %v1825, %v1823
  %v1848 = vsel %vm1751, %v1824, %v1822
  %v1849 = vsel %vm1752, %v1823, %v1821
  %v1850 = vsel %vm1753, %v1822, %v1820
  %v1851 = vsel %vm1754, %v1821, %v1819
  %v1852 = vsel %vm1755, %v1820, %v1818
  %v1853 = vsel %vm1756, %v1819, %v1817
  %v1854 = vsel %vm1757, %v1818, %v1816
  %v1855 = vsel %vm1758, %v1817, %v1815
  %v1856 = vsel %vm1759, %v1816, %v1814
  %v1857 = vsel %vm1760, %v1815, %v1813
  %v1858 = vsel %vm1761, %v1814, %v1812
  %v1859 = vsel %vm1762, %v1813, %v1811
  %v1860 = vsel %vm1763, %v1812, %v1810
  %v1861 = vsel %vm1764, %v1811, %v1809
  %v1862 = vsel %vm1765, %v1810, %v1808
  %v1863 = vsel %vm1766, %v1809, %v1807
  %v1864 = vsel %vm1767, %v1808, %v1806
  %v1865 = vsel %vm1768, %v1807, %v1805
  %v1866 = vsel %vm1769, %v1806, %v1804
  %v1867 = vsel %vm1770, %v1805, %v1835
  %v1868 = vld [vmem:[%s3 + $0x3] sm:$0x1]
  %v1869 = vperm.slane %v1868, 0
  %v1870 = vmul.f32 %v1707, %v1869
  %v1871 = vmul.f32 %v1708, %v1869
  %v1872 = vmul.f32 %v1709, %v1869
  %v1873 = vmul.f32 %v1710, %v1869
  %v1874 = vmul.f32 %v1711, %v1869
  %v1875 = vmul.f32 %v1712, %v1869
  %v1876 = vmul.f32 %v1713, %v1869
  %v1877 = vmul.f32 %v1714, %v1869
  %v1878 = vmul.f32 %v1715, %v1869
  %v1879 = vmul.f32 %v1716, %v1869
  %v1880 = vmul.f32 %v1717, %v1869
  %v1881 = vmul.f32 %v1718, %v1869
  %v1882 = vmul.f32 %v1719, %v1869
  %v1883 = vmul.f32 %v1720, %v1869
  %v1884 = vmul.f32 %v1721, %v1869
  %v1885 = vmul.f32 %v1722, %v1869
  %v1886 = vmul.f32 %v1723, %v1869
  %v1887 = vmul.f32 %v1724, %v1869
  %v1888 = vmul.f32 %v1725, %v1869
  %v1889 = vmul.f32 %v1726, %v1869
  %v1890 = vmul.f32 %v1727, %v1869
  %v1891 = vmul.f32 %v1728, %v1869
  %v1892 = vmul.f32 %v1729, %v1869
  %v1893 = vmul.f32 %v1730, %v1869
  %v1894 = vmul.f32 %v1731, %v1869
  %v1895 = vmul.f32 %v1732, %v1869
  %v1896 = vmul.f32 %v1733, %v1869
  %v1897 = vmul.f32 %v1734, %v1869
  %v1898 = vmul.f32 %v1735, %v1869
  %v1899 = vmul.f32 %v1736, %v1869
  %v1900 = vmul.f32 %v1737, %v1869
  %v1901 = vmul.f32 %v1738, %v1869
  %v1902 = vld [vmem:[%s3 + $0x4] sm:$0x1]
  %v1903 = vperm.slane %v1902, 0
  %v1904 = vmul.f32 %v1481, %v1903
  %v1905 = vmul.f32 %v1482, %v1903
  %v1906 = vmul.f32 %v1483, %v1903
  %v1907 = vmul.f32 %v1484, %v1903
  %v1908 = vmul.f32 %v1485, %v1903
  %v1909 = vmul.f32 %v1486, %v1903
  %v1910 = vmul.f32 %v1487, %v1903
  %v1911 = vmul.f32 %v1488, %v1903
  %v1912 = vmul.f32 %v1489, %v1903
  %v1913 = vmul.f32 %v1490, %v1903
  %v1914 = vmul.f32 %v1491, %v1903
  %v1915 = vmul.f32 %v1492, %v1903
  %v1916 = vmul.f32 %v1493, %v1903
  %v1917 = vmul.f32 %v1494, %v1903
  %v1918 = vmul.f32 %v1495, %v1903
  %v1919 = vmul.f32 %v1496, %v1903
  %v1920 = vmul.f32 %v1497, %v1903
  %v1921 = vmul.f32 %v1498, %v1903
  %v1922 = vmul.f32 %v1499, %v1903
  %v1923 = vmul.f32 %v1500, %v1903
  %v1924 = vmul.f32 %v1501, %v1903
  %v1925 = vmul.f32 %v1502, %v1903
  %v1926 = vmul.f32 %v1503, %v1903
  %v1927 = vmul.f32 %v1504, %v1903
  %v1928 = vmul.f32 %v1505, %v1903
  %v1929 = vmul.f32 %v1506, %v1903
  %v1930 = vmul.f32 %v1507, %v1903
  %v1931 = vmul.f32 %v1508, %v1903
  %v1932 = vmul.f32 %v1509, %v1903
  %v1933 = vmul.f32 %v1510, %v1903
  %v1934 = vmul.f32 %v1511, %v1903
  %v1935 = vmul.f32 %v1512, %v1903
  %v1936 = vadd.f32 %v1870, %v1904
  %v1937 = vadd.f32 %v1871, %v1905
  %v1938 = vadd.f32 %v1872, %v1906
  %v1939 = vadd.f32 %v1873, %v1907
  %v1940 = vadd.f32 %v1874, %v1908
  %v1941 = vadd.f32 %v1875, %v1909
  %v1942 = vadd.f32 %v1876, %v1910
  %v1943 = vadd.f32 %v1877, %v1911
  %v1944 = vadd.f32 %v1878, %v1912
  %v1945 = vadd.f32 %v1879, %v1913
  %v1946 = vadd.f32 %v1880, %v1914
  %v1947 = vadd.f32 %v1881, %v1915
  %v1948 = vadd.f32 %v1882, %v1916
  %v1949 = vadd.f32 %v1883, %v1917
  %v1950 = vadd.f32 %v1884, %v1918
  %v1951 = vadd.f32 %v1885, %v1919
  %v1952 = vadd.f32 %v1886, %v1920
  %v1953 = vadd.f32 %v1887, %v1921
  %v1954 = vadd.f32 %v1888, %v1922
  %v1955 = vadd.f32 %v1889, %v1923
  %v1956 = vadd.f32 %v1890, %v1924
  %v1957 = vadd.f32 %v1891, %v1925
  %v1958 = vadd.f32 %v1892, %v1926
  %v1959 = vadd.f32 %v1893, %v1927
  %v1960 = vadd.f32 %v1894, %v1928
  %v1961 = vadd.f32 %v1895, %v1929
  %v1962 = vadd.f32 %v1896, %v1930
  %v1963 = vadd.f32 %v1897, %v1931
  %v1964 = vadd.f32 %v1898, %v1932
  %v1965 = vadd.f32 %v1899, %v1933
  %v1966 = vadd.f32 %v1900, %v1934
  %v1967 = vadd.f32 %v1901, %v1935
  %v1968 = vld [vmem:[%s3 + $0x5] sm:$0x1]
  %v1969 = vperm.slane %v1968, 0
  %v1970 = vmul.f32 %v1836, %v1969
  %v1971 = vmul.f32 %v1837, %v1969
  %v1972 = vmul.f32 %v1838, %v1969
  %v1973 = vmul.f32 %v1839, %v1969
  %v1974 = vmul.f32 %v1840, %v1969
  %v1975 = vmul.f32 %v1841, %v1969
  %v1976 = vmul.f32 %v1842, %v1969
  %v1977 = vmul.f32 %v1843, %v1969
  %v1978 = vmul.f32 %v1844, %v1969
  %v1979 = vmul.f32 %v1845, %v1969
  %v1980 = vmul.f32 %v1846, %v1969
  %v1981 = vmul.f32 %v1847, %v1969
  %v1982 = vmul.f32 %v1848, %v1969
  %v1983 = vmul.f32 %v1849, %v1969
  %v1984 = vmul.f32 %v1850, %v1969
  %v1985 = vmul.f32 %v1851, %v1969
  %v1986 = vmul.f32 %v1852, %v1969
  %v1987 = vmul.f32 %v1853, %v1969
  %v1988 = vmul.f32 %v1854, %v1969
  %v1989 = vmul.f32 %v1855, %v1969
  %v1990 = vmul.f32 %v1856, %v1969
  %v1991 = vmul.f32 %v1857, %v1969
  %v1992 = vmul.f32 %v1858, %v1969
  %v1993 = vmul.f32 %v1859, %v1969
  %v1994 = vmul.f32 %v1860, %v1969
  %v1995 = vmul.f32 %v1861, %v1969
  %v1996 = vmul.f32 %v1862, %v1969
  %v1997 = vmul.f32 %v1863, %v1969
  %v1998 = vmul.f32 %v1864, %v1969
  %v1999 = vmul.f32 %v1865, %v1969
  %v2000 = vmul.f32 %v1866, %v1969
  %v2001 = vmul.f32 %v1867, %v1969
  %v2002 = vadd.f32 %v1936, %v1970
  %v2003 = vadd.f32 %v1937, %v1971
  %v2004 = vadd.f32 %v1938, %v1972
  %v2005 = vadd.f32 %v1939, %v1973
  %v2006 = vadd.f32 %v1940, %v1974
  %v2007 = vadd.f32 %v1941, %v1975
  %v2008 = vadd.f32 %v1942, %v1976
  %v2009 = vadd.f32 %v1943, %v1977
  %v2010 = vadd.f32 %v1944, %v1978
  %v2011 = vadd.f32 %v1945, %v1979
  %v2012 = vadd.f32 %v1946, %v1980
  %v2013 = vadd.f32 %v1947, %v1981
  %v2014 = vadd.f32 %v1948, %v1982
  %v2015 = vadd.f32 %v1949, %v1983
  %v2016 = vadd.f32 %v1950, %v1984
  %v2017 = vadd.f32 %v1951, %v1985
  %v2018 = vadd.f32 %v1952, %v1986
  %v2019 = vadd.f32 %v1953, %v1987
  %v2020 = vadd.f32 %v1954, %v1988
  %v2021 = vadd.f32 %v1955, %v1989
  %v2022 = vadd.f32 %v1956, %v1990
  %v2023 = vadd.f32 %v1957, %v1991
  %v2024 = vadd.f32 %v1958, %v1992
  %v2025 = vadd.f32 %v1959, %v1993
  %v2026 = vadd.f32 %v1960, %v1994
  %v2027 = vadd.f32 %v1961, %v1995
  %v2028 = vadd.f32 %v1962, %v1996
  %v2029 = vadd.f32 %v1963, %v1997
  %v2030 = vadd.f32 %v1964, %v1998
  %v2031 = vadd.f32 %v1965, %v1999
  %v2032 = vadd.f32 %v1966, %v2000
  %v2033 = vadd.f32 %v1967, %v2001
  %v2034 = vld [vmem:[%s4] sm:$0x1]
  %v2036 = vperm.slane %v2034, 0
  %v2038 = vadd.f32 %v2002, %v2036
  %v2039 = vadd.f32 %v2003, %v2036
  %v2040 = vadd.f32 %v2004, %v2036
  %v2041 = vadd.f32 %v2005, %v2036
  %v2042 = vadd.f32 %v2006, %v2036
  %v2043 = vadd.f32 %v2007, %v2036
  %v2044 = vadd.f32 %v2008, %v2036
  %v2045 = vadd.f32 %v2009, %v2036
  %v2046 = vadd.f32 %v2010, %v2036
  %v2047 = vadd.f32 %v2011, %v2036
  %v2048 = vadd.f32 %v2012, %v2036
  %v2049 = vadd.f32 %v2013, %v2036
  %v2050 = vadd.f32 %v2014, %v2036
  %v2051 = vadd.f32 %v2015, %v2036
  %v2052 = vadd.f32 %v2016, %v2036
  %v2053 = vadd.f32 %v2017, %v2036
  %v2054 = vadd.f32 %v2018, %v2036
  %v2055 = vadd.f32 %v2019, %v2036
  %v2056 = vadd.f32 %v2020, %v2036
  %v2057 = vadd.f32 %v2021, %v2036
  %v2058 = vadd.f32 %v2022, %v2036
  %v2059 = vadd.f32 %v2023, %v2036
  %v2060 = vadd.f32 %v2024, %v2036
  %v2061 = vadd.f32 %v2025, %v2036
  %v2062 = vadd.f32 %v2026, %v2036
  %v2063 = vadd.f32 %v2027, %v2036
  %v2064 = vadd.f32 %v2028, %v2036
  %v2065 = vadd.f32 %v2029, %v2036
  %v2066 = vadd.f32 %v2030, %v2036
  %v2067 = vadd.f32 %v2031, %v2036
  %v2068 = vadd.f32 %v2032, %v2036
  %v2069 = vadd.f32 %v2033, %v2036
  %vm2070 = vcmp.ge.s32.totalorder %v1578, 16
  %vm2071 = vcmp.ge.s32.totalorder %v1579, 16
  %vm2072 = vcmp.ge.s32.totalorder %v1580, 16
  %vm2073 = vcmp.ge.s32.totalorder %v1581, 16
  %vm2074 = vcmp.ge.s32.totalorder %v1582, 16
  %vm2075 = vcmp.ge.s32.totalorder %v1583, 16
  %vm2076 = vcmp.ge.s32.totalorder %v1584, 16
  %vm2077 = vcmp.ge.s32.totalorder %v1585, 16
  %vm2078 = vcmp.ge.s32.totalorder %v1586, 16
  %vm2079 = vcmp.ge.s32.totalorder %v1587, 16
  %vm2080 = vcmp.ge.s32.totalorder %v1588, 16
  %vm2081 = vcmp.ge.s32.totalorder %v1589, 16
  %vm2082 = vcmp.ge.s32.totalorder %v1590, 16
  %vm2083 = vcmp.ge.s32.totalorder %v1591, 16
  %vm2084 = vcmp.ge.s32.totalorder %v1592, 16
  %vm2085 = vcmp.ge.s32.totalorder %v1593, 16
  %vm2086 = vcmp.ge.s32.totalorder %v1594, 16
  %vm2087 = vcmp.ge.s32.totalorder %v1595, 16
  %vm2088 = vcmp.ge.s32.totalorder %v1596, 16
  %vm2089 = vcmp.ge.s32.totalorder %v1597, 16
  %vm2090 = vcmp.ge.s32.totalorder %v1598, 16
  %vm2091 = vcmp.ge.s32.totalorder %v1599, 16
  %vm2092 = vcmp.ge.s32.totalorder %v1600, 16
  %vm2093 = vcmp.ge.s32.totalorder %v1601, 16
  %vm2094 = vcmp.ge.s32.totalorder %v1602, 16
  %vm2095 = vcmp.ge.s32.totalorder %v1603, 16
  %vm2096 = vcmp.ge.s32.totalorder %v1604, 16
  %vm2097 = vcmp.ge.s32.totalorder %v1605, 16
  %vm2098 = vcmp.ge.s32.totalorder %v1606, 16
  %vm2099 = vcmp.ge.s32.totalorder %v1607, 16
  %vm2100 = vcmp.ge.s32.totalorder %v1608, 16
  %vm2101 = vcmp.ge.s32.totalorder %v1609, 16
  %v2102 = vld [vmem:[%s3] sm:$0x1]
  %v2103 = vperm.slane %v2102, 0
  %v2104 = vmul.f32 %v1707, %v2103
  %v2105 = vmul.f32 %v1708, %v2103
  %v2106 = vmul.f32 %v1709, %v2103
  %v2107 = vmul.f32 %v1710, %v2103
  %v2108 = vmul.f32 %v1711, %v2103
  %v2109 = vmul.f32 %v1712, %v2103
  %v2110 = vmul.f32 %v1713, %v2103
  %v2111 = vmul.f32 %v1714, %v2103
  %v2112 = vmul.f32 %v1715, %v2103
  %v2113 = vmul.f32 %v1716, %v2103
  %v2114 = vmul.f32 %v1717, %v2103
  %v2115 = vmul.f32 %v1718, %v2103
  %v2116 = vmul.f32 %v1719, %v2103
  %v2117 = vmul.f32 %v1720, %v2103
  %v2118 = vmul.f32 %v1721, %v2103
  %v2119 = vmul.f32 %v1722, %v2103
  %v2120 = vmul.f32 %v1723, %v2103
  %v2121 = vmul.f32 %v1724, %v2103
  %v2122 = vmul.f32 %v1725, %v2103
  %v2123 = vmul.f32 %v1726, %v2103
  %v2124 = vmul.f32 %v1727, %v2103
  %v2125 = vmul.f32 %v1728, %v2103
  %v2126 = vmul.f32 %v1729, %v2103
  %v2127 = vmul.f32 %v1730, %v2103
  %v2128 = vmul.f32 %v1731, %v2103
  %v2129 = vmul.f32 %v1732, %v2103
  %v2130 = vmul.f32 %v1733, %v2103
  %v2131 = vmul.f32 %v1734, %v2103
  %v2132 = vmul.f32 %v1735, %v2103
  %v2133 = vmul.f32 %v1736, %v2103
  %v2134 = vmul.f32 %v1737, %v2103
  %v2135 = vmul.f32 %v1738, %v2103
  %v2136 = vld [vmem:[%s3 + $0x1] sm:$0x1]
  %v2137 = vperm.slane %v2136, 0
  %v2138 = vmul.f32 %v1481, %v2137
  %v2139 = vmul.f32 %v1482, %v2137
  %v2140 = vmul.f32 %v1483, %v2137
  %v2141 = vmul.f32 %v1484, %v2137
  %v2142 = vmul.f32 %v1485, %v2137
  %v2143 = vmul.f32 %v1486, %v2137
  %v2144 = vmul.f32 %v1487, %v2137
  %v2145 = vmul.f32 %v1488, %v2137
  %v2146 = vmul.f32 %v1489, %v2137
  %v2147 = vmul.f32 %v1490, %v2137
  %v2148 = vmul.f32 %v1491, %v2137
  %v2149 = vmul.f32 %v1492, %v2137
  %v2150 = vmul.f32 %v1493, %v2137
  %v2151 = vmul.f32 %v1494, %v2137
  %v2152 = vmul.f32 %v1495, %v2137
  %v2153 = vmul.f32 %v1496, %v2137
  %v2154 = vmul.f32 %v1497, %v2137
  %v2155 = vmul.f32 %v1498, %v2137
  %v2156 = vmul.f32 %v1499, %v2137
  %v2157 = vmul.f32 %v1500, %v2137
  %v2158 = vmul.f32 %v1501, %v2137
  %v2159 = vmul.f32 %v1502, %v2137
  %v2160 = vmul.f32 %v1503, %v2137
  %v2161 = vmul.f32 %v1504, %v2137
  %v2162 = vmul.f32 %v1505, %v2137
  %v2163 = vmul.f32 %v1506, %v2137
  %v2164 = vmul.f32 %v1507, %v2137
  %v2165 = vmul.f32 %v1508, %v2137
  %v2166 = vmul.f32 %v1509, %v2137
  %v2167 = vmul.f32 %v1510, %v2137
  %v2168 = vmul.f32 %v1511, %v2137
  %v2169 = vmul.f32 %v1512, %v2137
  %v2170 = vadd.f32 %v2104, %v2138
  %v2171 = vadd.f32 %v2105, %v2139
  %v2172 = vadd.f32 %v2106, %v2140
  %v2173 = vadd.f32 %v2107, %v2141
  %v2174 = vadd.f32 %v2108, %v2142
  %v2175 = vadd.f32 %v2109, %v2143
  %v2176 = vadd.f32 %v2110, %v2144
  %v2177 = vadd.f32 %v2111, %v2145
  %v2178 = vadd.f32 %v2112, %v2146
  %v2179 = vadd.f32 %v2113, %v2147
  %v2180 = vadd.f32 %v2114, %v2148
  %v2181 = vadd.f32 %v2115, %v2149
  %v2182 = vadd.f32 %v2116, %v2150
  %v2183 = vadd.f32 %v2117, %v2151
  %v2184 = vadd.f32 %v2118, %v2152
  %v2185 = vadd.f32 %v2119, %v2153
  %v2186 = vadd.f32 %v2120, %v2154
  %v2187 = vadd.f32 %v2121, %v2155
  %v2188 = vadd.f32 %v2122, %v2156
  %v2189 = vadd.f32 %v2123, %v2157
  %v2190 = vadd.f32 %v2124, %v2158
  %v2191 = vadd.f32 %v2125, %v2159
  %v2192 = vadd.f32 %v2126, %v2160
  %v2193 = vadd.f32 %v2127, %v2161
  %v2194 = vadd.f32 %v2128, %v2162
  %v2195 = vadd.f32 %v2129, %v2163
  %v2196 = vadd.f32 %v2130, %v2164
  %v2197 = vadd.f32 %v2131, %v2165
  %v2198 = vadd.f32 %v2132, %v2166
  %v2199 = vadd.f32 %v2133, %v2167
  %v2200 = vadd.f32 %v2134, %v2168
  %v2201 = vadd.f32 %v2135, %v2169
  %v2202 = vld [vmem:[%s3 + $0x2] sm:$0x1]
  %v2203 = vperm.slane %v2202, 0
  %v2204 = vmul.f32 %v1836, %v2203
  %v2205 = vmul.f32 %v1837, %v2203
  %v2206 = vmul.f32 %v1838, %v2203
  %v2207 = vmul.f32 %v1839, %v2203
  %v2208 = vmul.f32 %v1840, %v2203
  %v2209 = vmul.f32 %v1841, %v2203
  %v2210 = vmul.f32 %v1842, %v2203
  %v2211 = vmul.f32 %v1843, %v2203
  %v2212 = vmul.f32 %v1844, %v2203
  %v2213 = vmul.f32 %v1845, %v2203
  %v2214 = vmul.f32 %v1846, %v2203
  %v2215 = vmul.f32 %v1847, %v2203
  %v2216 = vmul.f32 %v1848, %v2203
  %v2217 = vmul.f32 %v1849, %v2203
  %v2218 = vmul.f32 %v1850, %v2203
  %v2219 = vmul.f32 %v1851, %v2203
  %v2220 = vmul.f32 %v1852, %v2203
  %v2221 = vmul.f32 %v1853, %v2203
  %v2222 = vmul.f32 %v1854, %v2203
  %v2223 = vmul.f32 %v1855, %v2203
  %v2224 = vmul.f32 %v1856, %v2203
  %v2225 = vmul.f32 %v1857, %v2203
  %v2226 = vmul.f32 %v1858, %v2203
  %v2227 = vmul.f32 %v1859, %v2203
  %v2228 = vmul.f32 %v1860, %v2203
  %v2229 = vmul.f32 %v1861, %v2203
  %v2230 = vmul.f32 %v1862, %v2203
  %v2231 = vmul.f32 %v1863, %v2203
  %v2232 = vmul.f32 %v1864, %v2203
  %v2233 = vmul.f32 %v1865, %v2203
  %v2234 = vmul.f32 %v1866, %v2203
  %v2235 = vmul.f32 %v1867, %v2203
  %v2236 = vadd.f32 %v2170, %v2204
  %v2237 = vadd.f32 %v2171, %v2205
  %v2238 = vadd.f32 %v2172, %v2206
  %v2239 = vadd.f32 %v2173, %v2207
  %v2240 = vadd.f32 %v2174, %v2208
  %v2241 = vadd.f32 %v2175, %v2209
  %v2242 = vadd.f32 %v2176, %v2210
  %v2243 = vadd.f32 %v2177, %v2211
  %v2244 = vadd.f32 %v2178, %v2212
  %v2245 = vadd.f32 %v2179, %v2213
  %v2246 = vadd.f32 %v2180, %v2214
  %v2247 = vadd.f32 %v2181, %v2215
  %v2248 = vadd.f32 %v2182, %v2216
  %v2249 = vadd.f32 %v2183, %v2217
  %v2250 = vadd.f32 %v2184, %v2218
  %v2251 = vadd.f32 %v2185, %v2219
  %v2252 = vadd.f32 %v2186, %v2220
  %v2253 = vadd.f32 %v2187, %v2221
  %v2254 = vadd.f32 %v2188, %v2222
  %v2255 = vadd.f32 %v2189, %v2223
  %v2256 = vadd.f32 %v2190, %v2224
  %v2257 = vadd.f32 %v2191, %v2225
  %v2258 = vadd.f32 %v2192, %v2226
  %v2259 = vadd.f32 %v2193, %v2227
  %v2260 = vadd.f32 %v2194, %v2228
  %v2261 = vadd.f32 %v2195, %v2229
  %v2262 = vadd.f32 %v2196, %v2230
  %v2263 = vadd.f32 %v2197, %v2231
  %v2264 = vadd.f32 %v2198, %v2232
  %v2265 = vadd.f32 %v2199, %v2233
  %v2266 = vadd.f32 %v2200, %v2234
  %v2267 = vadd.f32 %v2201, %v2235
  %v2268 = vsel %vm2070, %v2266, 0.0
  %v2269 = vsel %vm2071, %v2267, 0.0
  %v2270 = vsel %vm2072, %v2236, 0.0
  %v2271 = vsel %vm2073, %v2237, 0.0
  %v2272 = vsel %vm2074, %v2238, 0.0
  %v2273 = vsel %vm2075, %v2239, 0.0
  %v2274 = vsel %vm2076, %v2240, 0.0
  %v2275 = vsel %vm2077, %v2241, 0.0
  %v2276 = vsel %vm2078, %v2242, 0.0
  %v2277 = vsel %vm2079, %v2243, 0.0
  %v2278 = vsel %vm2080, %v2244, 0.0
  %v2279 = vsel %vm2081, %v2245, 0.0
  %v2280 = vsel %vm2082, %v2246, 0.0
  %v2281 = vsel %vm2083, %v2247, 0.0
  %v2282 = vsel %vm2084, %v2248, 0.0
  %v2283 = vsel %vm2085, %v2249, 0.0
  %v2284 = vsel %vm2086, %v2250, 0.0
  %v2285 = vsel %vm2087, %v2251, 0.0
  %v2286 = vsel %vm2088, %v2252, 0.0
  %v2287 = vsel %vm2089, %v2253, 0.0
  %v2288 = vsel %vm2090, %v2254, 0.0
  %v2289 = vsel %vm2091, %v2255, 0.0
  %v2290 = vsel %vm2092, %v2256, 0.0
  %v2291 = vsel %vm2093, %v2257, 0.0
  %v2292 = vsel %vm2094, %v2258, 0.0
  %v2293 = vsel %vm2095, %v2259, 0.0
  %v2294 = vsel %vm2096, %v2260, 0.0
  %v2295 = vsel %vm2097, %v2261, 0.0
  %v2296 = vsel %vm2098, %v2262, 0.0
  %v2297 = vsel %vm2099, %v2263, 0.0
  %v2298 = vsel %vm2100, %v2264, 0.0
  %v2299 = vsel %vm2101, %v2265, 0.0
  %v2300 = vadd.f32 %v2038, %v2268
  %v2301 = vadd.f32 %v2039, %v2269
  %v2302 = vadd.f32 %v2040, %v2270
  %v2303 = vadd.f32 %v2041, %v2271
  %v2304 = vadd.f32 %v2042, %v2272
  %v2305 = vadd.f32 %v2043, %v2273
  %v2306 = vadd.f32 %v2044, %v2274
  %v2307 = vadd.f32 %v2045, %v2275
  %v2308 = vadd.f32 %v2046, %v2276
  %v2309 = vadd.f32 %v2047, %v2277
  %v2310 = vadd.f32 %v2048, %v2278
  %v2311 = vadd.f32 %v2049, %v2279
  %v2312 = vadd.f32 %v2050, %v2280
  %v2313 = vadd.f32 %v2051, %v2281
  %v2314 = vadd.f32 %v2052, %v2282
  %v2315 = vadd.f32 %v2053, %v2283
  %v2316 = vadd.f32 %v2054, %v2284
  %v2317 = vadd.f32 %v2055, %v2285
  %v2318 = vadd.f32 %v2056, %v2286
  %v2319 = vadd.f32 %v2057, %v2287
  %v2320 = vadd.f32 %v2058, %v2288
  %v2321 = vadd.f32 %v2059, %v2289
  %v2322 = vadd.f32 %v2060, %v2290
  %v2323 = vadd.f32 %v2061, %v2291
  %v2324 = vadd.f32 %v2062, %v2292
  %v2325 = vadd.f32 %v2063, %v2293
  %v2326 = vadd.f32 %v2064, %v2294
  %v2327 = vadd.f32 %v2065, %v2295
  %v2328 = vadd.f32 %v2066, %v2296
  %v2329 = vadd.f32 %v2067, %v2297
  %v2330 = vadd.f32 %v2068, %v2298
  %v2331 = vadd.f32 %v2069, %v2299
  %vm2332 = vcmp.lt.s32.totalorder %v1578, 112
  %vm2333 = vcmp.lt.s32.totalorder %v1579, 112
  %vm2334 = vcmp.lt.s32.totalorder %v1580, 112
  %vm2335 = vcmp.lt.s32.totalorder %v1581, 112
  %vm2336 = vcmp.lt.s32.totalorder %v1582, 112
  %vm2337 = vcmp.lt.s32.totalorder %v1583, 112
  %vm2338 = vcmp.lt.s32.totalorder %v1584, 112
  %vm2339 = vcmp.lt.s32.totalorder %v1585, 112
  %vm2340 = vcmp.lt.s32.totalorder %v1586, 112
  %vm2341 = vcmp.lt.s32.totalorder %v1587, 112
  %vm2342 = vcmp.lt.s32.totalorder %v1588, 112
  %vm2343 = vcmp.lt.s32.totalorder %v1589, 112
  %vm2344 = vcmp.lt.s32.totalorder %v1590, 112
  %vm2345 = vcmp.lt.s32.totalorder %v1591, 112
  %vm2346 = vcmp.lt.s32.totalorder %v1592, 112
  %vm2347 = vcmp.lt.s32.totalorder %v1593, 112
  %vm2348 = vcmp.lt.s32.totalorder %v1594, 112
  %vm2349 = vcmp.lt.s32.totalorder %v1595, 112
  %vm2350 = vcmp.lt.s32.totalorder %v1596, 112
  %vm2351 = vcmp.lt.s32.totalorder %v1597, 112
  %vm2352 = vcmp.lt.s32.totalorder %v1598, 112
  %vm2353 = vcmp.lt.s32.totalorder %v1599, 112
  %vm2354 = vcmp.lt.s32.totalorder %v1600, 112
  %vm2355 = vcmp.lt.s32.totalorder %v1601, 112
  %vm2356 = vcmp.lt.s32.totalorder %v1602, 112
  %vm2357 = vcmp.lt.s32.totalorder %v1603, 112
  %vm2358 = vcmp.lt.s32.totalorder %v1604, 112
  %vm2359 = vcmp.lt.s32.totalorder %v1605, 112
  %vm2360 = vcmp.lt.s32.totalorder %v1606, 112
  %vm2361 = vcmp.lt.s32.totalorder %v1607, 112
  %vm2362 = vcmp.lt.s32.totalorder %v1608, 112
  %vm2363 = vcmp.lt.s32.totalorder %v1609, 112
  %v2364 = vld [vmem:[%s3 + $0x6] sm:$0x1]
  %v2365 = vperm.slane %v2364, 0
  %v2366 = vmul.f32 %v1707, %v2365
  %v2367 = vmul.f32 %v1708, %v2365
  %v2368 = vmul.f32 %v1709, %v2365
  %v2369 = vmul.f32 %v1710, %v2365
  %v2370 = vmul.f32 %v1711, %v2365
  %v2371 = vmul.f32 %v1712, %v2365
  %v2372 = vmul.f32 %v1713, %v2365
  %v2373 = vmul.f32 %v1714, %v2365
  %v2374 = vmul.f32 %v1715, %v2365
  %v2375 = vmul.f32 %v1716, %v2365
  %v2376 = vmul.f32 %v1717, %v2365
  %v2377 = vmul.f32 %v1718, %v2365
  %v2378 = vmul.f32 %v1719, %v2365
  %v2379 = vmul.f32 %v1720, %v2365
  %v2380 = vmul.f32 %v1721, %v2365
  %v2381 = vmul.f32 %v1722, %v2365
  %v2382 = vmul.f32 %v1723, %v2365
  %v2383 = vmul.f32 %v1724, %v2365
  %v2384 = vmul.f32 %v1725, %v2365
  %v2385 = vmul.f32 %v1726, %v2365
  %v2386 = vmul.f32 %v1727, %v2365
  %v2387 = vmul.f32 %v1728, %v2365
  %v2388 = vmul.f32 %v1729, %v2365
  %v2389 = vmul.f32 %v1730, %v2365
  %v2390 = vmul.f32 %v1731, %v2365
  %v2391 = vmul.f32 %v1732, %v2365
  %v2392 = vmul.f32 %v1733, %v2365
  %v2393 = vmul.f32 %v1734, %v2365
  %v2394 = vmul.f32 %v1735, %v2365
  %v2395 = vmul.f32 %v1736, %v2365
  %v2396 = vmul.f32 %v1737, %v2365
  %v2397 = vmul.f32 %v1738, %v2365
  %v2398 = vld [vmem:[%s3 + $0x7] sm:$0x1]
  %v2399 = vperm.slane %v2398, 0
  %v2400 = vmul.f32 %v1481, %v2399
  %v2401 = vmul.f32 %v1482, %v2399
  %v2402 = vmul.f32 %v1483, %v2399
  %v2403 = vmul.f32 %v1484, %v2399
  %v2404 = vmul.f32 %v1485, %v2399
  %v2405 = vmul.f32 %v1486, %v2399
  %v2406 = vmul.f32 %v1487, %v2399
  %v2407 = vmul.f32 %v1488, %v2399
  %v2408 = vmul.f32 %v1489, %v2399
  %v2409 = vmul.f32 %v1490, %v2399
  %v2410 = vmul.f32 %v1491, %v2399
  %v2411 = vmul.f32 %v1492, %v2399
  %v2412 = vmul.f32 %v1493, %v2399
  %v2413 = vmul.f32 %v1494, %v2399
  %v2414 = vmul.f32 %v1495, %v2399
  %v2415 = vmul.f32 %v1496, %v2399
  %v2416 = vmul.f32 %v1497, %v2399
  %v2417 = vmul.f32 %v1498, %v2399
  %v2418 = vmul.f32 %v1499, %v2399
  %v2419 = vmul.f32 %v1500, %v2399
  %v2420 = vmul.f32 %v1501, %v2399
  %v2421 = vmul.f32 %v1502, %v2399
  %v2422 = vmul.f32 %v1503, %v2399
  %v2423 = vmul.f32 %v1504, %v2399
  %v2424 = vmul.f32 %v1505, %v2399
  %v2425 = vmul.f32 %v1506, %v2399
  %v2426 = vmul.f32 %v1507, %v2399
  %v2427 = vmul.f32 %v1508, %v2399
  %v2428 = vmul.f32 %v1509, %v2399
  %v2429 = vmul.f32 %v1510, %v2399
  %v2430 = vmul.f32 %v1511, %v2399
  %v2431 = vmul.f32 %v1512, %v2399
  %v2432 = vadd.f32 %v2366, %v2400
  %v2433 = vadd.f32 %v2367, %v2401
  %v2434 = vadd.f32 %v2368, %v2402
  %v2435 = vadd.f32 %v2369, %v2403
  %v2436 = vadd.f32 %v2370, %v2404
  %v2437 = vadd.f32 %v2371, %v2405
  %v2438 = vadd.f32 %v2372, %v2406
  %v2439 = vadd.f32 %v2373, %v2407
  %v2440 = vadd.f32 %v2374, %v2408
  %v2441 = vadd.f32 %v2375, %v2409
  %v2442 = vadd.f32 %v2376, %v2410
  %v2443 = vadd.f32 %v2377, %v2411
  %v2444 = vadd.f32 %v2378, %v2412
  %v2445 = vadd.f32 %v2379, %v2413
  %v2446 = vadd.f32 %v2380, %v2414
  %v2447 = vadd.f32 %v2381, %v2415
  %v2448 = vadd.f32 %v2382, %v2416
  %v2449 = vadd.f32 %v2383, %v2417
  %v2450 = vadd.f32 %v2384, %v2418
  %v2451 = vadd.f32 %v2385, %v2419
  %v2452 = vadd.f32 %v2386, %v2420
  %v2453 = vadd.f32 %v2387, %v2421
  %v2454 = vadd.f32 %v2388, %v2422
  %v2455 = vadd.f32 %v2389, %v2423
  %v2456 = vadd.f32 %v2390, %v2424
  %v2457 = vadd.f32 %v2391, %v2425
  %v2458 = vadd.f32 %v2392, %v2426
  %v2459 = vadd.f32 %v2393, %v2427
  %v2460 = vadd.f32 %v2394, %v2428
  %v2461 = vadd.f32 %v2395, %v2429
  %v2462 = vadd.f32 %v2396, %v2430
  %v2463 = vadd.f32 %v2397, %v2431
  %v2464 = vld [vmem:[%s3 + $0x8] sm:$0x1]
  %v2465 = vperm.slane %v2464, 0
  %v2466 = vmul.f32 %v1836, %v2465
  %v2467 = vmul.f32 %v1837, %v2465
  %v2468 = vmul.f32 %v1838, %v2465
  %v2469 = vmul.f32 %v1839, %v2465
  %v2470 = vmul.f32 %v1840, %v2465
  %v2471 = vmul.f32 %v1841, %v2465
  %v2472 = vmul.f32 %v1842, %v2465
  %v2473 = vmul.f32 %v1843, %v2465
  %v2474 = vmul.f32 %v1844, %v2465
  %v2475 = vmul.f32 %v1845, %v2465
  %v2476 = vmul.f32 %v1846, %v2465
  %v2477 = vmul.f32 %v1847, %v2465
  %v2478 = vmul.f32 %v1848, %v2465
  %v2479 = vmul.f32 %v1849, %v2465
  %v2480 = vmul.f32 %v1850, %v2465
  %v2481 = vmul.f32 %v1851, %v2465
  %v2482 = vmul.f32 %v1852, %v2465
  %v2483 = vmul.f32 %v1853, %v2465
  %v2484 = vmul.f32 %v1854, %v2465
  %v2485 = vmul.f32 %v1855, %v2465
  %v2486 = vmul.f32 %v1856, %v2465
  %v2487 = vmul.f32 %v1857, %v2465
  %v2488 = vmul.f32 %v1858, %v2465
  %v2489 = vmul.f32 %v1859, %v2465
  %v2490 = vmul.f32 %v1860, %v2465
  %v2491 = vmul.f32 %v1861, %v2465
  %v2492 = vmul.f32 %v1862, %v2465
  %v2493 = vmul.f32 %v1863, %v2465
  %v2494 = vmul.f32 %v1864, %v2465
  %v2495 = vmul.f32 %v1865, %v2465
  %v2496 = vmul.f32 %v1866, %v2465
  %v2497 = vmul.f32 %v1867, %v2465
  %v2498 = vadd.f32 %v2432, %v2466
  %v2499 = vadd.f32 %v2433, %v2467
  %v2500 = vadd.f32 %v2434, %v2468
  %v2501 = vadd.f32 %v2435, %v2469
  %v2502 = vadd.f32 %v2436, %v2470
  %v2503 = vadd.f32 %v2437, %v2471
  %v2504 = vadd.f32 %v2438, %v2472
  %v2505 = vadd.f32 %v2439, %v2473
  %v2506 = vadd.f32 %v2440, %v2474
  %v2507 = vadd.f32 %v2441, %v2475
  %v2508 = vadd.f32 %v2442, %v2476
  %v2509 = vadd.f32 %v2443, %v2477
  %v2510 = vadd.f32 %v2444, %v2478
  %v2511 = vadd.f32 %v2445, %v2479
  %v2512 = vadd.f32 %v2446, %v2480
  %v2513 = vadd.f32 %v2447, %v2481
  %v2514 = vadd.f32 %v2448, %v2482
  %v2515 = vadd.f32 %v2449, %v2483
  %v2516 = vadd.f32 %v2450, %v2484
  %v2517 = vadd.f32 %v2451, %v2485
  %v2518 = vadd.f32 %v2452, %v2486
  %v2519 = vadd.f32 %v2453, %v2487
  %v2520 = vadd.f32 %v2454, %v2488
  %v2521 = vadd.f32 %v2455, %v2489
  %v2522 = vadd.f32 %v2456, %v2490
  %v2523 = vadd.f32 %v2457, %v2491
  %v2524 = vadd.f32 %v2458, %v2492
  %v2525 = vadd.f32 %v2459, %v2493
  %v2526 = vadd.f32 %v2460, %v2494
  %v2527 = vadd.f32 %v2461, %v2495
  %v2528 = vadd.f32 %v2462, %v2496
  %v2529 = vadd.f32 %v2463, %v2497
  %v2530 = vsel %vm2332, %v2500, 0.0
  %v2531 = vsel %vm2333, %v2501, 0.0
  %v2532 = vsel %vm2334, %v2502, 0.0
  %v2533 = vsel %vm2335, %v2503, 0.0
  %v2534 = vsel %vm2336, %v2504, 0.0
  %v2535 = vsel %vm2337, %v2505, 0.0
  %v2536 = vsel %vm2338, %v2506, 0.0
  %v2537 = vsel %vm2339, %v2507, 0.0
  %v2538 = vsel %vm2340, %v2508, 0.0
  %v2539 = vsel %vm2341, %v2509, 0.0
  %v2540 = vsel %vm2342, %v2510, 0.0
  %v2541 = vsel %vm2343, %v2511, 0.0
  %v2542 = vsel %vm2344, %v2512, 0.0
  %v2543 = vsel %vm2345, %v2513, 0.0
  %v2544 = vsel %vm2346, %v2514, 0.0
  %v2545 = vsel %vm2347, %v2515, 0.0
  %v2546 = vsel %vm2348, %v2516, 0.0
  %v2547 = vsel %vm2349, %v2517, 0.0
  %v2548 = vsel %vm2350, %v2518, 0.0
  %v2549 = vsel %vm2351, %v2519, 0.0
  %v2550 = vsel %vm2352, %v2520, 0.0
  %v2551 = vsel %vm2353, %v2521, 0.0
  %v2552 = vsel %vm2354, %v2522, 0.0
  %v2553 = vsel %vm2355, %v2523, 0.0
  %v2554 = vsel %vm2356, %v2524, 0.0
  %v2555 = vsel %vm2357, %v2525, 0.0
  %v2556 = vsel %vm2358, %v2526, 0.0
  %v2557 = vsel %vm2359, %v2527, 0.0
  %v2558 = vsel %vm2360, %v2528, 0.0
  %v2559 = vsel %vm2361, %v2529, 0.0
  %v2560 = vsel %vm2362, %v2498, 0.0
  %v2561 = vsel %vm2363, %v2499, 0.0
  %v2562 = vadd.f32 %v2300, %v2530
  %v2563 = vadd.f32 %v2301, %v2531
  %v2564 = vadd.f32 %v2302, %v2532
  %v2565 = vadd.f32 %v2303, %v2533
  %v2566 = vadd.f32 %v2304, %v2534
  %v2567 = vadd.f32 %v2305, %v2535
  %v2568 = vadd.f32 %v2306, %v2536
  %v2569 = vadd.f32 %v2307, %v2537
  %v2570 = vadd.f32 %v2308, %v2538
  %v2571 = vadd.f32 %v2309, %v2539
  %v2572 = vadd.f32 %v2310, %v2540
  %v2573 = vadd.f32 %v2311, %v2541
  %v2574 = vadd.f32 %v2312, %v2542
  %v2575 = vadd.f32 %v2313, %v2543
  %v2576 = vadd.f32 %v2314, %v2544
  %v2577 = vadd.f32 %v2315, %v2545
  %v2578 = vadd.f32 %v2316, %v2546
  %v2579 = vadd.f32 %v2317, %v2547
  %v2580 = vadd.f32 %v2318, %v2548
  %v2581 = vadd.f32 %v2319, %v2549
  %v2582 = vadd.f32 %v2320, %v2550
  %v2583 = vadd.f32 %v2321, %v2551
  %v2584 = vadd.f32 %v2322, %v2552
  %v2585 = vadd.f32 %v2323, %v2553
  %v2586 = vadd.f32 %v2324, %v2554
  %v2587 = vadd.f32 %v2325, %v2555
  %v2588 = vadd.f32 %v2326, %v2556
  %v2589 = vadd.f32 %v2327, %v2557
  %v2590 = vadd.f32 %v2328, %v2558
  %v2591 = vadd.f32 %v2329, %v2559
  %v2592 = vadd.f32 %v2330, %v2560
  %v2593 = vadd.f32 %v2331, %v2561
  %v2594 = vmul.f32 %v2562, 0.70710677
  %v2595 = vmul.f32 %v2563, 0.70710677
  %v2596 = vmul.f32 %v2564, 0.70710677
  %v2597 = vmul.f32 %v2565, 0.70710677
  %v2598 = vmul.f32 %v2566, 0.70710677
  %v2599 = vmul.f32 %v2567, 0.70710677
  %v2600 = vmul.f32 %v2568, 0.70710677
  %v2601 = vmul.f32 %v2569, 0.70710677
  %v2602 = vmul.f32 %v2570, 0.70710677
  %v2603 = vmul.f32 %v2571, 0.70710677
  %v2604 = vmul.f32 %v2572, 0.70710677
  %v2605 = vmul.f32 %v2573, 0.70710677
  %v2606 = vmul.f32 %v2574, 0.70710677
  %v2607 = vmul.f32 %v2575, 0.70710677
  %v2608 = vmul.f32 %v2576, 0.70710677
  %v2609 = vmul.f32 %v2577, 0.70710677
  %v2610 = vmul.f32 %v2578, 0.70710677
  %v2611 = vmul.f32 %v2579, 0.70710677
  %v2612 = vmul.f32 %v2580, 0.70710677
  %v2613 = vmul.f32 %v2581, 0.70710677
  %v2614 = vmul.f32 %v2582, 0.70710677
  %v2615 = vmul.f32 %v2583, 0.70710677
  %v2616 = vmul.f32 %v2584, 0.70710677
  %v2617 = vmul.f32 %v2585, 0.70710677
  %v2618 = vmul.f32 %v2586, 0.70710677
  %v2619 = vmul.f32 %v2587, 0.70710677
  %v2620 = vmul.f32 %v2588, 0.70710677
  %v2621 = vmul.f32 %v2589, 0.70710677
  %v2622 = vmul.f32 %v2590, 0.70710677
  %v2623 = vmul.f32 %v2591, 0.70710677
  %v2624 = vmul.f32 %v2592, 0.70710677
  %v2625 = vmul.f32 %v2593, 0.70710677
  %v2626 = vand.u32 2147483647, %v2594
  %v2627 = vand.u32 2147483647, %v2595
  %v2628 = vand.u32 2147483647, %v2596
  %v2629 = vand.u32 2147483647, %v2597
  %v2630 = vand.u32 2147483647, %v2598
  %v2631 = vand.u32 2147483647, %v2599
  %v2632 = vand.u32 2147483647, %v2600
  %v2633 = vand.u32 2147483647, %v2601
  %v2634 = vand.u32 2147483647, %v2602
  %v2635 = vand.u32 2147483647, %v2603
  %v2636 = vand.u32 2147483647, %v2604
  %v2637 = vand.u32 2147483647, %v2605
  %v2638 = vand.u32 2147483647, %v2606
  %v2639 = vand.u32 2147483647, %v2607
  %v2640 = vand.u32 2147483647, %v2608
  %v2641 = vand.u32 2147483647, %v2609
  %v2642 = vand.u32 2147483647, %v2610
  %v2643 = vand.u32 2147483647, %v2611
  %v2644 = vand.u32 2147483647, %v2612
  %v2645 = vand.u32 2147483647, %v2613
  %v2646 = vand.u32 2147483647, %v2614
  %v2647 = vand.u32 2147483647, %v2615
  %v2648 = vand.u32 2147483647, %v2616
  %v2649 = vand.u32 2147483647, %v2617
  %v2650 = vand.u32 2147483647, %v2618
  %v2651 = vand.u32 2147483647, %v2619
  %v2652 = vand.u32 2147483647, %v2620
  %v2653 = vand.u32 2147483647, %v2621
  %v2654 = vand.u32 2147483647, %v2622
  %v2655 = vand.u32 2147483647, %v2623
  %v2656 = vand.u32 2147483647, %v2624
  %v2657 = vand.u32 2147483647, %v2625
  %v2658 = vmul.f32 %v2626, 0.3275911
  %v2659 = vmul.f32 %v2627, 0.3275911
  %v2660 = vmul.f32 %v2628, 0.3275911
  %v2661 = vmul.f32 %v2629, 0.3275911
  %v2662 = vmul.f32 %v2630, 0.3275911
  %v2663 = vmul.f32 %v2631, 0.3275911
  %v2664 = vmul.f32 %v2632, 0.3275911
  %v2665 = vmul.f32 %v2633, 0.3275911
  %v2666 = vmul.f32 %v2634, 0.3275911
  %v2667 = vmul.f32 %v2635, 0.3275911
  %v2668 = vmul.f32 %v2636, 0.3275911
  %v2669 = vmul.f32 %v2637, 0.3275911
  %v2670 = vmul.f32 %v2638, 0.3275911
  %v2671 = vmul.f32 %v2639, 0.3275911
  %v2672 = vmul.f32 %v2640, 0.3275911
  %v2673 = vmul.f32 %v2641, 0.3275911
  %v2674 = vmul.f32 %v2642, 0.3275911
  %v2675 = vmul.f32 %v2643, 0.3275911
  %v2676 = vmul.f32 %v2644, 0.3275911
  %v2677 = vmul.f32 %v2645, 0.3275911
  %v2678 = vmul.f32 %v2646, 0.3275911
  %v2679 = vmul.f32 %v2647, 0.3275911
  %v2680 = vmul.f32 %v2648, 0.3275911
  %v2681 = vmul.f32 %v2649, 0.3275911
  %v2682 = vmul.f32 %v2650, 0.3275911
  %v2683 = vmul.f32 %v2651, 0.3275911
  %v2684 = vmul.f32 %v2652, 0.3275911
  %v2685 = vmul.f32 %v2653, 0.3275911
  %v2686 = vmul.f32 %v2654, 0.3275911
  %v2687 = vmul.f32 %v2655, 0.3275911
  %v2688 = vmul.f32 %v2656, 0.3275911
  %v2689 = vmul.f32 %v2657, 0.3275911
  %v2690 = vadd.f32 %v2658, 1.0
  %v2691 = vadd.f32 %v2659, 1.0
  %v2692 = vadd.f32 %v2660, 1.0
  %v2693 = vadd.f32 %v2661, 1.0
  %v2694 = vadd.f32 %v2662, 1.0
  %v2695 = vadd.f32 %v2663, 1.0
  %v2696 = vadd.f32 %v2664, 1.0
  %v2697 = vadd.f32 %v2665, 1.0
  %v2698 = vadd.f32 %v2666, 1.0
  %v2699 = vadd.f32 %v2667, 1.0
  %v2700 = vadd.f32 %v2668, 1.0
  %v2701 = vadd.f32 %v2669, 1.0
  %v2702 = vadd.f32 %v2670, 1.0
  %v2703 = vadd.f32 %v2671, 1.0
  %v2704 = vadd.f32 %v2672, 1.0
  %v2705 = vadd.f32 %v2673, 1.0
  %v2706 = vadd.f32 %v2674, 1.0
  %v2707 = vadd.f32 %v2675, 1.0
  %v2708 = vadd.f32 %v2676, 1.0
  %v2709 = vadd.f32 %v2677, 1.0
  %v2710 = vadd.f32 %v2678, 1.0
  %v2711 = vadd.f32 %v2679, 1.0
  %v2712 = vadd.f32 %v2680, 1.0
  %v2713 = vadd.f32 %v2681, 1.0
  %v2714 = vadd.f32 %v2682, 1.0
  %v2715 = vadd.f32 %v2683, 1.0
  %v2716 = vadd.f32 %v2684, 1.0
  %v2717 = vadd.f32 %v2685, 1.0
  %v2718 = vadd.f32 %v2686, 1.0
  %v2719 = vadd.f32 %v2687, 1.0
  %v2720 = vadd.f32 %v2688, 1.0
  %v2721 = vadd.f32 %v2689, 1.0
  %v2722 = vrcp.pop %v2690
  %v2723 = vmul.f32 %v2690, %v2722
  %v2724 = vsub.f32 1.0, %v2723
  %v2725 = vmul.f32 %v2722, %v2724
  %v2726 = vadd.f32 %v2722, %v2725
  %vm2727 = vweird.f32 %v2690
  %vm2728 = vweird.f32 %v2722
  %vm2729 = vmor %vm2727, %vm2728
  %v2730 = vsel %vm2729, %v2722, %v2726
  %v2731 = vand.u32 2147483647, %v2690
  %vm2732 = vcmp.eq.f32.partialorder %v2731, 8.507059e+37
  %v2733 = vand.u32 %v2690, 2147483648
  %v2734 = vor.u32 1.1754944e-38, %v2733
  %v2735 = vsel %vm2732, %v2734, %v2730
  %v2736 = vmul.f32 1.0, %v2735
  %v2737 = vrcp.pop %v2691
  %v2738 = vmul.f32 %v2691, %v2737
  %v2739 = vsub.f32 1.0, %v2738
  %v2740 = vmul.f32 %v2737, %v2739
  %v2741 = vadd.f32 %v2737, %v2740
  %vm2742 = vweird.f32 %v2691
  %vm2743 = vweird.f32 %v2737
  %vm2744 = vmor %vm2742, %vm2743
  %v2745 = vsel %vm2744, %v2737, %v2741
  %v2746 = vand.u32 2147483647, %v2691
  %vm2747 = vcmp.eq.f32.partialorder %v2746, 8.507059e+37
  %v2748 = vand.u32 %v2691, 2147483648
  %v2749 = vor.u32 1.1754944e-38, %v2748
  %v2750 = vsel %vm2747, %v2749, %v2745
  %v2751 = vmul.f32 1.0, %v2750
  %v2752 = vrcp.pop %v2692
  %v2753 = vmul.f32 %v2692, %v2752
  %v2754 = vsub.f32 1.0, %v2753
  %v2755 = vmul.f32 %v2752, %v2754
  %v2756 = vadd.f32 %v2752, %v2755
  %vm2757 = vweird.f32 %v2692
  %vm2758 = vweird.f32 %v2752
  %vm2759 = vmor %vm2757, %vm2758
  %v2760 = vsel %vm2759, %v2752, %v2756
  %v2761 = vand.u32 2147483647, %v2692
  %vm2762 = vcmp.eq.f32.partialorder %v2761, 8.507059e+37
  %v2763 = vand.u32 %v2692, 2147483648
  %v2764 = vor.u32 1.1754944e-38, %v2763
  %v2765 = vsel %vm2762, %v2764, %v2760
  %v2766 = vmul.f32 1.0, %v2765
  %v2767 = vrcp.pop %v2693
  %v2768 = vmul.f32 %v2693, %v2767
  %v2769 = vsub.f32 1.0, %v2768
  %v2770 = vmul.f32 %v2767, %v2769
  %v2771 = vadd.f32 %v2767, %v2770
  %vm2772 = vweird.f32 %v2693
  %vm2773 = vweird.f32 %v2767
  %vm2774 = vmor %vm2772, %vm2773
  %v2775 = vsel %vm2774, %v2767, %v2771
  %v2776 = vand.u32 2147483647, %v2693
  %vm2777 = vcmp.eq.f32.partialorder %v2776, 8.507059e+37
  %v2778 = vand.u32 %v2693, 2147483648
  %v2779 = vor.u32 1.1754944e-38, %v2778
  %v2780 = vsel %vm2777, %v2779, %v2775
  %v2781 = vmul.f32 1.0, %v2780
  %v2782 = vrcp.pop %v2694
  %v2783 = vmul.f32 %v2694, %v2782
  %v2784 = vsub.f32 1.0, %v2783
  %v2785 = vmul.f32 %v2782, %v2784
  %v2786 = vadd.f32 %v2782, %v2785
  %vm2787 = vweird.f32 %v2694
  %vm2788 = vweird.f32 %v2782
  %vm2789 = vmor %vm2787, %vm2788
  %v2790 = vsel %vm2789, %v2782, %v2786
  %v2791 = vand.u32 2147483647, %v2694
  %vm2792 = vcmp.eq.f32.partialorder %v2791, 8.507059e+37
  %v2793 = vand.u32 %v2694, 2147483648
  %v2794 = vor.u32 1.1754944e-38, %v2793
  %v2795 = vsel %vm2792, %v2794, %v2790
  %v2796 = vmul.f32 1.0, %v2795
  %v2797 = vrcp.pop %v2695
  %v2798 = vmul.f32 %v2695, %v2797
  %v2799 = vsub.f32 1.0, %v2798
  %v2800 = vmul.f32 %v2797, %v2799
  %v2801 = vadd.f32 %v2797, %v2800
  %vm2802 = vweird.f32 %v2695
  %vm2803 = vweird.f32 %v2797
  %vm2804 = vmor %vm2802, %vm2803
  %v2805 = vsel %vm2804, %v2797, %v2801
  %v2806 = vand.u32 2147483647, %v2695
  %vm2807 = vcmp.eq.f32.partialorder %v2806, 8.507059e+37
  %v2808 = vand.u32 %v2695, 2147483648
  %v2809 = vor.u32 1.1754944e-38, %v2808
  %v2810 = vsel %vm2807, %v2809, %v2805
  %v2811 = vmul.f32 1.0, %v2810
  %v2812 = vrcp.pop %v2696
  %v2813 = vmul.f32 %v2696, %v2812
  %v2814 = vsub.f32 1.0, %v2813
  %v2815 = vmul.f32 %v2812, %v2814
  %v2816 = vadd.f32 %v2812, %v2815
  %vm2817 = vweird.f32 %v2696
  %vm2818 = vweird.f32 %v2812
  %vm2819 = vmor %vm2817, %vm2818
  %v2820 = vsel %vm2819, %v2812, %v2816
  %v2821 = vand.u32 2147483647, %v2696
  %vm2822 = vcmp.eq.f32.partialorder %v2821, 8.507059e+37
  %v2823 = vand.u32 %v2696, 2147483648
  %v2824 = vor.u32 1.1754944e-38, %v2823
  %v2825 = vsel %vm2822, %v2824, %v2820
  %v2826 = vmul.f32 1.0, %v2825
  %v2827 = vrcp.pop %v2697
  %v2828 = vmul.f32 %v2697, %v2827
  %v2829 = vsub.f32 1.0, %v2828
  %v2830 = vmul.f32 %v2827, %v2829
  %v2831 = vadd.f32 %v2827, %v2830
  %vm2832 = vweird.f32 %v2697
  %vm2833 = vweird.f32 %v2827
  %vm2834 = vmor %vm2832, %vm2833
  %v2835 = vsel %vm2834, %v2827, %v2831
  %v2836 = vand.u32 2147483647, %v2697
  %vm2837 = vcmp.eq.f32.partialorder %v2836, 8.507059e+37
  %v2838 = vand.u32 %v2697, 2147483648
  %v2839 = vor.u32 1.1754944e-38, %v2838
  %v2840 = vsel %vm2837, %v2839, %v2835
  %v2841 = vmul.f32 1.0, %v2840
  %v2842 = vrcp.pop %v2698
  %v2843 = vmul.f32 %v2698, %v2842
  %v2844 = vsub.f32 1.0, %v2843
  %v2845 = vmul.f32 %v2842, %v2844
  %v2846 = vadd.f32 %v2842, %v2845
  %vm2847 = vweird.f32 %v2698
  %vm2848 = vweird.f32 %v2842
  %vm2849 = vmor %vm2847, %vm2848
  %v2850 = vsel %vm2849, %v2842, %v2846
  %v2851 = vand.u32 2147483647, %v2698
  %vm2852 = vcmp.eq.f32.partialorder %v2851, 8.507059e+37
  %v2853 = vand.u32 %v2698, 2147483648
  %v2854 = vor.u32 1.1754944e-38, %v2853
  %v2855 = vsel %vm2852, %v2854, %v2850
  %v2856 = vmul.f32 1.0, %v2855
  %v2857 = vrcp.pop %v2699
  %v2858 = vmul.f32 %v2699, %v2857
  %v2859 = vsub.f32 1.0, %v2858
  %v2860 = vmul.f32 %v2857, %v2859
  %v2861 = vadd.f32 %v2857, %v2860
  %vm2862 = vweird.f32 %v2699
  %vm2863 = vweird.f32 %v2857
  %vm2864 = vmor %vm2862, %vm2863
  %v2865 = vsel %vm2864, %v2857, %v2861
  %v2866 = vand.u32 2147483647, %v2699
  %vm2867 = vcmp.eq.f32.partialorder %v2866, 8.507059e+37
  %v2868 = vand.u32 %v2699, 2147483648
  %v2869 = vor.u32 1.1754944e-38, %v2868
  %v2870 = vsel %vm2867, %v2869, %v2865
  %v2871 = vmul.f32 1.0, %v2870
  %v2872 = vrcp.pop %v2700
  %v2873 = vmul.f32 %v2700, %v2872
  %v2874 = vsub.f32 1.0, %v2873
  %v2875 = vmul.f32 %v2872, %v2874
  %v2876 = vadd.f32 %v2872, %v2875
  %vm2877 = vweird.f32 %v2700
  %vm2878 = vweird.f32 %v2872
  %vm2879 = vmor %vm2877, %vm2878
  %v2880 = vsel %vm2879, %v2872, %v2876
  %v2881 = vand.u32 2147483647, %v2700
  %vm2882 = vcmp.eq.f32.partialorder %v2881, 8.507059e+37
  %v2883 = vand.u32 %v2700, 2147483648
  %v2884 = vor.u32 1.1754944e-38, %v2883
  %v2885 = vsel %vm2882, %v2884, %v2880
  %v2886 = vmul.f32 1.0, %v2885
  %v2887 = vrcp.pop %v2701
  %v2888 = vmul.f32 %v2701, %v2887
  %v2889 = vsub.f32 1.0, %v2888
  %v2890 = vmul.f32 %v2887, %v2889
  %v2891 = vadd.f32 %v2887, %v2890
  %vm2892 = vweird.f32 %v2701
  %vm2893 = vweird.f32 %v2887
  %vm2894 = vmor %vm2892, %vm2893
  %v2895 = vsel %vm2894, %v2887, %v2891
  %v2896 = vand.u32 2147483647, %v2701
  %vm2897 = vcmp.eq.f32.partialorder %v2896, 8.507059e+37
  %v2898 = vand.u32 %v2701, 2147483648
  %v2899 = vor.u32 1.1754944e-38, %v2898
  %v2900 = vsel %vm2897, %v2899, %v2895
  %v2901 = vmul.f32 1.0, %v2900
  %v2902 = vrcp.pop %v2702
  %v2903 = vmul.f32 %v2702, %v2902
  %v2904 = vsub.f32 1.0, %v2903
  %v2905 = vmul.f32 %v2902, %v2904
  %v2906 = vadd.f32 %v2902, %v2905
  %vm2907 = vweird.f32 %v2702
  %vm2908 = vweird.f32 %v2902
  %vm2909 = vmor %vm2907, %vm2908
  %v2910 = vsel %vm2909, %v2902, %v2906
  %v2911 = vand.u32 2147483647, %v2702
  %vm2912 = vcmp.eq.f32.partialorder %v2911, 8.507059e+37
  %v2913 = vand.u32 %v2702, 2147483648
  %v2914 = vor.u32 1.1754944e-38, %v2913
  %v2915 = vsel %vm2912, %v2914, %v2910
  %v2916 = vmul.f32 1.0, %v2915
  %v2917 = vrcp.pop %v2703
  %v2918 = vmul.f32 %v2703, %v2917
  %v2919 = vsub.f32 1.0, %v2918
  %v2920 = vmul.f32 %v2917, %v2919
  %v2921 = vadd.f32 %v2917, %v2920
  %vm2922 = vweird.f32 %v2703
  %vm2923 = vweird.f32 %v2917
  %vm2924 = vmor %vm2922, %vm2923
  %v2925 = vsel %vm2924, %v2917, %v2921
  %v2926 = vand.u32 2147483647, %v2703
  %vm2927 = vcmp.eq.f32.partialorder %v2926, 8.507059e+37
  %v2928 = vand.u32 %v2703, 2147483648
  %v2929 = vor.u32 1.1754944e-38, %v2928
  %v2930 = vsel %vm2927, %v2929, %v2925
  %v2931 = vmul.f32 1.0, %v2930
  %v2932 = vrcp.pop %v2704
  %v2933 = vmul.f32 %v2704, %v2932
  %v2934 = vsub.f32 1.0, %v2933
  %v2935 = vmul.f32 %v2932, %v2934
  %v2936 = vadd.f32 %v2932, %v2935
  %vm2937 = vweird.f32 %v2704
  %vm2938 = vweird.f32 %v2932
  %vm2939 = vmor %vm2937, %vm2938
  %v2940 = vsel %vm2939, %v2932, %v2936
  %v2941 = vand.u32 2147483647, %v2704
  %vm2942 = vcmp.eq.f32.partialorder %v2941, 8.507059e+37
  %v2943 = vand.u32 %v2704, 2147483648
  %v2944 = vor.u32 1.1754944e-38, %v2943
  %v2945 = vsel %vm2942, %v2944, %v2940
  %v2946 = vmul.f32 1.0, %v2945
  %v2947 = vrcp.pop %v2705
  %v2948 = vmul.f32 %v2705, %v2947
  %v2949 = vsub.f32 1.0, %v2948
  %v2950 = vmul.f32 %v2947, %v2949
  %v2951 = vadd.f32 %v2947, %v2950
  %vm2952 = vweird.f32 %v2705
  %vm2953 = vweird.f32 %v2947
  %vm2954 = vmor %vm2952, %vm2953
  %v2955 = vsel %vm2954, %v2947, %v2951
  %v2956 = vand.u32 2147483647, %v2705
  %vm2957 = vcmp.eq.f32.partialorder %v2956, 8.507059e+37
  %v2958 = vand.u32 %v2705, 2147483648
  %v2959 = vor.u32 1.1754944e-38, %v2958
  %v2960 = vsel %vm2957, %v2959, %v2955
  %v2961 = vmul.f32 1.0, %v2960
  %v2962 = vrcp.pop %v2706
  %v2963 = vmul.f32 %v2706, %v2962
  %v2964 = vsub.f32 1.0, %v2963
  %v2965 = vmul.f32 %v2962, %v2964
  %v2966 = vadd.f32 %v2962, %v2965
  %vm2967 = vweird.f32 %v2706
  %vm2968 = vweird.f32 %v2962
  %vm2969 = vmor %vm2967, %vm2968
  %v2970 = vsel %vm2969, %v2962, %v2966
  %v2971 = vand.u32 2147483647, %v2706
  %vm2972 = vcmp.eq.f32.partialorder %v2971, 8.507059e+37
  %v2973 = vand.u32 %v2706, 2147483648
  %v2974 = vor.u32 1.1754944e-38, %v2973
  %v2975 = vsel %vm2972, %v2974, %v2970
  %v2976 = vmul.f32 1.0, %v2975
  %v2977 = vrcp.pop %v2707
  %v2978 = vmul.f32 %v2707, %v2977
  %v2979 = vsub.f32 1.0, %v2978
  %v2980 = vmul.f32 %v2977, %v2979
  %v2981 = vadd.f32 %v2977, %v2980
  %vm2982 = vweird.f32 %v2707
  %vm2983 = vweird.f32 %v2977
  %vm2984 = vmor %vm2982, %vm2983
  %v2985 = vsel %vm2984, %v2977, %v2981
  %v2986 = vand.u32 2147483647, %v2707
  %vm2987 = vcmp.eq.f32.partialorder %v2986, 8.507059e+37
  %v2988 = vand.u32 %v2707, 2147483648
  %v2989 = vor.u32 1.1754944e-38, %v2988
  %v2990 = vsel %vm2987, %v2989, %v2985
  %v2991 = vmul.f32 1.0, %v2990
  %v2992 = vrcp.pop %v2708
  %v2993 = vmul.f32 %v2708, %v2992
  %v2994 = vsub.f32 1.0, %v2993
  %v2995 = vmul.f32 %v2992, %v2994
  %v2996 = vadd.f32 %v2992, %v2995
  %vm2997 = vweird.f32 %v2708
  %vm2998 = vweird.f32 %v2992
  %vm2999 = vmor %vm2997, %vm2998
  %v3000 = vsel %vm2999, %v2992, %v2996
  %v3001 = vand.u32 2147483647, %v2708
  %vm3002 = vcmp.eq.f32.partialorder %v3001, 8.507059e+37
  %v3003 = vand.u32 %v2708, 2147483648
  %v3004 = vor.u32 1.1754944e-38, %v3003
  %v3005 = vsel %vm3002, %v3004, %v3000
  %v3006 = vmul.f32 1.0, %v3005
  %v3007 = vrcp.pop %v2709
  %v3008 = vmul.f32 %v2709, %v3007
  %v3009 = vsub.f32 1.0, %v3008
  %v3010 = vmul.f32 %v3007, %v3009
  %v3011 = vadd.f32 %v3007, %v3010
  %vm3012 = vweird.f32 %v2709
  %vm3013 = vweird.f32 %v3007
  %vm3014 = vmor %vm3012, %vm3013
  %v3015 = vsel %vm3014, %v3007, %v3011
  %v3016 = vand.u32 2147483647, %v2709
  %vm3017 = vcmp.eq.f32.partialorder %v3016, 8.507059e+37
  %v3018 = vand.u32 %v2709, 2147483648
  %v3019 = vor.u32 1.1754944e-38, %v3018
  %v3020 = vsel %vm3017, %v3019, %v3015
  %v3021 = vmul.f32 1.0, %v3020
  %v3022 = vrcp.pop %v2710
  %v3023 = vmul.f32 %v2710, %v3022
  %v3024 = vsub.f32 1.0, %v3023
  %v3025 = vmul.f32 %v3022, %v3024
  %v3026 = vadd.f32 %v3022, %v3025
  %vm3027 = vweird.f32 %v2710
  %vm3028 = vweird.f32 %v3022
  %vm3029 = vmor %vm3027, %vm3028
  %v3030 = vsel %vm3029, %v3022, %v3026
  %v3031 = vand.u32 2147483647, %v2710
  %vm3032 = vcmp.eq.f32.partialorder %v3031, 8.507059e+37
  %v3033 = vand.u32 %v2710, 2147483648
  %v3034 = vor.u32 1.1754944e-38, %v3033
  %v3035 = vsel %vm3032, %v3034, %v3030
  %v3036 = vmul.f32 1.0, %v3035
  %v3037 = vrcp.pop %v2711
  %v3038 = vmul.f32 %v2711, %v3037
  %v3039 = vsub.f32 1.0, %v3038
  %v3040 = vmul.f32 %v3037, %v3039
  %v3041 = vadd.f32 %v3037, %v3040
  %vm3042 = vweird.f32 %v2711
  %vm3043 = vweird.f32 %v3037
  %vm3044 = vmor %vm3042, %vm3043
  %v3045 = vsel %vm3044, %v3037, %v3041
  %v3046 = vand.u32 2147483647, %v2711
  %vm3047 = vcmp.eq.f32.partialorder %v3046, 8.507059e+37
  %v3048 = vand.u32 %v2711, 2147483648
  %v3049 = vor.u32 1.1754944e-38, %v3048
  %v3050 = vsel %vm3047, %v3049, %v3045
  %v3051 = vmul.f32 1.0, %v3050
  %v3052 = vrcp.pop %v2712
  %v3053 = vmul.f32 %v2712, %v3052
  %v3054 = vsub.f32 1.0, %v3053
  %v3055 = vmul.f32 %v3052, %v3054
  %v3056 = vadd.f32 %v3052, %v3055
  %vm3057 = vweird.f32 %v2712
  %vm3058 = vweird.f32 %v3052
  %vm3059 = vmor %vm3057, %vm3058
  %v3060 = vsel %vm3059, %v3052, %v3056
  %v3061 = vand.u32 2147483647, %v2712
  %vm3062 = vcmp.eq.f32.partialorder %v3061, 8.507059e+37
  %v3063 = vand.u32 %v2712, 2147483648
  %v3064 = vor.u32 1.1754944e-38, %v3063
  %v3065 = vsel %vm3062, %v3064, %v3060
  %v3066 = vmul.f32 1.0, %v3065
  %v3067 = vrcp.pop %v2713
  %v3068 = vmul.f32 %v2713, %v3067
  %v3069 = vsub.f32 1.0, %v3068
  %v3070 = vmul.f32 %v3067, %v3069
  %v3071 = vadd.f32 %v3067, %v3070
  %vm3072 = vweird.f32 %v2713
  %vm3073 = vweird.f32 %v3067
  %vm3074 = vmor %vm3072, %vm3073
  %v3075 = vsel %vm3074, %v3067, %v3071
  %v3076 = vand.u32 2147483647, %v2713
  %vm3077 = vcmp.eq.f32.partialorder %v3076, 8.507059e+37
  %v3078 = vand.u32 %v2713, 2147483648
  %v3079 = vor.u32 1.1754944e-38, %v3078
  %v3080 = vsel %vm3077, %v3079, %v3075
  %v3081 = vmul.f32 1.0, %v3080
  %v3082 = vrcp.pop %v2714
  %v3083 = vmul.f32 %v2714, %v3082
  %v3084 = vsub.f32 1.0, %v3083
  %v3085 = vmul.f32 %v3082, %v3084
  %v3086 = vadd.f32 %v3082, %v3085
  %vm3087 = vweird.f32 %v2714
  %vm3088 = vweird.f32 %v3082
  %vm3089 = vmor %vm3087, %vm3088
  %v3090 = vsel %vm3089, %v3082, %v3086
  %v3091 = vand.u32 2147483647, %v2714
  %vm3092 = vcmp.eq.f32.partialorder %v3091, 8.507059e+37
  %v3093 = vand.u32 %v2714, 2147483648
  %v3094 = vor.u32 1.1754944e-38, %v3093
  %v3095 = vsel %vm3092, %v3094, %v3090
  %v3096 = vmul.f32 1.0, %v3095
  %v3097 = vrcp.pop %v2715
  %v3098 = vmul.f32 %v2715, %v3097
  %v3099 = vsub.f32 1.0, %v3098
  %v3100 = vmul.f32 %v3097, %v3099
  %v3101 = vadd.f32 %v3097, %v3100
  %vm3102 = vweird.f32 %v2715
  %vm3103 = vweird.f32 %v3097
  %vm3104 = vmor %vm3102, %vm3103
  %v3105 = vsel %vm3104, %v3097, %v3101
  %v3106 = vand.u32 2147483647, %v2715
  %vm3107 = vcmp.eq.f32.partialorder %v3106, 8.507059e+37
  %v3108 = vand.u32 %v2715, 2147483648
  %v3109 = vor.u32 1.1754944e-38, %v3108
  %v3110 = vsel %vm3107, %v3109, %v3105
  %v3111 = vmul.f32 1.0, %v3110
  %v3112 = vrcp.pop %v2716
  %v3113 = vmul.f32 %v2716, %v3112
  %v3114 = vsub.f32 1.0, %v3113
  %v3115 = vmul.f32 %v3112, %v3114
  %v3116 = vadd.f32 %v3112, %v3115
  %vm3117 = vweird.f32 %v2716
  %vm3118 = vweird.f32 %v3112
  %vm3119 = vmor %vm3117, %vm3118
  %v3120 = vsel %vm3119, %v3112, %v3116
  %v3121 = vand.u32 2147483647, %v2716
  %vm3122 = vcmp.eq.f32.partialorder %v3121, 8.507059e+37
  %v3123 = vand.u32 %v2716, 2147483648
  %v3124 = vor.u32 1.1754944e-38, %v3123
  %v3125 = vsel %vm3122, %v3124, %v3120
  %v3126 = vmul.f32 1.0, %v3125
  %v3127 = vrcp.pop %v2717
  %v3128 = vmul.f32 %v2717, %v3127
  %v3129 = vsub.f32 1.0, %v3128
  %v3130 = vmul.f32 %v3127, %v3129
  %v3131 = vadd.f32 %v3127, %v3130
  %vm3132 = vweird.f32 %v2717
  %vm3133 = vweird.f32 %v3127
  %vm3134 = vmor %vm3132, %vm3133
  %v3135 = vsel %vm3134, %v3127, %v3131
  %v3136 = vand.u32 2147483647, %v2717
  %vm3137 = vcmp.eq.f32.partialorder %v3136, 8.507059e+37
  %v3138 = vand.u32 %v2717, 2147483648
  %v3139 = vor.u32 1.1754944e-38, %v3138
  %v3140 = vsel %vm3137, %v3139, %v3135
  %v3141 = vmul.f32 1.0, %v3140
  %v3142 = vrcp.pop %v2718
  %v3143 = vmul.f32 %v2718, %v3142
  %v3144 = vsub.f32 1.0, %v3143
  %v3145 = vmul.f32 %v3142, %v3144
  %v3146 = vadd.f32 %v3142, %v3145
  %vm3147 = vweird.f32 %v2718
  %vm3148 = vweird.f32 %v3142
  %vm3149 = vmor %vm3147, %vm3148
  %v3150 = vsel %vm3149, %v3142, %v3146
  %v3151 = vand.u32 2147483647, %v2718
  %vm3152 = vcmp.eq.f32.partialorder %v3151, 8.507059e+37
  %v3153 = vand.u32 %v2718, 2147483648
  %v3154 = vor.u32 1.1754944e-38, %v3153
  %v3155 = vsel %vm3152, %v3154, %v3150
  %v3156 = vmul.f32 1.0, %v3155
  %v3157 = vrcp.pop %v2719
  %v3158 = vmul.f32 %v2719, %v3157
  %v3159 = vsub.f32 1.0, %v3158
  %v3160 = vmul.f32 %v3157, %v3159
  %v3161 = vadd.f32 %v3157, %v3160
  %vm3162 = vweird.f32 %v2719
  %vm3163 = vweird.f32 %v3157
  %vm3164 = vmor %vm3162, %vm3163
  %v3165 = vsel %vm3164, %v3157, %v3161
  %v3166 = vand.u32 2147483647, %v2719
  %vm3167 = vcmp.eq.f32.partialorder %v3166, 8.507059e+37
  %v3168 = vand.u32 %v2719, 2147483648
  %v3169 = vor.u32 1.1754944e-38, %v3168
  %v3170 = vsel %vm3167, %v3169, %v3165
  %v3171 = vmul.f32 1.0, %v3170
  %v3172 = vrcp.pop %v2720
  %v3173 = vmul.f32 %v2720, %v3172
  %v3174 = vsub.f32 1.0, %v3173
  %v3175 = vmul.f32 %v3172, %v3174
  %v3176 = vadd.f32 %v3172, %v3175
  %vm3177 = vweird.f32 %v2720
  %vm3178 = vweird.f32 %v3172
  %vm3179 = vmor %vm3177, %vm3178
  %v3180 = vsel %vm3179, %v3172, %v3176
  %v3181 = vand.u32 2147483647, %v2720
  %vm3182 = vcmp.eq.f32.partialorder %v3181, 8.507059e+37
  %v3183 = vand.u32 %v2720, 2147483648
  %v3184 = vor.u32 1.1754944e-38, %v3183
  %v3185 = vsel %vm3182, %v3184, %v3180
  %v3186 = vmul.f32 1.0, %v3185
  %v3187 = vrcp.pop %v2721
  %v3188 = vmul.f32 %v2721, %v3187
  %v3189 = vsub.f32 1.0, %v3188
  %v3190 = vmul.f32 %v3187, %v3189
  %v3191 = vadd.f32 %v3187, %v3190
  %vm3192 = vweird.f32 %v2721
  %vm3193 = vweird.f32 %v3187
  %vm3194 = vmor %vm3192, %vm3193
  %v3195 = vsel %vm3194, %v3187, %v3191
  %v3196 = vand.u32 2147483647, %v2721
  %vm3197 = vcmp.eq.f32.partialorder %v3196, 8.507059e+37
  %v3198 = vand.u32 %v2721, 2147483648
  %v3199 = vor.u32 1.1754944e-38, %v3198
  %v3200 = vsel %vm3197, %v3199, %v3195
  %v3201 = vmul.f32 1.0, %v3200
  %v3202 = vmul.f32 %v2736, 1.0614054
  %v3203 = vmul.f32 %v2751, 1.0614054
  %v3204 = vmul.f32 %v2766, 1.0614054
  %v3205 = vmul.f32 %v2781, 1.0614054
  %v3206 = vmul.f32 %v2796, 1.0614054
  %v3207 = vmul.f32 %v2811, 1.0614054
  %v3208 = vmul.f32 %v2826, 1.0614054
  %v3209 = vmul.f32 %v2841, 1.0614054
  %v3210 = vmul.f32 %v2856, 1.0614054
  %v3211 = vmul.f32 %v2871, 1.0614054
  %v3212 = vmul.f32 %v2886, 1.0614054
  %v3213 = vmul.f32 %v2901, 1.0614054
  %v3214 = vmul.f32 %v2916, 1.0614054
  %v3215 = vmul.f32 %v2931, 1.0614054
  %v3216 = vmul.f32 %v2946, 1.0614054
  %v3217 = vmul.f32 %v2961, 1.0614054
  %v3218 = vmul.f32 %v2976, 1.0614054
  %v3219 = vmul.f32 %v2991, 1.0614054
  %v3220 = vmul.f32 %v3006, 1.0614054
  %v3221 = vmul.f32 %v3021, 1.0614054
  %v3222 = vmul.f32 %v3036, 1.0614054
  %v3223 = vmul.f32 %v3051, 1.0614054
  %v3224 = vmul.f32 %v3066, 1.0614054
  %v3225 = vmul.f32 %v3081, 1.0614054
  %v3226 = vmul.f32 %v3096, 1.0614054
  %v3227 = vmul.f32 %v3111, 1.0614054
  %v3228 = vmul.f32 %v3126, 1.0614054
  %v3229 = vmul.f32 %v3141, 1.0614054
  %v3230 = vmul.f32 %v3156, 1.0614054
  %v3231 = vmul.f32 %v3171, 1.0614054
  %v3232 = vmul.f32 %v3186, 1.0614054
  %v3233 = vmul.f32 %v3201, 1.0614054
  %v3234 = vadd.f32 %v3202, -1.4531521
  %v3235 = vadd.f32 %v3203, -1.4531521
  %v3236 = vadd.f32 %v3204, -1.4531521
  %v3237 = vadd.f32 %v3205, -1.4531521
  %v3238 = vadd.f32 %v3206, -1.4531521
  %v3239 = vadd.f32 %v3207, -1.4531521
  %v3240 = vadd.f32 %v3208, -1.4531521
  %v3241 = vadd.f32 %v3209, -1.4531521
  %v3242 = vadd.f32 %v3210, -1.4531521
  %v3243 = vadd.f32 %v3211, -1.4531521
  %v3244 = vadd.f32 %v3212, -1.4531521
  %v3245 = vadd.f32 %v3213, -1.4531521
  %v3246 = vadd.f32 %v3214, -1.4531521
  %v3247 = vadd.f32 %v3215, -1.4531521
  %v3248 = vadd.f32 %v3216, -1.4531521
  %v3249 = vadd.f32 %v3217, -1.4531521
  %v3250 = vadd.f32 %v3218, -1.4531521
  %v3251 = vadd.f32 %v3219, -1.4531521
  %v3252 = vadd.f32 %v3220, -1.4531521
  %v3253 = vadd.f32 %v3221, -1.4531521
  %v3254 = vadd.f32 %v3222, -1.4531521
  %v3255 = vadd.f32 %v3223, -1.4531521
  %v3256 = vadd.f32 %v3224, -1.4531521
  %v3257 = vadd.f32 %v3225, -1.4531521
  %v3258 = vadd.f32 %v3226, -1.4531521
  %v3259 = vadd.f32 %v3227, -1.4531521
  %v3260 = vadd.f32 %v3228, -1.4531521
  %v3261 = vadd.f32 %v3229, -1.4531521
  %v3262 = vadd.f32 %v3230, -1.4531521
  %v3263 = vadd.f32 %v3231, -1.4531521
  %v3264 = vadd.f32 %v3232, -1.4531521
  %v3265 = vadd.f32 %v3233, -1.4531521
  %v3266 = vmul.f32 %v2736, %v3234
  %v3267 = vmul.f32 %v2751, %v3235
  %v3268 = vmul.f32 %v2766, %v3236
  %v3269 = vmul.f32 %v2781, %v3237
  %v3270 = vmul.f32 %v2796, %v3238
  %v3271 = vmul.f32 %v2811, %v3239
  %v3272 = vmul.f32 %v2826, %v3240
  %v3273 = vmul.f32 %v2841, %v3241
  %v3274 = vmul.f32 %v2856, %v3242
  %v3275 = vmul.f32 %v2871, %v3243
  %v3276 = vmul.f32 %v2886, %v3244
  %v3277 = vmul.f32 %v2901, %v3245
  %v3278 = vmul.f32 %v2916, %v3246
  %v3279 = vmul.f32 %v2931, %v3247
  %v3280 = vmul.f32 %v2946, %v3248
  %v3281 = vmul.f32 %v2961, %v3249
  %v3282 = vmul.f32 %v2976, %v3250
  %v3283 = vmul.f32 %v2991, %v3251
  %v3284 = vmul.f32 %v3006, %v3252
  %v3285 = vmul.f32 %v3021, %v3253
  %v3286 = vmul.f32 %v3036, %v3254
  %v3287 = vmul.f32 %v3051, %v3255
  %v3288 = vmul.f32 %v3066, %v3256
  %v3289 = vmul.f32 %v3081, %v3257
  %v3290 = vmul.f32 %v3096, %v3258
  %v3291 = vmul.f32 %v3111, %v3259
  %v3292 = vmul.f32 %v3126, %v3260
  %v3293 = vmul.f32 %v3141, %v3261
  %v3294 = vmul.f32 %v3156, %v3262
  %v3295 = vmul.f32 %v3171, %v3263
  %v3296 = vmul.f32 %v3186, %v3264
  %v3297 = vmul.f32 %v3201, %v3265
  %v3298 = vadd.f32 %v3266, 1.4214138
  %v3299 = vadd.f32 %v3267, 1.4214138
  %v3300 = vadd.f32 %v3268, 1.4214138
  %v3301 = vadd.f32 %v3269, 1.4214138
  %v3302 = vadd.f32 %v3270, 1.4214138
  %v3303 = vadd.f32 %v3271, 1.4214138
  %v3304 = vadd.f32 %v3272, 1.4214138
  %v3305 = vadd.f32 %v3273, 1.4214138
  %v3306 = vadd.f32 %v3274, 1.4214138
  %v3307 = vadd.f32 %v3275, 1.4214138
  %v3308 = vadd.f32 %v3276, 1.4214138
  %v3309 = vadd.f32 %v3277, 1.4214138
  %v3310 = vadd.f32 %v3278, 1.4214138
  %v3311 = vadd.f32 %v3279, 1.4214138
  %v3312 = vadd.f32 %v3280, 1.4214138
  %v3313 = vadd.f32 %v3281, 1.4214138
  %v3314 = vadd.f32 %v3282, 1.4214138
  %v3315 = vadd.f32 %v3283, 1.4214138
  %v3316 = vadd.f32 %v3284, 1.4214138
  %v3317 = vadd.f32 %v3285, 1.4214138
  %v3318 = vadd.f32 %v3286, 1.4214138
  %v3319 = vadd.f32 %v3287, 1.4214138
  %v3320 = vadd.f32 %v3288, 1.4214138
  %v3321 = vadd.f32 %v3289, 1.4214138
  %v3322 = vadd.f32 %v3290, 1.4214138
  %v3323 = vadd.f32 %v3291, 1.4214138
  %v3324 = vadd.f32 %v3292, 1.4214138
  %v3325 = vadd.f32 %v3293, 1.4214138
  %v3326 = vadd.f32 %v3294, 1.4214138
  %v3327 = vadd.f32 %v3295, 1.4214138
  %v3328 = vadd.f32 %v3296, 1.4214138
  %v3329 = vadd.f32 %v3297, 1.4214138
  %v3330 = vmul.f32 %v2736, %v3298
  %v3331 = vmul.f32 %v2751, %v3299
  %v3332 = vmul.f32 %v2766, %v3300
  %v3333 = vmul.f32 %v2781, %v3301
  %v3334 = vmul.f32 %v2796, %v3302
  %v3335 = vmul.f32 %v2811, %v3303
  %v3336 = vmul.f32 %v2826, %v3304
  %v3337 = vmul.f32 %v2841, %v3305
  %v3338 = vmul.f32 %v2856, %v3306
  %v3339 = vmul.f32 %v2871, %v3307
  %v3340 = vmul.f32 %v2886, %v3308
  %v3341 = vmul.f32 %v2901, %v3309
  %v3342 = vmul.f32 %v2916, %v3310
  %v3343 = vmul.f32 %v2931, %v3311
  %v3344 = vmul.f32 %v2946, %v3312
  %v3345 = vmul.f32 %v2961, %v3313
  %v3346 = vmul.f32 %v2976, %v3314
  %v3347 = vmul.f32 %v2991, %v3315
  %v3348 = vmul.f32 %v3006, %v3316
  %v3349 = vmul.f32 %v3021, %v3317
  %v3350 = vmul.f32 %v3036, %v3318
  %v3351 = vmul.f32 %v3051, %v3319
  %v3352 = vmul.f32 %v3066, %v3320
  %v3353 = vmul.f32 %v3081, %v3321
  %v3354 = vmul.f32 %v3096, %v3322
  %v3355 = vmul.f32 %v3111, %v3323
  %v3356 = vmul.f32 %v3126, %v3324
  %v3357 = vmul.f32 %v3141, %v3325
  %v3358 = vmul.f32 %v3156, %v3326
  %v3359 = vmul.f32 %v3171, %v3327
  %v3360 = vmul.f32 %v3186, %v3328
  %v3361 = vmul.f32 %v3201, %v3329
  %v3362 = vadd.f32 %v3330, -0.28449672
  %v3363 = vadd.f32 %v3331, -0.28449672
  %v3364 = vadd.f32 %v3332, -0.28449672
  %v3365 = vadd.f32 %v3333, -0.28449672
  %v3366 = vadd.f32 %v3334, -0.28449672
  %v3367 = vadd.f32 %v3335, -0.28449672
  %v3368 = vadd.f32 %v3336, -0.28449672
  %v3369 = vadd.f32 %v3337, -0.28449672
  %v3370 = vadd.f32 %v3338, -0.28449672
  %v3371 = vadd.f32 %v3339, -0.28449672
  %v3372 = vadd.f32 %v3340, -0.28449672
  %v3373 = vadd.f32 %v3341, -0.28449672
  %v3374 = vadd.f32 %v3342, -0.28449672
  %v3375 = vadd.f32 %v3343, -0.28449672
  %v3376 = vadd.f32 %v3344, -0.28449672
  %v3377 = vadd.f32 %v3345, -0.28449672
  %v3378 = vadd.f32 %v3346, -0.28449672
  %v3379 = vadd.f32 %v3347, -0.28449672
  %v3380 = vadd.f32 %v3348, -0.28449672
  %v3381 = vadd.f32 %v3349, -0.28449672
  %v3382 = vadd.f32 %v3350, -0.28449672
  %v3383 = vadd.f32 %v3351, -0.28449672
  %v3384 = vadd.f32 %v3352, -0.28449672
  %v3385 = vadd.f32 %v3353, -0.28449672
  %v3386 = vadd.f32 %v3354, -0.28449672
  %v3387 = vadd.f32 %v3355, -0.28449672
  %v3388 = vadd.f32 %v3356, -0.28449672
  %v3389 = vadd.f32 %v3357, -0.28449672
  %v3390 = vadd.f32 %v3358, -0.28449672
  %v3391 = vadd.f32 %v3359, -0.28449672
  %v3392 = vadd.f32 %v3360, -0.28449672
  %v3393 = vadd.f32 %v3361, -0.28449672
  %v3394 = vmul.f32 %v2736, %v3362
  %v3395 = vmul.f32 %v2751, %v3363
  %v3396 = vmul.f32 %v2766, %v3364
  %v3397 = vmul.f32 %v2781, %v3365
  %v3398 = vmul.f32 %v2796, %v3366
  %v3399 = vmul.f32 %v2811, %v3367
  %v3400 = vmul.f32 %v2826, %v3368
  %v3401 = vmul.f32 %v2841, %v3369
  %v3402 = vmul.f32 %v2856, %v3370
  %v3403 = vmul.f32 %v2871, %v3371
  %v3404 = vmul.f32 %v2886, %v3372
  %v3405 = vmul.f32 %v2901, %v3373
  %v3406 = vmul.f32 %v2916, %v3374
  %v3407 = vmul.f32 %v2931, %v3375
  %v3408 = vmul.f32 %v2946, %v3376
  %v3409 = vmul.f32 %v2961, %v3377
  %v3410 = vmul.f32 %v2976, %v3378
  %v3411 = vmul.f32 %v2991, %v3379
  %v3412 = vmul.f32 %v3006, %v3380
  %v3413 = vmul.f32 %v3021, %v3381
  %v3414 = vmul.f32 %v3036, %v3382
  %v3415 = vmul.f32 %v3051, %v3383
  %v3416 = vmul.f32 %v3066, %v3384
  %v3417 = vmul.f32 %v3081, %v3385
  %v3418 = vmul.f32 %v3096, %v3386
  %v3419 = vmul.f32 %v3111, %v3387
  %v3420 = vmul.f32 %v3126, %v3388
  %v3421 = vmul.f32 %v3141, %v3389
  %v3422 = vmul.f32 %v3156, %v3390
  %v3423 = vmul.f32 %v3171, %v3391
  %v3424 = vmul.f32 %v3186, %v3392
  %v3425 = vmul.f32 %v3201, %v3393
  %v3426 = vadd.f32 %v3394, 0.2548296
  %v3427 = vadd.f32 %v3395, 0.2548296
  %v3428 = vadd.f32 %v3396, 0.2548296
  %v3429 = vadd.f32 %v3397, 0.2548296
  %v3430 = vadd.f32 %v3398, 0.2548296
  %v3431 = vadd.f32 %v3399, 0.2548296
  %v3432 = vadd.f32 %v3400, 0.2548296
  %v3433 = vadd.f32 %v3401, 0.2548296
  %v3434 = vadd.f32 %v3402, 0.2548296
  %v3435 = vadd.f32 %v3403, 0.2548296
  %v3436 = vadd.f32 %v3404, 0.2548296
  %v3437 = vadd.f32 %v3405, 0.2548296
  %v3438 = vadd.f32 %v3406, 0.2548296
  %v3439 = vadd.f32 %v3407, 0.2548296
  %v3440 = vadd.f32 %v3408, 0.2548296
  %v3441 = vadd.f32 %v3409, 0.2548296
  %v3442 = vadd.f32 %v3410, 0.2548296
  %v3443 = vadd.f32 %v3411, 0.2548296
  %v3444 = vadd.f32 %v3412, 0.2548296
  %v3445 = vadd.f32 %v3413, 0.2548296
  %v3446 = vadd.f32 %v3414, 0.2548296
  %v3447 = vadd.f32 %v3415, 0.2548296
  %v3448 = vadd.f32 %v3416, 0.2548296
  %v3449 = vadd.f32 %v3417, 0.2548296
  %v3450 = vadd.f32 %v3418, 0.2548296
  %v3451 = vadd.f32 %v3419, 0.2548296
  %v3452 = vadd.f32 %v3420, 0.2548296
  %v3453 = vadd.f32 %v3421, 0.2548296
  %v3454 = vadd.f32 %v3422, 0.2548296
  %v3455 = vadd.f32 %v3423, 0.2548296
  %v3456 = vadd.f32 %v3424, 0.2548296
  %v3457 = vadd.f32 %v3425, 0.2548296
  %v3458 = vmul.f32 %v2736, %v3426
  %v3459 = vmul.f32 %v2751, %v3427
  %v3460 = vmul.f32 %v2766, %v3428
  %v3461 = vmul.f32 %v2781, %v3429
  %v3462 = vmul.f32 %v2796, %v3430
  %v3463 = vmul.f32 %v2811, %v3431
  %v3464 = vmul.f32 %v2826, %v3432
  %v3465 = vmul.f32 %v2841, %v3433
  %v3466 = vmul.f32 %v2856, %v3434
  %v3467 = vmul.f32 %v2871, %v3435
  %v3468 = vmul.f32 %v2886, %v3436
  %v3469 = vmul.f32 %v2901, %v3437
  %v3470 = vmul.f32 %v2916, %v3438
  %v3471 = vmul.f32 %v2931, %v3439
  %v3472 = vmul.f32 %v2946, %v3440
  %v3473 = vmul.f32 %v2961, %v3441
  %v3474 = vmul.f32 %v2976, %v3442
  %v3475 = vmul.f32 %v2991, %v3443
  %v3476 = vmul.f32 %v3006, %v3444
  %v3477 = vmul.f32 %v3021, %v3445
  %v3478 = vmul.f32 %v3036, %v3446
  %v3479 = vmul.f32 %v3051, %v3447
  %v3480 = vmul.f32 %v3066, %v3448
  %v3481 = vmul.f32 %v3081, %v3449
  %v3482 = vmul.f32 %v3096, %v3450
  %v3483 = vmul.f32 %v3111, %v3451
  %v3484 = vmul.f32 %v3126, %v3452
  %v3485 = vmul.f32 %v3141, %v3453
  %v3486 = vmul.f32 %v3156, %v3454
  %v3487 = vmul.f32 %v3171, %v3455
  %v3488 = vmul.f32 %v3186, %v3456
  %v3489 = vmul.f32 %v3201, %v3457
  %v3490 = vsub.f32 0.0, %v2626
  %v3491 = vsub.f32 0.0, %v2627
  %v3492 = vsub.f32 0.0, %v2628
  %v3493 = vsub.f32 0.0, %v2629
  %v3494 = vsub.f32 0.0, %v2630
  %v3495 = vsub.f32 0.0, %v2631
  %v3496 = vsub.f32 0.0, %v2632
  %v3497 = vsub.f32 0.0, %v2633
  %v3498 = vsub.f32 0.0, %v2634
  %v3499 = vsub.f32 0.0, %v2635
  %v3500 = vsub.f32 0.0, %v2636
  %v3501 = vsub.f32 0.0, %v2637
  %v3502 = vsub.f32 0.0, %v2638
  %v3503 = vsub.f32 0.0, %v2639
  %v3504 = vsub.f32 0.0, %v2640
  %v3505 = vsub.f32 0.0, %v2641
  %v3506 = vsub.f32 0.0, %v2642
  %v3507 = vsub.f32 0.0, %v2643
  %v3508 = vsub.f32 0.0, %v2644
  %v3509 = vsub.f32 0.0, %v2645
  %v3510 = vsub.f32 0.0, %v2646
  %v3511 = vsub.f32 0.0, %v2647
  %v3512 = vsub.f32 0.0, %v2648
  %v3513 = vsub.f32 0.0, %v2649
  %v3514 = vsub.f32 0.0, %v2650
  %v3515 = vsub.f32 0.0, %v2651
  %v3516 = vsub.f32 0.0, %v2652
  %v3517 = vsub.f32 0.0, %v2653
  %v3518 = vsub.f32 0.0, %v2654
  %v3519 = vsub.f32 0.0, %v2655
  %v3520 = vsub.f32 0.0, %v2656
  %v3521 = vsub.f32 0.0, %v2657
  %v3522 = vmul.f32 %v3490, %v2626
  %v3523 = vmul.f32 %v3491, %v2627
  %v3524 = vmul.f32 %v3492, %v2628
  %v3525 = vmul.f32 %v3493, %v2629
  %v3526 = vmul.f32 %v3494, %v2630
  %v3527 = vmul.f32 %v3495, %v2631
  %v3528 = vmul.f32 %v3496, %v2632
  %v3529 = vmul.f32 %v3497, %v2633
  %v3530 = vmul.f32 %v3498, %v2634
  %v3531 = vmul.f32 %v3499, %v2635
  %v3532 = vmul.f32 %v3500, %v2636
  %v3533 = vmul.f32 %v3501, %v2637
  %v3534 = vmul.f32 %v3502, %v2638
  %v3535 = vmul.f32 %v3503, %v2639
  %v3536 = vmul.f32 %v3504, %v2640
  %v3537 = vmul.f32 %v3505, %v2641
  %v3538 = vmul.f32 %v3506, %v2642
  %v3539 = vmul.f32 %v3507, %v2643
  %v3540 = vmul.f32 %v3508, %v2644
  %v3541 = vmul.f32 %v3509, %v2645
  %v3542 = vmul.f32 %v3510, %v2646
  %v3543 = vmul.f32 %v3511, %v2647
  %v3544 = vmul.f32 %v3512, %v2648
  %v3545 = vmul.f32 %v3513, %v2649
  %v3546 = vmul.f32 %v3514, %v2650
  %v3547 = vmul.f32 %v3515, %v2651
  %v3548 = vmul.f32 %v3516, %v2652
  %v3549 = vmul.f32 %v3517, %v2653
  %v3550 = vmul.f32 %v3518, %v2654
  %v3551 = vmul.f32 %v3519, %v2655
  %v3552 = vmul.f32 %v3520, %v2656
  %v3553 = vmul.f32 %v3521, %v2657
  %v3554 = vmul.f32 %v3522, 1.442695
  %v3555 = vpow.pop %v3554
  %v3556 = vmul.f32 %v3523, 1.442695
  %v3557 = vpow.pop %v3556
  %v3558 = vmul.f32 %v3524, 1.442695
  %v3559 = vpow.pop %v3558
  %v3560 = vmul.f32 %v3525, 1.442695
  %v3561 = vpow.pop %v3560
  %v3562 = vmul.f32 %v3526, 1.442695
  %v3563 = vpow.pop %v3562
  %v3564 = vmul.f32 %v3527, 1.442695
  %v3565 = vpow.pop %v3564
  %v3566 = vmul.f32 %v3528, 1.442695
  %v3567 = vpow.pop %v3566
  %v3568 = vmul.f32 %v3529, 1.442695
  %v3569 = vpow.pop %v3568
  %v3570 = vmul.f32 %v3530, 1.442695
  %v3571 = vpow.pop %v3570
  %v3572 = vmul.f32 %v3531, 1.442695
  %v3573 = vpow.pop %v3572
  %v3574 = vmul.f32 %v3532, 1.442695
  %v3575 = vpow.pop %v3574
  %v3576 = vmul.f32 %v3533, 1.442695
  %v3577 = vpow.pop %v3576
  %v3578 = vmul.f32 %v3534, 1.442695
  %v3579 = vpow.pop %v3578
  %v3580 = vmul.f32 %v3535, 1.442695
  %v3581 = vpow.pop %v3580
  %v3582 = vmul.f32 %v3536, 1.442695
  %v3583 = vpow.pop %v3582
  %v3584 = vmul.f32 %v3537, 1.442695
  %v3585 = vpow.pop %v3584
  %v3586 = vmul.f32 %v3538, 1.442695
  %v3587 = vpow.pop %v3586
  %v3588 = vmul.f32 %v3539, 1.442695
  %v3589 = vpow.pop %v3588
  %v3590 = vmul.f32 %v3540, 1.442695
  %v3591 = vpow.pop %v3590
  %v3592 = vmul.f32 %v3541, 1.442695
  %v3593 = vpow.pop %v3592
  %v3594 = vmul.f32 %v3542, 1.442695
  %v3595 = vpow.pop %v3594
  %v3596 = vmul.f32 %v3543, 1.442695
  %v3597 = vpow.pop %v3596
  %v3598 = vmul.f32 %v3544, 1.442695
  %v3599 = vpow.pop %v3598
  %v3600 = vmul.f32 %v3545, 1.442695
  %v3601 = vpow.pop %v3600
  %v3602 = vmul.f32 %v3546, 1.442695
  %v3603 = vpow.pop %v3602
  %v3604 = vmul.f32 %v3547, 1.442695
  %v3605 = vpow.pop %v3604
  %v3606 = vmul.f32 %v3548, 1.442695
  %v3607 = vpow.pop %v3606
  %v3608 = vmul.f32 %v3549, 1.442695
  %v3609 = vpow.pop %v3608
  %v3610 = vmul.f32 %v3550, 1.442695
  %v3611 = vpow.pop %v3610
  %v3612 = vmul.f32 %v3551, 1.442695
  %v3613 = vpow.pop %v3612
  %v3614 = vmul.f32 %v3552, 1.442695
  %v3615 = vpow.pop %v3614
  %v3616 = vmul.f32 %v3553, 1.442695
  %v3617 = vpow.pop %v3616
  %v3618 = vmul.f32 %v3458, %v3555
  %v3619 = vmul.f32 %v3459, %v3557
  %v3620 = vmul.f32 %v3460, %v3559
  %v3621 = vmul.f32 %v3461, %v3561
  %v3622 = vmul.f32 %v3462, %v3563
  %v3623 = vmul.f32 %v3463, %v3565
  %v3624 = vmul.f32 %v3464, %v3567
  %v3625 = vmul.f32 %v3465, %v3569
  %v3626 = vmul.f32 %v3466, %v3571
  %v3627 = vmul.f32 %v3467, %v3573
  %v3628 = vmul.f32 %v3468, %v3575
  %v3629 = vmul.f32 %v3469, %v3577
  %v3630 = vmul.f32 %v3470, %v3579
  %v3631 = vmul.f32 %v3471, %v3581
  %v3632 = vmul.f32 %v3472, %v3583
  %v3633 = vmul.f32 %v3473, %v3585
  %v3634 = vmul.f32 %v3474, %v3587
  %v3635 = vmul.f32 %v3475, %v3589
  %v3636 = vmul.f32 %v3476, %v3591
  %v3637 = vmul.f32 %v3477, %v3593
  %v3638 = vmul.f32 %v3478, %v3595
  %v3639 = vmul.f32 %v3479, %v3597
  %v3640 = vmul.f32 %v3480, %v3599
  %v3641 = vmul.f32 %v3481, %v3601
  %v3642 = vmul.f32 %v3482, %v3603
  %v3643 = vmul.f32 %v3483, %v3605
  %v3644 = vmul.f32 %v3484, %v3607
  %v3645 = vmul.f32 %v3485, %v3609
  %v3646 = vmul.f32 %v3486, %v3611
  %v3647 = vmul.f32 %v3487, %v3613
  %v3648 = vmul.f32 %v3488, %v3615
  %v3649 = vmul.f32 %v3489, %v3617
  %v3650 = vsub.f32 1.0, %v3618
  %v3651 = vsub.f32 1.0, %v3619
  %v3652 = vsub.f32 1.0, %v3620
  %v3653 = vsub.f32 1.0, %v3621
  %v3654 = vsub.f32 1.0, %v3622
  %v3655 = vsub.f32 1.0, %v3623
  %v3656 = vsub.f32 1.0, %v3624
  %v3657 = vsub.f32 1.0, %v3625
  %v3658 = vsub.f32 1.0, %v3626
  %v3659 = vsub.f32 1.0, %v3627
  %v3660 = vsub.f32 1.0, %v3628
  %v3661 = vsub.f32 1.0, %v3629
  %v3662 = vsub.f32 1.0, %v3630
  %v3663 = vsub.f32 1.0, %v3631
  %v3664 = vsub.f32 1.0, %v3632
  %v3665 = vsub.f32 1.0, %v3633
  %v3666 = vsub.f32 1.0, %v3634
  %v3667 = vsub.f32 1.0, %v3635
  %v3668 = vsub.f32 1.0, %v3636
  %v3669 = vsub.f32 1.0, %v3637
  %v3670 = vsub.f32 1.0, %v3638
  %v3671 = vsub.f32 1.0, %v3639
  %v3672 = vsub.f32 1.0, %v3640
  %v3673 = vsub.f32 1.0, %v3641
  %v3674 = vsub.f32 1.0, %v3642
  %v3675 = vsub.f32 1.0, %v3643
  %v3676 = vsub.f32 1.0, %v3644
  %v3677 = vsub.f32 1.0, %v3645
  %v3678 = vsub.f32 1.0, %v3646
  %v3679 = vsub.f32 1.0, %v3647
  %v3680 = vsub.f32 1.0, %v3648
  %v3681 = vsub.f32 1.0, %v3649
  %vm3682 = vcmp.lt.f32.partialorder %v2594, 0.0
  %vm3683 = vcmp.lt.f32.partialorder %v2595, 0.0
  %vm3684 = vcmp.lt.f32.partialorder %v2596, 0.0
  %vm3685 = vcmp.lt.f32.partialorder %v2597, 0.0
  %vm3686 = vcmp.lt.f32.partialorder %v2598, 0.0
  %vm3687 = vcmp.lt.f32.partialorder %v2599, 0.0
  %vm3688 = vcmp.lt.f32.partialorder %v2600, 0.0
  %vm3689 = vcmp.lt.f32.partialorder %v2601, 0.0
  %vm3690 = vcmp.lt.f32.partialorder %v2602, 0.0
  %vm3691 = vcmp.lt.f32.partialorder %v2603, 0.0
  %vm3692 = vcmp.lt.f32.partialorder %v2604, 0.0
  %vm3693 = vcmp.lt.f32.partialorder %v2605, 0.0
  %vm3694 = vcmp.lt.f32.partialorder %v2606, 0.0
  %vm3695 = vcmp.lt.f32.partialorder %v2607, 0.0
  %vm3696 = vcmp.lt.f32.partialorder %v2608, 0.0
  %vm3697 = vcmp.lt.f32.partialorder %v2609, 0.0
  %vm3698 = vcmp.lt.f32.partialorder %v2610, 0.0
  %vm3699 = vcmp.lt.f32.partialorder %v2611, 0.0
  %vm3700 = vcmp.lt.f32.partialorder %v2612, 0.0
  %vm3701 = vcmp.lt.f32.partialorder %v2613, 0.0
  %vm3702 = vcmp.lt.f32.partialorder %v2614, 0.0
  %vm3703 = vcmp.lt.f32.partialorder %v2615, 0.0
  %vm3704 = vcmp.lt.f32.partialorder %v2616, 0.0
  %vm3705 = vcmp.lt.f32.partialorder %v2617, 0.0
  %vm3706 = vcmp.lt.f32.partialorder %v2618, 0.0
  %vm3707 = vcmp.lt.f32.partialorder %v2619, 0.0
  %vm3708 = vcmp.lt.f32.partialorder %v2620, 0.0
  %vm3709 = vcmp.lt.f32.partialorder %v2621, 0.0
  %vm3710 = vcmp.lt.f32.partialorder %v2622, 0.0
  %vm3711 = vcmp.lt.f32.partialorder %v2623, 0.0
  %vm3712 = vcmp.lt.f32.partialorder %v2624, 0.0
  %vm3713 = vcmp.lt.f32.partialorder %v2625, 0.0
  %v3714 = vsub.f32 0.0, %v3650
  %v3715 = vsub.f32 0.0, %v3651
  %v3716 = vsub.f32 0.0, %v3652
  %v3717 = vsub.f32 0.0, %v3653
  %v3718 = vsub.f32 0.0, %v3654
  %v3719 = vsub.f32 0.0, %v3655
  %v3720 = vsub.f32 0.0, %v3656
  %v3721 = vsub.f32 0.0, %v3657
  %v3722 = vsub.f32 0.0, %v3658
  %v3723 = vsub.f32 0.0, %v3659
  %v3724 = vsub.f32 0.0, %v3660
  %v3725 = vsub.f32 0.0, %v3661
  %v3726 = vsub.f32 0.0, %v3662
  %v3727 = vsub.f32 0.0, %v3663
  %v3728 = vsub.f32 0.0, %v3664
  %v3729 = vsub.f32 0.0, %v3665
  %v3730 = vsub.f32 0.0, %v3666
  %v3731 = vsub.f32 0.0, %v3667
  %v3732 = vsub.f32 0.0, %v3668
  %v3733 = vsub.f32 0.0, %v3669
  %v3734 = vsub.f32 0.0, %v3670
  %v3735 = vsub.f32 0.0, %v3671
  %v3736 = vsub.f32 0.0, %v3672
  %v3737 = vsub.f32 0.0, %v3673
  %v3738 = vsub.f32 0.0, %v3674
  %v3739 = vsub.f32 0.0, %v3675
  %v3740 = vsub.f32 0.0, %v3676
  %v3741 = vsub.f32 0.0, %v3677
  %v3742 = vsub.f32 0.0, %v3678
  %v3743 = vsub.f32 0.0, %v3679
  %v3744 = vsub.f32 0.0, %v3680
  %v3745 = vsub.f32 0.0, %v3681
  %v3746 = vsel %vm3682, %v3714, %v3650
  %v3747 = vsel %vm3683, %v3715, %v3651
  %v3748 = vsel %vm3684, %v3716, %v3652
  %v3749 = vsel %vm3685, %v3717, %v3653
  %v3750 = vsel %vm3686, %v3718, %v3654
  %v3751 = vsel %vm3687, %v3719, %v3655
  %v3752 = vsel %vm3688, %v3720, %v3656
  %v3753 = vsel %vm3689, %v3721, %v3657
  %v3754 = vsel %vm3690, %v3722, %v3658
  %v3755 = vsel %vm3691, %v3723, %v3659
  %v3756 = vsel %vm3692, %v3724, %v3660
  %v3757 = vsel %vm3693, %v3725, %v3661
  %v3758 = vsel %vm3694, %v3726, %v3662
  %v3759 = vsel %vm3695, %v3727, %v3663
  %v3760 = vsel %vm3696, %v3728, %v3664
  %v3761 = vsel %vm3697, %v3729, %v3665
  %v3762 = vsel %vm3698, %v3730, %v3666
  %v3763 = vsel %vm3699, %v3731, %v3667
  %v3764 = vsel %vm3700, %v3732, %v3668
  %v3765 = vsel %vm3701, %v3733, %v3669
  %v3766 = vsel %vm3702, %v3734, %v3670
  %v3767 = vsel %vm3703, %v3735, %v3671
  %v3768 = vsel %vm3704, %v3736, %v3672
  %v3769 = vsel %vm3705, %v3737, %v3673
  %v3770 = vsel %vm3706, %v3738, %v3674
  %v3771 = vsel %vm3707, %v3739, %v3675
  %v3772 = vsel %vm3708, %v3740, %v3676
  %v3773 = vsel %vm3709, %v3741, %v3677
  %v3774 = vsel %vm3710, %v3742, %v3678
  %v3775 = vsel %vm3711, %v3743, %v3679
  %v3776 = vsel %vm3712, %v3744, %v3680
  %v3777 = vsel %vm3713, %v3745, %v3681
  %v3778 = vmul.f32 %v2562, 0.5
  %v3779 = vmul.f32 %v2563, 0.5
  %v3780 = vmul.f32 %v2564, 0.5
  %v3781 = vmul.f32 %v2565, 0.5
  %v3782 = vmul.f32 %v2566, 0.5
  %v3783 = vmul.f32 %v2567, 0.5
  %v3784 = vmul.f32 %v2568, 0.5
  %v3785 = vmul.f32 %v2569, 0.5
  %v3786 = vmul.f32 %v2570, 0.5
  %v3787 = vmul.f32 %v2571, 0.5
  %v3788 = vmul.f32 %v2572, 0.5
  %v3789 = vmul.f32 %v2573, 0.5
  %v3790 = vmul.f32 %v2574, 0.5
  %v3791 = vmul.f32 %v2575, 0.5
  %v3792 = vmul.f32 %v2576, 0.5
  %v3793 = vmul.f32 %v2577, 0.5
  %v3794 = vmul.f32 %v2578, 0.5
  %v3795 = vmul.f32 %v2579, 0.5
  %v3796 = vmul.f32 %v2580, 0.5
  %v3797 = vmul.f32 %v2581, 0.5
  %v3798 = vmul.f32 %v2582, 0.5
  %v3799 = vmul.f32 %v2583, 0.5
  %v3800 = vmul.f32 %v2584, 0.5
  %v3801 = vmul.f32 %v2585, 0.5
  %v3802 = vmul.f32 %v2586, 0.5
  %v3803 = vmul.f32 %v2587, 0.5
  %v3804 = vmul.f32 %v2588, 0.5
  %v3805 = vmul.f32 %v2589, 0.5
  %v3806 = vmul.f32 %v2590, 0.5
  %v3807 = vmul.f32 %v2591, 0.5
  %v3808 = vmul.f32 %v2592, 0.5
  %v3809 = vmul.f32 %v2593, 0.5
  %v3810 = vadd.f32 %v3746, 1.0
  %v3811 = vadd.f32 %v3747, 1.0
  %v3812 = vadd.f32 %v3748, 1.0
  %v3813 = vadd.f32 %v3749, 1.0
  %v3814 = vadd.f32 %v3750, 1.0
  %v3815 = vadd.f32 %v3751, 1.0
  %v3816 = vadd.f32 %v3752, 1.0
  %v3817 = vadd.f32 %v3753, 1.0
  %v3818 = vadd.f32 %v3754, 1.0
  %v3819 = vadd.f32 %v3755, 1.0
  %v3820 = vadd.f32 %v3756, 1.0
  %v3821 = vadd.f32 %v3757, 1.0
  %v3822 = vadd.f32 %v3758, 1.0
  %v3823 = vadd.f32 %v3759, 1.0
  %v3824 = vadd.f32 %v3760, 1.0
  %v3825 = vadd.f32 %v3761, 1.0
  %v3826 = vadd.f32 %v3762, 1.0
  %v3827 = vadd.f32 %v3763, 1.0
  %v3828 = vadd.f32 %v3764, 1.0
  %v3829 = vadd.f32 %v3765, 1.0
  %v3830 = vadd.f32 %v3766, 1.0
  %v3831 = vadd.f32 %v3767, 1.0
  %v3832 = vadd.f32 %v3768, 1.0
  %v3833 = vadd.f32 %v3769, 1.0
  %v3834 = vadd.f32 %v3770, 1.0
  %v3835 = vadd.f32 %v3771, 1.0
  %v3836 = vadd.f32 %v3772, 1.0
  %v3837 = vadd.f32 %v3773, 1.0
  %v3838 = vadd.f32 %v3774, 1.0
  %v3839 = vadd.f32 %v3775, 1.0
  %v3840 = vadd.f32 %v3776, 1.0
  %v3841 = vadd.f32 %v3777, 1.0
  %v3842 = vmul.f32 %v3778, %v3810
  %v3843 = vmul.f32 %v3779, %v3811
  %v3844 = vmul.f32 %v3780, %v3812
  %v3845 = vmul.f32 %v3781, %v3813
  %v3846 = vmul.f32 %v3782, %v3814
  %v3847 = vmul.f32 %v3783, %v3815
  %v3848 = vmul.f32 %v3784, %v3816
  %v3849 = vmul.f32 %v3785, %v3817
  %v3850 = vmul.f32 %v3786, %v3818
  %v3851 = vmul.f32 %v3787, %v3819
  %v3852 = vmul.f32 %v3788, %v3820
  %v3853 = vmul.f32 %v3789, %v3821
  %v3854 = vmul.f32 %v3790, %v3822
  %v3855 = vmul.f32 %v3791, %v3823
  %v3856 = vmul.f32 %v3792, %v3824
  %v3857 = vmul.f32 %v3793, %v3825
  %v3858 = vmul.f32 %v3794, %v3826
  %v3859 = vmul.f32 %v3795, %v3827
  %v3860 = vmul.f32 %v3796, %v3828
  %v3861 = vmul.f32 %v3797, %v3829
  %v3862 = vmul.f32 %v3798, %v3830
  %v3863 = vmul.f32 %v3799, %v3831
  %v3864 = vmul.f32 %v3800, %v3832
  %v3865 = vmul.f32 %v3801, %v3833
  %v3866 = vmul.f32 %v3802, %v3834
  %v3867 = vmul.f32 %v3803, %v3835
  %v3868 = vmul.f32 %v3804, %v3836
  %v3869 = vmul.f32 %v3805, %v3837
  %v3870 = vmul.f32 %v3806, %v3838
  %v3871 = vmul.f32 %v3807, %v3839
  %v3872 = vmul.f32 %v3808, %v3840
  %v3873 = vmul.f32 %v3809, %v3841
  %v3874 = vpack.c.bf16 %v3843, %v3842
  %v3875 = vpack.c.bf16 %v3845, %v3844
  %v3876 = vpack.c.bf16 %v3847, %v3846
  %v3877 = vpack.c.bf16 %v3849, %v3848
  %v3878 = vpack.c.bf16 %v3851, %v3850
  %v3879 = vpack.c.bf16 %v3853, %v3852
  %v3880 = vpack.c.bf16 %v3855, %v3854
  %v3881 = vpack.c.bf16 %v3857, %v3856
  %v3882 = vpack.c.bf16 %v3859, %v3858
  %v3883 = vpack.c.bf16 %v3861, %v3860
  %v3884 = vpack.c.bf16 %v3863, %v3862
  %v3885 = vpack.c.bf16 %v3865, %v3864
  %v3886 = vpack.c.bf16 %v3867, %v3866
  %v3887 = vpack.c.bf16 %v3869, %v3868
  %v3888 = vpack.c.bf16 %v3871, %v3870
  %v3889 = vpack.c.bf16 %v3873, %v3872
  %v3890 = vld [vmem:[%s5] sm:$0xf]
  %v3891 = vld [vmem:[%s5 + $0x4] sm:$0xf]
  %v3892 = vld [vmem:[%s5 + $0x8] sm:$0xf]
  %v3893 = vld [vmem:[%s5 + $0xc] sm:$0xf]
  %v3894 = vld [vmem:[%s5 + $0x10] sm:$0xf]
  %v3895 = vld [vmem:[%s5 + $0x14] sm:$0xf]
  %v3896 = vld [vmem:[%s5 + $0x18] sm:$0xf]
  %v3897 = vld [vmem:[%s5 + $0x1c] sm:$0xf]
  %v3898 = vld [vmem:[%s5 + $0x20] sm:$0xf]
  %v3899 = vld [vmem:[%s5 + $0x24] sm:$0xf]
  %v3900 = vld [vmem:[%s5 + $0x28] sm:$0xf]
  %v3901 = vld [vmem:[%s5 + $0x2c] sm:$0xf]
  %v3902 = vld [vmem:[%s5 + $0x30] sm:$0xf]
  %v3903 = vld [vmem:[%s5 + $0x34] sm:$0xf]
  %v3904 = vld [vmem:[%s5 + $0x38] sm:$0xf]
  %v3905 = vld [vmem:[%s5 + $0x3c] sm:$0xf]
  %v3906 = vld [vmem:[%s6] sm:$0x1]
  %v3908 = vperm.slane %v3906, 0
  %v3926 = vunpack.c.l.b16 %v3890
  %v3927 = vunpack.c.l.b16 %v3891
  %v3928 = vunpack.c.l.b16 %v3892
  %v3929 = vunpack.c.l.b16 %v3893
  %v3930 = vunpack.c.l.b16 %v3894
  %v3931 = vunpack.c.l.b16 %v3895
  %v3932 = vunpack.c.l.b16 %v3896
  %v3933 = vunpack.c.l.b16 %v3897
  %v3934 = vunpack.c.l.b16 %v3898
  %v3935 = vunpack.c.l.b16 %v3899
  %v3936 = vunpack.c.l.b16 %v3900
  %v3937 = vunpack.c.l.b16 %v3901
  %v3938 = vunpack.c.l.b16 %v3902
  %v3939 = vunpack.c.l.b16 %v3903
  %v3940 = vunpack.c.l.b16 %v3904
  %v3941 = vunpack.c.l.b16 %v3905
  %v3942 = vpack.c.b16 %v3927, %v3926
  %v3943 = vpack.c.b16 %v3929, %v3928
  %v3944 = vpack.c.b16 %v3931, %v3930
  %v3945 = vpack.c.b16 %v3933, %v3932
  %v3946 = vpack.c.b16 %v3935, %v3934
  %v3947 = vpack.c.b16 %v3937, %v3936
  %v3948 = vpack.c.b16 %v3939, %v3938
  %v3949 = vpack.c.b16 %v3941, %v3940
  %3958 = vmatpush.bf16.msra.mxu0 %v3949
  %3959 = vmatpush.bf16.msra.mxu0 %v3948
  %3960 = vmatpush.bf16.msra.mxu0 %v3947
  %3961 = vmatpush.bf16.msra.mxu0 %v3946
  %3962 = vmatpush.bf16.msra.mxu0 %v3945
  %3963 = vmatpush.bf16.msra.mxu0 %v3944
  %3964 = vmatpush.bf16.msra.mxu0 %v3943
  %3965 = vmatpush.bf16.msra.mxu0 %v3942
  %3966 = vmatmul.bf16.gmra.mxu0 %v3874
  %v3967 = vpop.f32.mrf.mxu0
  %v3968 = vadd.f32 %v3908, %v3967
  %v3969 = vpop.f32.mrf.mxu0
  %v3970 = vadd.f32 %v3908, %v3969
  %3971 = vmatmul.bf16.gmra.mxu0 %v3875
  %v3972 = vpop.f32.mrf.mxu0
  %v3973 = vadd.f32 %v3908, %v3972
  %v3974 = vpop.f32.mrf.mxu0
  %v3975 = vadd.f32 %v3908, %v3974
  %3976 = vmatmul.bf16.gmra.mxu0 %v3876
  %v3977 = vpop.f32.mrf.mxu0
  %v3978 = vadd.f32 %v3908, %v3977
  %v3979 = vpop.f32.mrf.mxu0
  %v3980 = vadd.f32 %v3908, %v3979
  %3981 = vmatmul.bf16.gmra.mxu0 %v3877
  %v3982 = vpop.f32.mrf.mxu0
  %v3983 = vadd.f32 %v3908, %v3982
  %v3984 = vpop.f32.mrf.mxu0
  %v3985 = vadd.f32 %v3908, %v3984
  %3986 = vmatmul.bf16.gmra.mxu0 %v3878
  %v3987 = vpop.f32.mrf.mxu0
  %v3988 = vadd.f32 %v3908, %v3987
  %v3989 = vpop.f32.mrf.mxu0
  %v3990 = vadd.f32 %v3908, %v3989
  %3991 = vmatmul.bf16.gmra.mxu0 %v3879
  %v3992 = vpop.f32.mrf.mxu0
  %v3993 = vadd.f32 %v3908, %v3992
  %v3994 = vpop.f32.mrf.mxu0
  %v3995 = vadd.f32 %v3908, %v3994
  %3996 = vmatmul.bf16.gmra.mxu0 %v3880
  %v3997 = vpop.f32.mrf.mxu0
  %v3998 = vadd.f32 %v3908, %v3997
  %v3999 = vpop.f32.mrf.mxu0
  %v4000 = vadd.f32 %v3908, %v3999
  %4001 = vmatmul.bf16.gmra.mxu0 %v3881
  %v4002 = vpop.f32.mrf.mxu0
  %v4003 = vadd.f32 %v3908, %v4002
  %v4004 = vpop.f32.mrf.mxu0
  %v4005 = vadd.f32 %v3908, %v4004
  %4006 = vmatmul.bf16.gmra.mxu0 %v3882
  %v4007 = vpop.f32.mrf.mxu0
  %v4008 = vadd.f32 %v3908, %v4007
  %v4009 = vpop.f32.mrf.mxu0
  %v4010 = vadd.f32 %v3908, %v4009
  %4011 = vmatmul.bf16.gmra.mxu0 %v3883
  %v4012 = vpop.f32.mrf.mxu0
  %v4013 = vadd.f32 %v3908, %v4012
  %v4014 = vpop.f32.mrf.mxu0
  %v4015 = vadd.f32 %v3908, %v4014
  %4016 = vmatmul.bf16.gmra.mxu0 %v3884
  %v4017 = vpop.f32.mrf.mxu0
  %v4018 = vadd.f32 %v3908, %v4017
  %v4019 = vpop.f32.mrf.mxu0
  %v4020 = vadd.f32 %v3908, %v4019
  %4021 = vmatmul.bf16.gmra.mxu0 %v3885
  %v4022 = vpop.f32.mrf.mxu0
  %v4023 = vadd.f32 %v3908, %v4022
  %v4024 = vpop.f32.mrf.mxu0
  %v4025 = vadd.f32 %v3908, %v4024
  %4026 = vmatmul.bf16.gmra.mxu0 %v3886
  %v4027 = vpop.f32.mrf.mxu0
  %v4028 = vadd.f32 %v3908, %v4027
  %v4029 = vpop.f32.mrf.mxu0
  %v4030 = vadd.f32 %v3908, %v4029
  %4031 = vmatmul.bf16.gmra.mxu0 %v3887
  %v4032 = vpop.f32.mrf.mxu0
  %v4033 = vadd.f32 %v3908, %v4032
  %v4034 = vpop.f32.mrf.mxu0
  %v4035 = vadd.f32 %v3908, %v4034
  %4036 = vmatmul.bf16.gmra.mxu0 %v3888
  %v4037 = vpop.f32.mrf.mxu0
  %v4038 = vadd.f32 %v3908, %v4037
  %v4039 = vpop.f32.mrf.mxu0
  %v4040 = vadd.f32 %v3908, %v4039
  %4041 = vmatmul.bf16.gmra.mxu0 %v3889
  %v4042 = vpop.f32.mrf.mxu0
  %v4043 = vadd.f32 %v3908, %v4042
  %v4044 = vpop.f32.mrf.mxu0
  %v4045 = vadd.f32 %v3908, %v4044
  %4046 = vdwg.mxu0
  %4047 = vst.msk [vmem:[%s7] sm:$0xff] %vm95, %v3968
  %4048 = vst.msk [vmem:[%s7 + $0x8] sm:$0xff] %vm95, %v3970
  %4049 = vst.msk [vmem:[%s7 + $0x10] sm:$0xff] %vm95, %v3973
  %4050 = vst.msk [vmem:[%s7 + $0x18] sm:$0xff] %vm95, %v3975
  %4051 = vst.msk [vmem:[%s7 + $0x20] sm:$0xff] %vm95, %v3978
  %4052 = vst.msk [vmem:[%s7 + $0x28] sm:$0xff] %vm95, %v3980
  %4053 = vst.msk [vmem:[%s7 + $0x30] sm:$0xff] %vm95, %v3983
  %4054 = vst.msk [vmem:[%s7 + $0x38] sm:$0xff] %vm95, %v3985
  %4055 = vst.msk [vmem:[%s7 + $0x40] sm:$0xff] %vm95, %v3988
  %4056 = vst.msk [vmem:[%s7 + $0x48] sm:$0xff] %vm95, %v3990
  %4057 = vst.msk [vmem:[%s7 + $0x50] sm:$0xff] %vm95, %v3993
  %4058 = vst.msk [vmem:[%s7 + $0x58] sm:$0xff] %vm95, %v3995
  %4059 = vst.msk [vmem:[%s7 + $0x60] sm:$0xff] %vm95, %v3998
  %4060 = vst.msk [vmem:[%s7 + $0x68] sm:$0xff] %vm95, %v4000
  %4061 = vst.msk [vmem:[%s7 + $0x70] sm:$0xff] %vm95, %v4003
  %4062 = vst.msk [vmem:[%s7 + $0x78] sm:$0xff] %vm95, %v4005
  %4063 = vst.msk [vmem:[%s7 + $0x80] sm:$0xff] %vm95, %v4008
  %4064 = vst.msk [vmem:[%s7 + $0x88] sm:$0xff] %vm95, %v4010
  %4065 = vst.msk [vmem:[%s7 + $0x90] sm:$0xff] %vm95, %v4013
  %4066 = vst.msk [vmem:[%s7 + $0x98] sm:$0xff] %vm95, %v4015
  %4067 = vst.msk [vmem:[%s7 + $0xa0] sm:$0xff] %vm95, %v4018
  %4068 = vst.msk [vmem:[%s7 + $0xa8] sm:$0xff] %vm95, %v4020
  %4069 = vst.msk [vmem:[%s7 + $0xb0] sm:$0xff] %vm95, %v4023
  %4070 = vst.msk [vmem:[%s7 + $0xb8] sm:$0xff] %vm95, %v4025
  %4071 = vst.msk [vmem:[%s7 + $0xc0] sm:$0xff] %vm95, %v4028
  %4072 = vst.msk [vmem:[%s7 + $0xc8] sm:$0xff] %vm95, %v4030
  %4073 = vst.msk [vmem:[%s7 + $0xd0] sm:$0xff] %vm95, %v4033
  %4074 = vst.msk [vmem:[%s7 + $0xd8] sm:$0xff] %vm95, %v4035
  %4075 = vst.msk [vmem:[%s7 + $0xe0] sm:$0xff] %vm95, %v4038
  %4076 = vst.msk [vmem:[%s7 + $0xe8] sm:$0xff] %vm95, %v4040
  %4077 = vst.msk [vmem:[%s7 + $0xf0] sm:$0xff] %vm95, %v4043
  %4078 = vst.msk [vmem:[%s7 + $0xf8] sm:$0xff] %vm95, %v4045
  // Predicated region
  $region30: #{leff_forward.1} parent=0 // pred_check
    _
  $region31: #{leff_forward.1} parent=0 // pred_check_branch
    %4080 = sbr.rel (0) target = $region33
  $region32: #{leff_forward.1} parent=0 // pred_region
    _
  $region33: #{leff_forward.1} parent=0 // pred_fallthru
    _
  // Predicated region
  $region34: #{leff_forward.1} parent=0 // pred_check
    _
  $region35: #{leff_forward.1} parent=0 // pred_check_branch
    %4082 = sbr.rel (0) target = $region37
  $region36: #{leff_forward.1} parent=0 // pred_region
    _
  $region37: #{leff_forward.1} parent=0 // pred_fallthru
    _

</llo_original>
